<compile_context>
chip_gen: v7x
topology: tpu7x:2x2x1
jax: 0.10.0
libtpu: 0.0.40
codegen_flags: <defaults>
</compile_context>

<pallas_src>
import functools
import math

import jax
import jax.numpy as jnp
import numpy as np
from jax import lax
from jax.experimental import pallas as pl
from jax.experimental.pallas import tpu as pltpu

NEG = -1e30      # finite stand-in for -inf (avoids inf-inf NaNs in log-space DP)
B_TILE = 8       # samples per grid step (= one full sublane set)
SP = 128         # padded extended-target width (= one full lane set)


def _ctc_kernel(input_len_ref, target_len_ref,       # SMEM scalar-prefetch
                logp_ref,                             # VMEM in : (T, 8, C)
                texts_ref,                            # VMEM in : (8, S)
                out_ref,                              # VMEM out: (1, 8, SP)
                emit_ref,                             # VMEM scratch: (T, 8, SP)
                *, blank):
    B = B_TILE
    T = logp_ref.shape[0]
    C = logp_ref.shape[2]
    S = texts_ref.shape[1]
    base = pl.program_id(0) * B

    # ---------- per-sample scalars -> small (B, 1) columns ----------
    row1 = lax.broadcasted_iota(jnp.int32, (B, 1), 0)
    tn_col = jnp.zeros((B, 1), jnp.int32)     # valid time steps per sample
    tl_col = jnp.zeros((B, 1), jnp.int32)     # target length per sample
    for b in range(B):
        nb = base + b
        tn_col = jnp.where(row1 == b, input_len_ref[nb], tn_col)
        tl_col = jnp.where(row1 == b, target_len_ref[nb], tl_col)

    # dynamic trip count: longest valid sequence among the B samples of this block
    t_max = input_len_ref[base]
    for b in range(1, B):
        t_max = jnp.maximum(t_max, input_len_ref[base + b])
    t_max = jnp.minimum(t_max, T)

    # ---------- blank-interleaved labels lbl[b, s] via one MXU scatter-matmul ----------
    # scat[j, 2j+1] = 1 scatters texts[b, j] to odd lane 2j+1 of the extended target.
    s_row = lax.broadcasted_iota(jnp.int32, (B, SP), 1)
    is_odd = (s_row % 2) == 1
    j_iota = lax.broadcasted_iota(jnp.int32, (S, SP), 0)
    s_iota = lax.broadcasted_iota(jnp.int32, (S, SP), 1)
    scat = jnp.where(s_iota == 2 * j_iota + 1, 1.0, 0.0).astype(jnp.float32)
    gathered = lax.dot_general(texts_ref[...].astype(jnp.float32), scat,
                               (((1,), (0,)), ((), ())),
                               preferred_element_type=jnp.float32)    # (B, SP)
    lblf = jnp.where(is_odd, gathered, jnp.float32(blank))
    lbl_i = lblf.astype(jnp.int32)

    # skip transition (s-2 -> s) allowed at odd s >= 3 when the label differs from the
    # previous label (lbl[s-2] obtained with a lane roll on the XLU).
    can_skip = is_odd & (s_row >= 3) & (lblf != pltpu.roll(lblf, 2, axis=1))

    # ---------- emission gather via one-hot MXU matmuls (once per grid step) ----------
    # (T, B, C) -> (T*B, C) is layout-free since B == sublane count.
    lp2 = logp_ref[...].reshape(T * B, C)
    c_iota = lax.broadcasted_iota(jnp.int32, (C, SP), 0)
    row_col = lax.broadcasted_iota(jnp.int32, (T * B, 1), 0) % B      # sample id per row
    lane_row = lax.broadcasted_iota(jnp.int32, (1, SP), 1)
    combined = jnp.full((T * B, SP), NEG, jnp.float32)
    for b in range(B):
        s_ext = 2 * target_len_ref[base + b] + 1                      # scalar 2L+1
        onehot = jnp.where(c_iota == lbl_i[b:b + 1, :], 1.0, 0.0).astype(jnp.float32)
        e_b = lax.dot_general(lp2, onehot, (((1,), (0,)), ((), ())),
                              preferred_element_type=jnp.float32)     # (T*B, SP)
        keep = (row_col == b) & (lane_row < s_ext)                    # cheap col/row masks
        combined = jnp.where(keep, e_b, combined)
    emit_ref[...] = combined.reshape(T, B, SP)

    # alpha(t=0): only s=0 (blank) and s=1 (first label) reachable; taken from the
    # in-register emission values (no scratch read-back).
    alpha0 = jnp.where(s_row <= 1, combined[0:B, :], NEG)

    # ---------- log-space alpha recursion over time (all B samples per step) ----------
    def step(t, alpha):
        a1 = pltpu.roll(alpha, 1, axis=1)                  # alpha[s-1]  (XLU)
        a1 = jnp.where(s_row >= 1, a1, NEG)
        a2 = pltpu.roll(alpha, 2, axis=1)                  # alpha[s-2]  (XLU)
        a2 = jnp.where(can_skip, a2, NEG)
        m = jnp.maximum(jnp.maximum(alpha, a1), a2)
        lse = m + jnp.log(jnp.exp(alpha - m) + jnp.exp(a1 - m) + jnp.exp(a2 - m))
        new_alpha = jnp.maximum(lse + emit_ref[t], NEG)    # keep NEG clamp
        return jnp.where(t < tn_col, new_alpha, alpha)     # freeze finished samples

    alpha = lax.fori_loop(1, t_max, step, alpha0)

    # ---------- loss_b = -logsumexp(alpha[2L], alpha[2L-1]) ----------
    end_mask = (s_row == 2 * tl_col) | (s_row == 2 * tl_col - 1)
    vals = jnp.where(end_mask, alpha, NEG)
    m = jnp.max(vals, axis=-1, keepdims=True)
    ll = m + jnp.log(jnp.sum(jnp.exp(vals - m), axis=-1, keepdims=True))
    loss = jnp.where(ll <= 0.5 * NEG, 0.0, -ll)            # zero_infinity=True
    out_ref[...] = jnp.broadcast_to(loss.reshape(1, B, 1), (1, B, SP))


def ctc_loss_pallas(log_probs, texts, input_len, target_len, blank):
    """log_probs: (T, N, C) log-probabilities (PyTorch nn.CTCLoss layout)."""
    T, N, C = log_probs.shape
    S = texts.shape[1]
    assert S >= 1 and 2 * S + 1 <= SP, "extended target must fit in 128 lanes"

    n_pad = (-N) % B_TILE
    Np = N + n_pad
    logp = log_probs.astype(jnp.float32)          # no-op if already f32
    texts_i = texts.astype(jnp.int32)
    input_len_i = input_len.astype(jnp.int32)
    target_len_i = target_len.astype(jnp.int32)
    if n_pad:                                     # pad batch to a multiple of 8
        logp = jnp.pad(logp, ((0, 0), (0, n_pad), (0, 0)))
        texts_i = jnp.pad(texts_i, ((0, n_pad), (0, 0)))
        input_len_i = jnp.pad(input_len_i, ((0, n_pad),))
        target_len_i = jnp.pad(target_len_i, ((0, n_pad),))

    grid = Np // B_TILE
    kernel = functools.partial(_ctc_kernel, blank=blank)

    # explicit VMEM budget: double-buffered (T, 8, C) input block + (T, 8, 128) emit
    # scratch + headroom for the one-hot / emission temporaries.
    block_bytes = T * B_TILE * C * 4
    scratch_bytes = T * B_TILE * SP * 4
    vmem_limit = int(min(64 * 1024 * 1024,
                         max(16 * 1024 * 1024, 3 * block_bytes + 6 * scratch_bytes)))

    out = pl.pallas_call(
        kernel,
        out_shape=jax.ShapeDtypeStruct((grid, B_TILE, SP), jnp.float32),
        grid_spec=pltpu.PrefetchScalarGridSpec(
            num_scalar_prefetch=2,
            grid=(grid,),
            in_specs=[
                pl.BlockSpec((T, B_TILE, C), lambda g, il, tl: (0, g, 0)),
                pl.BlockSpec((B_TILE, S), lambda g, il, tl: (g, 0)),
            ],
            out_specs=pl.BlockSpec((1, B_TILE, SP), lambda g, il, tl: (g, 0, 0)),
            scratch_shapes=[pltpu.VMEM((T, B_TILE, SP), jnp.float32)],
        ),
        compiler_params=pltpu.CompilerParams(
            dimension_semantics=("parallel",),     # independent batch blocks (megacore)
            vmem_limit_bytes=vmem_limit,
        ),
    )(input_len_i, target_len_i, logp, texts_i)

    per_sample = out[:, :, 0].reshape(-1)[:N]
    # reduction="mean": divide each loss by its target length, then batch mean
    denom = jnp.maximum(target_len.astype(jnp.float32), 1.0)
    return jnp.mean(per_sample / denom)


def _ctc_ref_numpy(log_probs, texts, input_len, target_len, blank):
    """Pure numpy CTC reference (mean reduction, zero_infinity)."""
    T, N, C = log_probs.shape
    neg = -1e30
    losses = []
    for b in range(N):
        t_n = int(input_len[b])
        L = int(target_len[b])
        ext = [blank]
        for ch in texts[b, :L]:
            ext += [int(ch), blank]
        S = len(ext)
        lp = log_probs[:, b, :].astype(np.float64)

        def lse(vs):
            m = max(vs)
            if m <= neg / 2:
                return neg
            return m + math.log(sum(math.exp(v - m) for v in vs))

        alpha = np.full(S, neg, dtype=np.float64)
        alpha[0] = lp[0, ext[0]]
        if S > 1:
            alpha[1] = lp[0, ext[1]]
        for t in range(1, t_n):
            new = np.full(S, neg, dtype=np.float64)
            for s in range(S):
                cands = [alpha[s]]
                if s >= 1:
                    cands.append(alpha[s - 1])
                if s >= 2 and ext[s] != blank and ext[s] != ext[s - 2]:
                    cands.append(alpha[s - 2])
                new[s] = lse(cands) + lp[t, ext[s]]
            alpha = new
        ll = lse([alpha[S - 1], alpha[S - 2]]) if S > 1 else alpha[0]
        loss = -ll
        if loss > 1e28 or not np.isfinite(loss):
            loss = 0.0
        losses.append(loss / max(L, 1))
    return float(np.mean(losses))


if __name__ == "__main__":
    T, N, C, S = 16, 2, 32, 8
    blank = 0

    key = jax.random.PRNGKey(0)
    k1, k2 = jax.random.split(key)
    logits = jax.random.normal(k1, (T, N, C), dtype=jnp.float32)
    log_probs = jax.nn.log_softmax(logits, axis=-1)          # CTCLoss expects log-probs
    texts = jax.random.randint(k2, (N, S), 1, C)             # labels in [1, C), blank=0
    input_len = jnp.array([16, 12], dtype=jnp.int32)
    target_len = jnp.array([6, 4], dtype=jnp.int32)

    loss = ctc_loss_pallas(log_probs, texts, input_len, target_len, blank)
    loss = jax.block_until_ready(loss)

    ref = _ctc_ref_numpy(np.asarray(log_probs), np.asarray(texts),
                         np.asarray(input_len), np.asarray(target_len), blank)
    assert abs(float(loss) - ref) < 1e-3 * max(1.0, abs(ref)), (float(loss), ref)
    print("KERNEL_OK")
</pallas_src>

<mosaic_0001>
module attributes {stable_mosaic.version = 11 : i64} {
  func.func @_ctc_kernel(%arg0: i32, %arg1: memref<8xi32, #tpu.memory_space<smem>>, %arg2: memref<8xi32, #tpu.memory_space<smem>>, %arg3: memref<16x8x32xf32, #tpu.memory_space<vmem>>, %arg4: memref<8x8xi32, #tpu.memory_space<vmem>>, %arg5: memref<1x8x128xf32, #tpu.memory_space<vmem>>, %arg6: memref<16x8x128xf32, #tpu.memory_space<vmem>>) attributes {dimension_semantics = [#tpu.dimension_semantics<parallel>], iteration_bounds = array<i64: 1>, scalar_prefetch = 2 : i64, scratch_operands = 1 : i64, tpu.core_type = #tpu.core_type<tc>, window_params = [{transform_indices = @transform_0, window_bounds = array<i64: 16, 8, 32>}, {transform_indices = @transform_1, window_bounds = array<i64: 8, 8>}, {transform_indices = @transform_2, window_bounds = array<i64: 1, 8, 128>}]} {
    %c8_i32 = arith.constant 8 : i32
    %0 = arith.muli %arg0, %c8_i32 : i32
    %1 = tpu.iota {dimensions = array<i32: 0>} : vector<8x1xi32>
    %c0_i32 = arith.constant 0 : i32
    %2 = vector.broadcast %c0_i32 : i32 to vector<8x1xi32>
    %c0_i32_0 = arith.constant 0 : i32
    %3 = vector.broadcast %c0_i32_0 : i32 to vector<8x1xi32>
    %c0_i32_1 = arith.constant 0 : i32
    %4 = arith.addi %0, %c0_i32_1 : i32
    %c0_i32_2 = arith.constant 0 : i32
    %5 = vector.broadcast %c0_i32_2 : i32 to vector<8x1xi32>
    %6 = arith.cmpi eq, %1, %5 : vector<8x1xi32>
    %7 = arith.index_cast %4 : i32 to index
    %8 = memref.load %arg1[%7] : memref<8xi32, #tpu.memory_space<smem>>
    %9 = vector.broadcast %8 : i32 to vector<8x1xi32>
    %10 = arith.select %6, %9, %2 : vector<8x1xi1>, vector<8x1xi32>
    %c0_i32_3 = arith.constant 0 : i32
    %11 = vector.broadcast %c0_i32_3 : i32 to vector<8x1xi32>
    %12 = arith.cmpi eq, %1, %11 : vector<8x1xi32>
    %13 = arith.index_cast %4 : i32 to index
    %14 = memref.load %arg2[%13] : memref<8xi32, #tpu.memory_space<smem>>
    %15 = vector.broadcast %14 : i32 to vector<8x1xi32>
    %16 = arith.select %12, %15, %3 : vector<8x1xi1>, vector<8x1xi32>
    %c1_i32 = arith.constant 1 : i32
    %17 = arith.addi %0, %c1_i32 : i32
    %c1_i32_4 = arith.constant 1 : i32
    %18 = vector.broadcast %c1_i32_4 : i32 to vector<8x1xi32>
    %19 = arith.cmpi eq, %1, %18 : vector<8x1xi32>
    %20 = arith.index_cast %17 : i32 to index
    %21 = memref.load %arg1[%20] : memref<8xi32, #tpu.memory_space<smem>>
    %22 = vector.broadcast %21 : i32 to vector<8x1xi32>
    %23 = arith.select %19, %22, %10 : vector<8x1xi1>, vector<8x1xi32>
    %c1_i32_5 = arith.constant 1 : i32
    %24 = vector.broadcast %c1_i32_5 : i32 to vector<8x1xi32>
    %25 = arith.cmpi eq, %1, %24 : vector<8x1xi32>
    %26 = arith.index_cast %17 : i32 to index
    %27 = memref.load %arg2[%26] : memref<8xi32, #tpu.memory_space<smem>>
    %28 = vector.broadcast %27 : i32 to vector<8x1xi32>
    %29 = arith.select %25, %28, %16 : vector<8x1xi1>, vector<8x1xi32>
    %c2_i32 = arith.constant 2 : i32
    %30 = arith.addi %0, %c2_i32 : i32
    %c2_i32_6 = arith.constant 2 : i32
    %31 = vector.broadcast %c2_i32_6 : i32 to vector<8x1xi32>
    %32 = arith.cmpi eq, %1, %31 : vector<8x1xi32>
    %33 = arith.index_cast %30 : i32 to index
    %34 = memref.load %arg1[%33] : memref<8xi32, #tpu.memory_space<smem>>
    %35 = vector.broadcast %34 : i32 to vector<8x1xi32>
    %36 = arith.select %32, %35, %23 : vector<8x1xi1>, vector<8x1xi32>
    %c2_i32_7 = arith.constant 2 : i32
    %37 = vector.broadcast %c2_i32_7 : i32 to vector<8x1xi32>
    %38 = arith.cmpi eq, %1, %37 : vector<8x1xi32>
    %39 = arith.index_cast %30 : i32 to index
    %40 = memref.load %arg2[%39] : memref<8xi32, #tpu.memory_space<smem>>
    %41 = vector.broadcast %40 : i32 to vector<8x1xi32>
    %42 = arith.select %38, %41, %29 : vector<8x1xi1>, vector<8x1xi32>
    %c3_i32 = arith.constant 3 : i32
    %43 = arith.addi %0, %c3_i32 : i32
    %c3_i32_8 = arith.constant 3 : i32
    %44 = vector.broadcast %c3_i32_8 : i32 to vector<8x1xi32>
    %45 = arith.cmpi eq, %1, %44 : vector<8x1xi32>
    %46 = arith.index_cast %43 : i32 to index
    %47 = memref.load %arg1[%46] : memref<8xi32, #tpu.memory_space<smem>>
    %48 = vector.broadcast %47 : i32 to vector<8x1xi32>
    %49 = arith.select %45, %48, %36 : vector<8x1xi1>, vector<8x1xi32>
    %c3_i32_9 = arith.constant 3 : i32
    %50 = vector.broadcast %c3_i32_9 : i32 to vector<8x1xi32>
    %51 = arith.cmpi eq, %1, %50 : vector<8x1xi32>
    %52 = arith.index_cast %43 : i32 to index
    %53 = memref.load %arg2[%52] : memref<8xi32, #tpu.memory_space<smem>>
    %54 = vector.broadcast %53 : i32 to vector<8x1xi32>
    %55 = arith.select %51, %54, %42 : vector<8x1xi1>, vector<8x1xi32>
    %c4_i32 = arith.constant 4 : i32
    %56 = arith.addi %0, %c4_i32 : i32
    %c4_i32_10 = arith.constant 4 : i32
    %57 = vector.broadcast %c4_i32_10 : i32 to vector<8x1xi32>
    %58 = arith.cmpi eq, %1, %57 : vector<8x1xi32>
    %59 = arith.index_cast %56 : i32 to index
    %60 = memref.load %arg1[%59] : memref<8xi32, #tpu.memory_space<smem>>
    %61 = vector.broadcast %60 : i32 to vector<8x1xi32>
    %62 = arith.select %58, %61, %49 : vector<8x1xi1>, vector<8x1xi32>
    %c4_i32_11 = arith.constant 4 : i32
    %63 = vector.broadcast %c4_i32_11 : i32 to vector<8x1xi32>
    %64 = arith.cmpi eq, %1, %63 : vector<8x1xi32>
    %65 = arith.index_cast %56 : i32 to index
    %66 = memref.load %arg2[%65] : memref<8xi32, #tpu.memory_space<smem>>
    %67 = vector.broadcast %66 : i32 to vector<8x1xi32>
    %68 = arith.select %64, %67, %55 : vector<8x1xi1>, vector<8x1xi32>
    %c5_i32 = arith.constant 5 : i32
    %69 = arith.addi %0, %c5_i32 : i32
    %c5_i32_12 = arith.constant 5 : i32
    %70 = vector.broadcast %c5_i32_12 : i32 to vector<8x1xi32>
    %71 = arith.cmpi eq, %1, %70 : vector<8x1xi32>
    %72 = arith.index_cast %69 : i32 to index
    %73 = memref.load %arg1[%72] : memref<8xi32, #tpu.memory_space<smem>>
    %74 = vector.broadcast %73 : i32 to vector<8x1xi32>
    %75 = arith.select %71, %74, %62 : vector<8x1xi1>, vector<8x1xi32>
    %c5_i32_13 = arith.constant 5 : i32
    %76 = vector.broadcast %c5_i32_13 : i32 to vector<8x1xi32>
    %77 = arith.cmpi eq, %1, %76 : vector<8x1xi32>
    %78 = arith.index_cast %69 : i32 to index
    %79 = memref.load %arg2[%78] : memref<8xi32, #tpu.memory_space<smem>>
    %80 = vector.broadcast %79 : i32 to vector<8x1xi32>
    %81 = arith.select %77, %80, %68 : vector<8x1xi1>, vector<8x1xi32>
    %c6_i32 = arith.constant 6 : i32
    %82 = arith.addi %0, %c6_i32 : i32
    %c6_i32_14 = arith.constant 6 : i32
    %83 = vector.broadcast %c6_i32_14 : i32 to vector<8x1xi32>
    %84 = arith.cmpi eq, %1, %83 : vector<8x1xi32>
    %85 = arith.index_cast %82 : i32 to index
    %86 = memref.load %arg1[%85] : memref<8xi32, #tpu.memory_space<smem>>
    %87 = vector.broadcast %86 : i32 to vector<8x1xi32>
    %88 = arith.select %84, %87, %75 : vector<8x1xi1>, vector<8x1xi32>
    %c6_i32_15 = arith.constant 6 : i32
    %89 = vector.broadcast %c6_i32_15 : i32 to vector<8x1xi32>
    %90 = arith.cmpi eq, %1, %89 : vector<8x1xi32>
    %91 = arith.index_cast %82 : i32 to index
    %92 = memref.load %arg2[%91] : memref<8xi32, #tpu.memory_space<smem>>
    %93 = vector.broadcast %92 : i32 to vector<8x1xi32>
    %94 = arith.select %90, %93, %81 : vector<8x1xi1>, vector<8x1xi32>
    %c7_i32 = arith.constant 7 : i32
    %95 = arith.addi %0, %c7_i32 : i32
    %c7_i32_16 = arith.constant 7 : i32
    %96 = vector.broadcast %c7_i32_16 : i32 to vector<8x1xi32>
    %97 = arith.cmpi eq, %1, %96 : vector<8x1xi32>
    %98 = arith.index_cast %95 : i32 to index
    %99 = memref.load %arg1[%98] : memref<8xi32, #tpu.memory_space<smem>>
    %100 = vector.broadcast %99 : i32 to vector<8x1xi32>
    %101 = arith.select %97, %100, %88 : vector<8x1xi1>, vector<8x1xi32>
    %c7_i32_17 = arith.constant 7 : i32
    %102 = vector.broadcast %c7_i32_17 : i32 to vector<8x1xi32>
    %103 = arith.cmpi eq, %1, %102 : vector<8x1xi32>
    %104 = arith.index_cast %95 : i32 to index
    %105 = memref.load %arg2[%104] : memref<8xi32, #tpu.memory_space<smem>>
    %106 = vector.broadcast %105 : i32 to vector<8x1xi32>
    %107 = arith.select %103, %106, %94 : vector<8x1xi1>, vector<8x1xi32>
    %108 = arith.index_cast %0 : i32 to index
    %109 = memref.load %arg1[%108] : memref<8xi32, #tpu.memory_space<smem>>
    %c1_i32_18 = arith.constant 1 : i32
    %110 = arith.addi %0, %c1_i32_18 : i32
    %111 = arith.index_cast %110 : i32 to index
    %112 = memref.load %arg1[%111] : memref<8xi32, #tpu.memory_space<smem>>
    %113 = arith.maxsi %109, %112 : i32
    %c2_i32_19 = arith.constant 2 : i32
    %114 = arith.addi %0, %c2_i32_19 : i32
    %115 = arith.index_cast %114 : i32 to index
    %116 = memref.load %arg1[%115] : memref<8xi32, #tpu.memory_space<smem>>
    %117 = arith.maxsi %113, %116 : i32
    %c3_i32_20 = arith.constant 3 : i32
    %118 = arith.addi %0, %c3_i32_20 : i32
    %119 = arith.index_cast %118 : i32 to index
    %120 = memref.load %arg1[%119] : memref<8xi32, #tpu.memory_space<smem>>
    %121 = arith.maxsi %117, %120 : i32
    %c4_i32_21 = arith.constant 4 : i32
    %122 = arith.addi %0, %c4_i32_21 : i32
    %123 = arith.index_cast %122 : i32 to index
    %124 = memref.load %arg1[%123] : memref<8xi32, #tpu.memory_space<smem>>
    %125 = arith.maxsi %121, %124 : i32
    %c5_i32_22 = arith.constant 5 : i32
    %126 = arith.addi %0, %c5_i32_22 : i32
    %127 = arith.index_cast %126 : i32 to index
    %128 = memref.load %arg1[%127] : memref<8xi32, #tpu.memory_space<smem>>
    %129 = arith.maxsi %125, %128 : i32
    %c6_i32_23 = arith.constant 6 : i32
    %130 = arith.addi %0, %c6_i32_23 : i32
    %131 = arith.index_cast %130 : i32 to index
    %132 = memref.load %arg1[%131] : memref<8xi32, #tpu.memory_space<smem>>
    %133 = arith.maxsi %129, %132 : i32
    %c7_i32_24 = arith.constant 7 : i32
    %134 = arith.addi %0, %c7_i32_24 : i32
    %135 = arith.index_cast %134 : i32 to index
    %136 = memref.load %arg1[%135] : memref<8xi32, #tpu.memory_space<smem>>
    %137 = arith.maxsi %133, %136 : i32
    %c16_i32 = arith.constant 16 : i32
    %138 = arith.minsi %137, %c16_i32 : i32
    %139 = tpu.iota {dimensions = array<i32: 1>} : vector<8x128xi32>
    %c2_i32_25 = arith.constant 2 : i32
    %c0_i32_26 = arith.constant 0 : i32
    %140 = arith.cmpi eq, %c2_i32_25, %c0_i32_26 : i32
    %c1_i32_27 = arith.constant 1 : i32
    %141 = arith.select %140, %c1_i32_27, %c2_i32_25 : i32
    %142 = vector.broadcast %141 : i32 to vector<8x128xi32>
    %143 = arith.remsi %139, %142 : vector<8x128xi32>
    %c0_i32_28 = arith.constant 0 : i32
    %144 = vector.broadcast %c0_i32_28 : i32 to vector<8x128xi32>
    %145 = arith.cmpi ne, %143, %144 : vector<8x128xi32>
    %c0_i32_29 = arith.constant 0 : i32
    %146 = vector.broadcast %c0_i32_29 : i32 to vector<8x128xi32>
    %147 = arith.cmpi slt, %143, %146 : vector<8x128xi32>
    %c0_i32_30 = arith.constant 0 : i32
    %148 = arith.cmpi slt, %141, %c0_i32_30 : i32
    %149 = vector.broadcast %148 : i1 to vector<8x128xi1>
    %150 = vector.broadcast %149 : vector<8x128xi1> to vector<8x128xi1>
    %151 = arith.xori %147, %150 : vector<8x128xi1>
    %152 = arith.andi %151, %145 : vector<8x128xi1>
    %153 = vector.broadcast %141 : i32 to vector<8x128xi32>
    %154 = arith.addi %143, %153 : vector<8x128xi32>
    %155 = arith.select %152, %154, %143 : vector<8x128xi1>, vector<8x128xi32>
    %c1_i32_31 = arith.constant 1 : i32
    %156 = vector.broadcast %c1_i32_31 : i32 to vector<8x128xi32>
    %157 = arith.cmpi eq, %155, %156 : vector<8x128xi32>
    %158 = tpu.iota {dimensions = array<i32: 0>} : vector<8x128xi32>
    %159 = tpu.iota {dimensions = array<i32: 1>} : vector<8x128xi32>
    %c2_i32_32 = arith.constant 2 : i32
    %160 = vector.broadcast %c2_i32_32 : i32 to vector<8x128xi32>
    %161 = arith.muli %160, %158 : vector<8x128xi32>
    %c1_i32_33 = arith.constant 1 : i32
    %162 = vector.broadcast %c1_i32_33 : i32 to vector<8x128xi32>
    %163 = arith.addi %161, %162 : vector<8x128xi32>
    %164 = arith.cmpi eq, %159, %163 : vector<8x128xi32>
    %cst = arith.constant 1.000000e+00 : f32
    %cst_34 = arith.constant 0.000000e+00 : f32
    %165 = vector.broadcast %cst : f32 to vector<8x128xf32>
    %166 = vector.broadcast %cst_34 : f32 to vector<8x128xf32>
    %167 = arith.select %164, %165, %166 : vector<8x128xi1>, vector<8x128xf32>
    %c0 = arith.constant 0 : index
    %c0_35 = arith.constant 0 : index
    %168 = vector.load %arg4[%c0, %c0_35] : memref<8x8xi32, #tpu.memory_space<vmem>>, vector<8x8xi32>
    %169 = arith.sitofp %168 : vector<8x8xi32> to vector<8x8xf32>
    %cst_36 = arith.constant dense<0.000000e+00> : vector<8x128xf32>
    %170 = tpu.matmul %169, %167, %cst_36 {dimension_numbers = #tpu.dot_dimension_numbers<[1], [0], [0], [1], [0, 0, 1, 1], [], []>} : vector<8x8xf32>, vector<8x128xf32>, vector<8x128xf32> -> vector<8x128xf32>
    %cst_37 = arith.constant 0.000000e+00 : f32
    %171 = vector.broadcast %cst_37 : f32 to vector<8x128xf32>
    %172 = arith.select %157, %170, %171 : vector<8x128xi1>, vector<8x128xf32>
    %173 = arith.fptosi %172 : vector<8x128xf32> to vector<8x128xi32>
    %c3_i32_38 = arith.constant 3 : i32
    %174 = vector.broadcast %c3_i32_38 : i32 to vector<8x128xi32>
    %175 = arith.cmpi sge, %139, %174 : vector<8x128xi32>
    %176 = arith.andi %157, %175 : vector<8x128xi1>
    %c2_i32_39 = arith.constant 2 : i32
    %177 = tpu.dynamic_rotate %172 by %c2_i32_39 dim 1 : vector<8x128xf32>, i32 -> vector<8x128xf32>
    %178 = arith.cmpf one, %172, %177 : vector<8x128xf32>
    %179 = arith.andi %176, %178 : vector<8x128xi1>
    %c0_40 = arith.constant 0 : index
    %c0_41 = arith.constant 0 : index
    %c0_42 = arith.constant 0 : index
    %180 = vector.load %arg3[%c0_40, %c0_41, %c0_42] : memref<16x8x32xf32, #tpu.memory_space<vmem>>, vector<16x8x32xf32>
    %181 = vector.shape_cast %180 : vector<16x8x32xf32> to vector<128x32xf32>
    %182 = tpu.iota {dimensions = array<i32: 0>} : vector<32x128xi32>
    %183 = tpu.iota {dimensions = array<i32: 0>} : vector<128x1xi32>
    %c8_i32_43 = arith.constant 8 : i32
    %c0_i32_44 = arith.constant 0 : i32
    %184 = arith.cmpi eq, %c8_i32_43, %c0_i32_44 : i32
    %c1_i32_45 = arith.constant 1 : i32
    %185 = arith.select %184, %c1_i32_45, %c8_i32_43 : i32
    %186 = vector.broadcast %185 : i32 to vector<128x1xi32>
    %187 = arith.remsi %183, %186 : vector<128x1xi32>
    %c0_i32_46 = arith.constant 0 : i32
    %188 = vector.broadcast %c0_i32_46 : i32 to vector<128x1xi32>
    %189 = arith.cmpi ne, %187, %188 : vector<128x1xi32>
    %c0_i32_47 = arith.constant 0 : i32
    %190 = vector.broadcast %c0_i32_47 : i32 to vector<128x1xi32>
    %191 = arith.cmpi slt, %187, %190 : vector<128x1xi32>
    %c0_i32_48 = arith.constant 0 : i32
    %192 = arith.cmpi slt, %185, %c0_i32_48 : i32
    %193 = vector.broadcast %192 : i1 to vector<128x1xi1>
    %194 = vector.broadcast %193 : vector<128x1xi1> to vector<128x1xi1>
    %195 = arith.xori %191, %194 : vector<128x1xi1>
    %196 = arith.andi %195, %189 : vector<128x1xi1>
    %197 = vector.broadcast %185 : i32 to vector<128x1xi32>
    %198 = arith.addi %187, %197 : vector<128x1xi32>
    %199 = arith.select %196, %198, %187 : vector<128x1xi1>, vector<128x1xi32>
    %200 = tpu.iota {dimensions = array<i32: 1>} : vector<1x128xi32>
    %cst_49 = arith.constant -1.000000e+30 : f32
    %201 = vector.broadcast %cst_49 : f32 to vector<128x128xf32>
    %c0_i32_50 = arith.constant 0 : i32
    %202 = arith.addi %0, %c0_i32_50 : i32
    %203 = arith.index_cast %202 : i32 to index
    %204 = memref.load %arg2[%203] : memref<8xi32, #tpu.memory_space<smem>>
    %c2_i32_51 = arith.constant 2 : i32
    %205 = arith.muli %c2_i32_51, %204 : i32
    %c1_i32_52 = arith.constant 1 : i32
    %206 = arith.addi %205, %c1_i32_52 : i32
    %207 = vector.extract_strided_slice %173 {offsets = [0, 0], sizes = [1, 128], strides = [1, 1]} : vector<8x128xi32> to vector<1x128xi32>
    %208 = vector.broadcast %207 : vector<1x128xi32> to vector<32x128xi32>
    %209 = arith.cmpi eq, %182, %208 : vector<32x128xi32>
    %cst_53 = arith.constant 1.000000e+00 : f32
    %cst_54 = arith.constant 0.000000e+00 : f32
    %210 = vector.broadcast %cst_53 : f32 to vector<32x128xf32>
    %211 = vector.broadcast %cst_54 : f32 to vector<32x128xf32>
    %212 = arith.select %209, %210, %211 : vector<32x128xi1>, vector<32x128xf32>
    %cst_55 = arith.constant dense<0.000000e+00> : vector<128x128xf32>
    %213 = tpu.matmul %181, %212, %cst_55 {dimension_numbers = #tpu.dot_dimension_numbers<[1], [0], [0], [1], [0, 0, 1, 1], [], []>} : vector<128x32xf32>, vector<32x128xf32>, vector<128x128xf32> -> vector<128x128xf32>
    %c0_i32_56 = arith.constant 0 : i32
    %214 = vector.broadcast %c0_i32_56 : i32 to vector<128x1xi32>
    %215 = arith.cmpi eq, %199, %214 : vector<128x1xi32>
    %216 = vector.broadcast %206 : i32 to vector<1x128xi32>
    %217 = arith.cmpi slt, %200, %216 : vector<1x128xi32>
    %218 = vector.broadcast %215 : vector<128x1xi1> to vector<128x128xi1>
    %219 = vector.broadcast %217 : vector<1x128xi1> to vector<128x128xi1>
    %220 = arith.andi %218, %219 : vector<128x128xi1>
    %221 = arith.select %220, %213, %201 : vector<128x128xi1>, vector<128x128xf32>
    %c1_i32_57 = arith.constant 1 : i32
    %222 = arith.addi %0, %c1_i32_57 : i32
    %223 = arith.index_cast %222 : i32 to index
    %224 = memref.load %arg2[%223] : memref<8xi32, #tpu.memory_space<smem>>
    %c2_i32_58 = arith.constant 2 : i32
    %225 = arith.muli %c2_i32_58, %224 : i32
    %c1_i32_59 = arith.constant 1 : i32
    %226 = arith.addi %225, %c1_i32_59 : i32
    %227 = vector.extract_strided_slice %173 {offsets = [1, 0], sizes = [1, 128], strides = [1, 1]} : vector<8x128xi32> to vector<1x128xi32>
    %228 = vector.broadcast %227 : vector<1x128xi32> to vector<32x128xi32>
    %229 = arith.cmpi eq, %182, %228 : vector<32x128xi32>
    %cst_60 = arith.constant 1.000000e+00 : f32
    %cst_61 = arith.constant 0.000000e+00 : f32
    %230 = vector.broadcast %cst_60 : f32 to vector<32x128xf32>
    %231 = vector.broadcast %cst_61 : f32 to vector<32x128xf32>
    %232 = arith.select %229, %230, %231 : vector<32x128xi1>, vector<32x128xf32>
    %cst_62 = arith.constant dense<0.000000e+00> : vector<128x128xf32>
    %233 = tpu.matmul %181, %232, %cst_62 {dimension_numbers = #tpu.dot_dimension_numbers<[1], [0], [0], [1], [0, 0, 1, 1], [], []>} : vector<128x32xf32>, vector<32x128xf32>, vector<128x128xf32> -> vector<128x128xf32>
    %c1_i32_63 = arith.constant 1 : i32
    %234 = vector.broadcast %c1_i32_63 : i32 to vector<128x1xi32>
    %235 = arith.cmpi eq, %199, %234 : vector<128x1xi32>
    %236 = vector.broadcast %226 : i32 to vector<1x128xi32>
    %237 = arith.cmpi slt, %200, %236 : vector<1x128xi32>
    %238 = vector.broadcast %235 : vector<128x1xi1> to vector<128x128xi1>
    %239 = vector.broadcast %237 : vector<1x128xi1> to vector<128x128xi1>
    %240 = arith.andi %238, %239 : vector<128x128xi1>
    %241 = arith.select %240, %233, %221 : vector<128x128xi1>, vector<128x128xf32>
    %c2_i32_64 = arith.constant 2 : i32
    %242 = arith.addi %0, %c2_i32_64 : i32
    %243 = arith.index_cast %242 : i32 to index
    %244 = memref.load %arg2[%243] : memref<8xi32, #tpu.memory_space<smem>>
    %c2_i32_65 = arith.constant 2 : i32
    %245 = arith.muli %c2_i32_65, %244 : i32
    %c1_i32_66 = arith.constant 1 : i32
    %246 = arith.addi %245, %c1_i32_66 : i32
    %247 = vector.extract_strided_slice %173 {offsets = [2, 0], sizes = [1, 128], strides = [1, 1]} : vector<8x128xi32> to vector<1x128xi32>
    %248 = vector.broadcast %247 : vector<1x128xi32> to vector<32x128xi32>
    %249 = arith.cmpi eq, %182, %248 : vector<32x128xi32>
    %cst_67 = arith.constant 1.000000e+00 : f32
    %cst_68 = arith.constant 0.000000e+00 : f32
    %250 = vector.broadcast %cst_67 : f32 to vector<32x128xf32>
    %251 = vector.broadcast %cst_68 : f32 to vector<32x128xf32>
    %252 = arith.select %249, %250, %251 : vector<32x128xi1>, vector<32x128xf32>
    %cst_69 = arith.constant dense<0.000000e+00> : vector<128x128xf32>
    %253 = tpu.matmul %181, %252, %cst_69 {dimension_numbers = #tpu.dot_dimension_numbers<[1], [0], [0], [1], [0, 0, 1, 1], [], []>} : vector<128x32xf32>, vector<32x128xf32>, vector<128x128xf32> -> vector<128x128xf32>
    %c2_i32_70 = arith.constant 2 : i32
    %254 = vector.broadcast %c2_i32_70 : i32 to vector<128x1xi32>
    %255 = arith.cmpi eq, %199, %254 : vector<128x1xi32>
    %256 = vector.broadcast %246 : i32 to vector<1x128xi32>
    %257 = arith.cmpi slt, %200, %256 : vector<1x128xi32>
    %258 = vector.broadcast %255 : vector<128x1xi1> to vector<128x128xi1>
    %259 = vector.broadcast %257 : vector<1x128xi1> to vector<128x128xi1>
    %260 = arith.andi %258, %259 : vector<128x128xi1>
    %261 = arith.select %260, %253, %241 : vector<128x128xi1>, vector<128x128xf32>
    %c3_i32_71 = arith.constant 3 : i32
    %262 = arith.addi %0, %c3_i32_71 : i32
    %263 = arith.index_cast %262 : i32 to index
    %264 = memref.load %arg2[%263] : memref<8xi32, #tpu.memory_space<smem>>
    %c2_i32_72 = arith.constant 2 : i32
    %265 = arith.muli %c2_i32_72, %264 : i32
    %c1_i32_73 = arith.constant 1 : i32
    %266 = arith.addi %265, %c1_i32_73 : i32
    %267 = vector.extract_strided_slice %173 {offsets = [3, 0], sizes = [1, 128], strides = [1, 1]} : vector<8x128xi32> to vector<1x128xi32>
    %268 = vector.broadcast %267 : vector<1x128xi32> to vector<32x128xi32>
    %269 = arith.cmpi eq, %182, %268 : vector<32x128xi32>
    %cst_74 = arith.constant 1.000000e+00 : f32
    %cst_75 = arith.constant 0.000000e+00 : f32
    %270 = vector.broadcast %cst_74 : f32 to vector<32x128xf32>
    %271 = vector.broadcast %cst_75 : f32 to vector<32x128xf32>
    %272 = arith.select %269, %270, %271 : vector<32x128xi1>, vector<32x128xf32>
    %cst_76 = arith.constant dense<0.000000e+00> : vector<128x128xf32>
    %273 = tpu.matmul %181, %272, %cst_76 {dimension_numbers = #tpu.dot_dimension_numbers<[1], [0], [0], [1], [0, 0, 1, 1], [], []>} : vector<128x32xf32>, vector<32x128xf32>, vector<128x128xf32> -> vector<128x128xf32>
    %c3_i32_77 = arith.constant 3 : i32
    %274 = vector.broadcast %c3_i32_77 : i32 to vector<128x1xi32>
    %275 = arith.cmpi eq, %199, %274 : vector<128x1xi32>
    %276 = vector.broadcast %266 : i32 to vector<1x128xi32>
    %277 = arith.cmpi slt, %200, %276 : vector<1x128xi32>
    %278 = vector.broadcast %275 : vector<128x1xi1> to vector<128x128xi1>
    %279 = vector.broadcast %277 : vector<1x128xi1> to vector<128x128xi1>
    %280 = arith.andi %278, %279 : vector<128x128xi1>
    %281 = arith.select %280, %273, %261 : vector<128x128xi1>, vector<128x128xf32>
    %c4_i32_78 = arith.constant 4 : i32
    %282 = arith.addi %0, %c4_i32_78 : i32
    %283 = arith.index_cast %282 : i32 to index
    %284 = memref.load %arg2[%283] : memref<8xi32, #tpu.memory_space<smem>>
    %c2_i32_79 = arith.constant 2 : i32
    %285 = arith.muli %c2_i32_79, %284 : i32
    %c1_i32_80 = arith.constant 1 : i32
    %286 = arith.addi %285, %c1_i32_80 : i32
    %287 = vector.extract_strided_slice %173 {offsets = [4, 0], sizes = [1, 128], strides = [1, 1]} : vector<8x128xi32> to vector<1x128xi32>
    %288 = vector.broadcast %287 : vector<1x128xi32> to vector<32x128xi32>
    %289 = arith.cmpi eq, %182, %288 : vector<32x128xi32>
    %cst_81 = arith.constant 1.000000e+00 : f32
    %cst_82 = arith.constant 0.000000e+00 : f32
    %290 = vector.broadcast %cst_81 : f32 to vector<32x128xf32>
    %291 = vector.broadcast %cst_82 : f32 to vector<32x128xf32>
    %292 = arith.select %289, %290, %291 : vector<32x128xi1>, vector<32x128xf32>
    %cst_83 = arith.constant dense<0.000000e+00> : vector<128x128xf32>
    %293 = tpu.matmul %181, %292, %cst_83 {dimension_numbers = #tpu.dot_dimension_numbers<[1], [0], [0], [1], [0, 0, 1, 1], [], []>} : vector<128x32xf32>, vector<32x128xf32>, vector<128x128xf32> -> vector<128x128xf32>
    %c4_i32_84 = arith.constant 4 : i32
    %294 = vector.broadcast %c4_i32_84 : i32 to vector<128x1xi32>
    %295 = arith.cmpi eq, %199, %294 : vector<128x1xi32>
    %296 = vector.broadcast %286 : i32 to vector<1x128xi32>
    %297 = arith.cmpi slt, %200, %296 : vector<1x128xi32>
    %298 = vector.broadcast %295 : vector<128x1xi1> to vector<128x128xi1>
    %299 = vector.broadcast %297 : vector<1x128xi1> to vector<128x128xi1>
    %300 = arith.andi %298, %299 : vector<128x128xi1>
    %301 = arith.select %300, %293, %281 : vector<128x128xi1>, vector<128x128xf32>
    %c5_i32_85 = arith.constant 5 : i32
    %302 = arith.addi %0, %c5_i32_85 : i32
    %303 = arith.index_cast %302 : i32 to index
    %304 = memref.load %arg2[%303] : memref<8xi32, #tpu.memory_space<smem>>
    %c2_i32_86 = arith.constant 2 : i32
    %305 = arith.muli %c2_i32_86, %304 : i32
    %c1_i32_87 = arith.constant 1 : i32
    %306 = arith.addi %305, %c1_i32_87 : i32
    %307 = vector.extract_strided_slice %173 {offsets = [5, 0], sizes = [1, 128], strides = [1, 1]} : vector<8x128xi32> to vector<1x128xi32>
    %308 = vector.broadcast %307 : vector<1x128xi32> to vector<32x128xi32>
    %309 = arith.cmpi eq, %182, %308 : vector<32x128xi32>
    %cst_88 = arith.constant 1.000000e+00 : f32
    %cst_89 = arith.constant 0.000000e+00 : f32
    %310 = vector.broadcast %cst_88 : f32 to vector<32x128xf32>
    %311 = vector.broadcast %cst_89 : f32 to vector<32x128xf32>
    %312 = arith.select %309, %310, %311 : vector<32x128xi1>, vector<32x128xf32>
    %cst_90 = arith.constant dense<0.000000e+00> : vector<128x128xf32>
    %313 = tpu.matmul %181, %312, %cst_90 {dimension_numbers = #tpu.dot_dimension_numbers<[1], [0], [0], [1], [0, 0, 1, 1], [], []>} : vector<128x32xf32>, vector<32x128xf32>, vector<128x128xf32> -> vector<128x128xf32>
    %c5_i32_91 = arith.constant 5 : i32
    %314 = vector.broadcast %c5_i32_91 : i32 to vector<128x1xi32>
    %315 = arith.cmpi eq, %199, %314 : vector<128x1xi32>
    %316 = vector.broadcast %306 : i32 to vector<1x128xi32>
    %317 = arith.cmpi slt, %200, %316 : vector<1x128xi32>
    %318 = vector.broadcast %315 : vector<128x1xi1> to vector<128x128xi1>
    %319 = vector.broadcast %317 : vector<1x128xi1> to vector<128x128xi1>
    %320 = arith.andi %318, %319 : vector<128x128xi1>
    %321 = arith.select %320, %313, %301 : vector<128x128xi1>, vector<128x128xf32>
    %c6_i32_92 = arith.constant 6 : i32
    %322 = arith.addi %0, %c6_i32_92 : i32
    %323 = arith.index_cast %322 : i32 to index
    %324 = memref.load %arg2[%323] : memref<8xi32, #tpu.memory_space<smem>>
    %c2_i32_93 = arith.constant 2 : i32
    %325 = arith.muli %c2_i32_93, %324 : i32
    %c1_i32_94 = arith.constant 1 : i32
    %326 = arith.addi %325, %c1_i32_94 : i32
    %327 = vector.extract_strided_slice %173 {offsets = [6, 0], sizes = [1, 128], strides = [1, 1]} : vector<8x128xi32> to vector<1x128xi32>
    %328 = vector.broadcast %327 : vector<1x128xi32> to vector<32x128xi32>
    %329 = arith.cmpi eq, %182, %328 : vector<32x128xi32>
    %cst_95 = arith.constant 1.000000e+00 : f32
    %cst_96 = arith.constant 0.000000e+00 : f32
    %330 = vector.broadcast %cst_95 : f32 to vector<32x128xf32>
    %331 = vector.broadcast %cst_96 : f32 to vector<32x128xf32>
    %332 = arith.select %329, %330, %331 : vector<32x128xi1>, vector<32x128xf32>
    %cst_97 = arith.constant dense<0.000000e+00> : vector<128x128xf32>
    %333 = tpu.matmul %181, %332, %cst_97 {dimension_numbers = #tpu.dot_dimension_numbers<[1], [0], [0], [1], [0, 0, 1, 1], [], []>} : vector<128x32xf32>, vector<32x128xf32>, vector<128x128xf32> -> vector<128x128xf32>
    %c6_i32_98 = arith.constant 6 : i32
    %334 = vector.broadcast %c6_i32_98 : i32 to vector<128x1xi32>
    %335 = arith.cmpi eq, %199, %334 : vector<128x1xi32>
    %336 = vector.broadcast %326 : i32 to vector<1x128xi32>
    %337 = arith.cmpi slt, %200, %336 : vector<1x128xi32>
    %338 = vector.broadcast %335 : vector<128x1xi1> to vector<128x128xi1>
    %339 = vector.broadcast %337 : vector<1x128xi1> to vector<128x128xi1>
    %340 = arith.andi %338, %339 : vector<128x128xi1>
    %341 = arith.select %340, %333, %321 : vector<128x128xi1>, vector<128x128xf32>
    %c7_i32_99 = arith.constant 7 : i32
    %342 = arith.addi %0, %c7_i32_99 : i32
    %343 = arith.index_cast %342 : i32 to index
    %344 = memref.load %arg2[%343] : memref<8xi32, #tpu.memory_space<smem>>
    %c2_i32_100 = arith.constant 2 : i32
    %345 = arith.muli %c2_i32_100, %344 : i32
    %c1_i32_101 = arith.constant 1 : i32
    %346 = arith.addi %345, %c1_i32_101 : i32
    %347 = vector.extract_strided_slice %173 {offsets = [7, 0], sizes = [1, 128], strides = [1, 1]} : vector<8x128xi32> to vector<1x128xi32>
    %348 = vector.broadcast %347 : vector<1x128xi32> to vector<32x128xi32>
    %349 = arith.cmpi eq, %182, %348 : vector<32x128xi32>
    %cst_102 = arith.constant 1.000000e+00 : f32
    %cst_103 = arith.constant 0.000000e+00 : f32
    %350 = vector.broadcast %cst_102 : f32 to vector<32x128xf32>
    %351 = vector.broadcast %cst_103 : f32 to vector<32x128xf32>
    %352 = arith.select %349, %350, %351 : vector<32x128xi1>, vector<32x128xf32>
    %cst_104 = arith.constant dense<0.000000e+00> : vector<128x128xf32>
    %353 = tpu.matmul %181, %352, %cst_104 {dimension_numbers = #tpu.dot_dimension_numbers<[1], [0], [0], [1], [0, 0, 1, 1], [], []>} : vector<128x32xf32>, vector<32x128xf32>, vector<128x128xf32> -> vector<128x128xf32>
    %c7_i32_105 = arith.constant 7 : i32
    %354 = vector.broadcast %c7_i32_105 : i32 to vector<128x1xi32>
    %355 = arith.cmpi eq, %199, %354 : vector<128x1xi32>
    %356 = vector.broadcast %346 : i32 to vector<1x128xi32>
    %357 = arith.cmpi slt, %200, %356 : vector<1x128xi32>
    %358 = vector.broadcast %355 : vector<128x1xi1> to vector<128x128xi1>
    %359 = vector.broadcast %357 : vector<1x128xi1> to vector<128x128xi1>
    %360 = arith.andi %358, %359 : vector<128x128xi1>
    %361 = arith.select %360, %353, %341 : vector<128x128xi1>, vector<128x128xf32>
    %362 = vector.shape_cast %361 : vector<128x128xf32> to vector<16x8x128xf32>
    %c0_106 = arith.constant 0 : index
    %c0_107 = arith.constant 0 : index
    %c0_108 = arith.constant 0 : index
    %363 = vector.load %arg6[%c0_106, %c0_107, %c0_108] : memref<16x8x128xf32, #tpu.memory_space<vmem>>, vector<16x8x128xf32>
    tpu.vector_store %arg6[%c0_106, %c0_107, %c0_108], %362 {strides = array<i32>} : memref<16x8x128xf32, #tpu.memory_space<vmem>>, vector<16x8x128xf32>,
    %c1_i32_109 = arith.constant 1 : i32
    %364 = vector.broadcast %c1_i32_109 : i32 to vector<8x128xi32>
    %365 = arith.cmpi sle, %139, %364 : vector<8x128xi32>
    %366 = vector.extract_strided_slice %361 {offsets = [0, 0], sizes = [8, 128], strides = [1, 1]} : vector<128x128xf32> to vector<8x128xf32>
    %cst_110 = arith.constant -1.000000e+30 : f32
    %367 = vector.broadcast %cst_110 : f32 to vector<8x128xf32>
    %368 = arith.select %365, %366, %367 : vector<8x128xi1>, vector<8x128xf32>
    %c1_i32_111 = arith.constant 1 : i32
    %369 = arith.subi %138, %c1_i32_111 : i32
    %370 = arith.addi %c1_i32_111, %369 : i32
    %c1_i32_112 = arith.constant 1 : i32
    %371 = scf.for %arg7 = %c1_i32_111 to %370 step %c1_i32_112 iter_args(%arg8 = %368) -> (vector<8x128xf32>)  : i32 {
      %c1_i32_125 = arith.constant 1 : i32
      %404 = tpu.dynamic_rotate %arg8 by %c1_i32_125 dim 1 : vector<8x128xf32>, i32 -> vector<8x128xf32>
      %c1_i32_126 = arith.constant 1 : i32
      %405 = vector.broadcast %c1_i32_126 : i32 to vector<8x128xi32>
      %406 = arith.cmpi sge, %139, %405 : vector<8x128xi32>
      %cst_127 = arith.constant -1.000000e+30 : f32
      %407 = vector.broadcast %cst_127 : f32 to vector<8x128xf32>
      %408 = arith.select %406, %404, %407 : vector<8x128xi1>, vector<8x128xf32>
      %c2_i32_128 = arith.constant 2 : i32
      %409 = tpu.dynamic_rotate %arg8 by %c2_i32_128 dim 1 : vector<8x128xf32>, i32 -> vector<8x128xf32>
      %cst_129 = arith.constant -1.000000e+30 : f32
      %410 = vector.broadcast %cst_129 : f32 to vector<8x128xf32>
      %411 = arith.select %179, %409, %410 : vector<8x128xi1>, vector<8x128xf32>
      %412 = arith.maximumf %arg8, %408 : vector<8x128xf32>
      %413 = arith.maximumf %412, %411 : vector<8x128xf32>
      %414 = arith.subf %arg8, %413 : vector<8x128xf32>
      %415 = math.exp %414 : vector<8x128xf32>
      %416 = arith.subf %408, %413 : vector<8x128xf32>
      %417 = math.exp %416 : vector<8x128xf32>
      %418 = arith.addf %415, %417 : vector<8x128xf32>
      %419 = arith.subf %411, %413 : vector<8x128xf32>
      %420 = math.exp %419 : vector<8x128xf32>
      %421 = arith.addf %418, %420 : vector<8x128xf32>
      %422 = math.log %421 : vector<8x128xf32>
      %423 = arith.addf %413, %422 : vector<8x128xf32>
      %424 = arith.index_cast %arg7 : i32 to index
      %c0_130 = arith.constant 0 : index
      %c0_131 = arith.constant 0 : index
      %425 = vector.load %arg6[%424, %c0_130, %c0_131] : memref<16x8x128xf32, #tpu.memory_space<vmem>>, vector<1x8x128xf32>
      %426 = vector.shape_cast %425 : vector<1x8x128xf32> to vector<8x128xf32>
      %427 = arith.addf %423, %426 : vector<8x128xf32>
      %cst_132 = arith.constant -1.000000e+30 : f32
      %428 = vector.broadcast %cst_132 : f32 to vector<8x128xf32>
      %429 = arith.maximumf %427, %428 : vector<8x128xf32>
      %430 = vector.broadcast %arg7 : i32 to vector<8x1xi32>
      %431 = arith.cmpi slt, %430, %101 : vector<8x1xi32>
      %432 = vector.shape_cast %431 : vector<8x1xi1> to vector<8x1xi1>
      %433 = vector.broadcast %432 : vector<8x1xi1> to vector<8x128xi1>
      %434 = arith.select %433, %429, %arg8 : vector<8x128xi1>, vector<8x128xf32>
      scf.yield %434 : vector<8x128xf32>
    }
    %c2_i32_113 = arith.constant 2 : i32
    %372 = vector.broadcast %c2_i32_113 : i32 to vector<8x1xi32>
    %373 = arith.muli %372, %107 : vector<8x1xi32>
    %374 = vector.broadcast %373 : vector<8x1xi32> to vector<8x128xi32>
    %375 = arith.cmpi eq, %139, %374 : vector<8x128xi32>
    %c2_i32_114 = arith.constant 2 : i32
    %376 = vector.broadcast %c2_i32_114 : i32 to vector<8x1xi32>
    %377 = arith.muli %376, %107 : vector<8x1xi32>
    %c1_i32_115 = arith.constant 1 : i32
    %378 = vector.broadcast %c1_i32_115 : i32 to vector<8x1xi32>
    %379 = arith.subi %377, %378 : vector<8x1xi32>
    %380 = vector.broadcast %379 : vector<8x1xi32> to vector<8x128xi32>
    %381 = arith.cmpi eq, %139, %380 : vector<8x128xi32>
    %382 = arith.ori %375, %381 : vector<8x128xi1>
    %cst_116 = arith.constant -1.000000e+30 : f32
    %383 = vector.broadcast %cst_116 : f32 to vector<8x128xf32>
    %384 = arith.select %382, %371, %383 : vector<8x128xi1>, vector<8x128xf32>
    %cst_117 = arith.constant dense<0xFF800000> : vector<8xf32>
    %385 = vector.multi_reduction <maximumf>, %384, %cst_117 [1] : vector<8x128xf32> to vector<8xf32>
    %386 = vector.shape_cast %385 : vector<8xf32> to vector<8x1xf32>
    %387 = vector.broadcast %386 : vector<8x1xf32> to vector<8x128xf32>
    %388 = arith.subf %384, %387 : vector<8x128xf32>
    %389 = math.exp %388 : vector<8x128xf32>
    %cst_118 = arith.constant dense<0.000000e+00> : vector<8xf32>
    %390 = vector.multi_reduction <add>, %389, %cst_118 [1] : vector<8x128xf32> to vector<8xf32>
    %391 = vector.shape_cast %390 : vector<8xf32> to vector<8x1xf32>
    %392 = math.log %391 : vector<8x1xf32>
    %393 = arith.addf %386, %392 : vector<8x1xf32>
    %cst_119 = arith.constant -5.000000e+29 : f32
    %394 = vector.broadcast %cst_119 : f32 to vector<8x1xf32>
    %395 = arith.cmpf ole, %393, %394 : vector<8x1xf32>
    %cst_120 = arith.constant 0.000000e+00 : f32
    %396 = vector.broadcast %cst_120 : f32 to vector<8x1xf32>
    %397 = arith.subf %396, %393 : vector<8x1xf32>
    %cst_121 = arith.constant 0.000000e+00 : f32
    %398 = vector.broadcast %cst_121 : f32 to vector<8x1xf32>
    %399 = arith.select %395, %398, %397 : vector<8x1xi1>, vector<8x1xf32>
    %400 = vector.shape_cast %399 : vector<8x1xf32> to vector<1x8x1xf32>
    %401 = vector.shape_cast %400 : vector<1x8x1xf32> to vector<1x8x1xf32>
    %402 = vector.broadcast %401 : vector<1x8x1xf32> to vector<1x8x128xf32>
    %c0_122 = arith.constant 0 : index
    %c0_123 = arith.constant 0 : index
    %c0_124 = arith.constant 0 : index
    %403 = vector.load %arg5[%c0_122, %c0_123, %c0_124] : memref<1x8x128xf32, #tpu.memory_space<vmem>>, vector<1x8x128xf32>
    tpu.vector_store %arg5[%c0_122, %c0_123, %c0_124], %402 {strides = array<i32>} : memref<1x8x128xf32, #tpu.memory_space<vmem>>, vector<1x8x128xf32>,
    return
  }
  func.func @transform_0(%arg0: i32, %arg1: memref<8xi32, #tpu.memory_space<smem>>, %arg2: memref<8xi32, #tpu.memory_space<smem>>) -> (i32, i32, i32) {
    %c0_i32 = arith.constant 0 : i32
    %c0_i32_0 = arith.constant 0 : i32
    %c0_i32_1 = arith.constant 0 : i32
    return %c0_i32, %arg0, %c0_i32_0 : i32, i32, i32
  }
  func.func @transform_1(%arg0: i32, %arg1: memref<8xi32, #tpu.memory_space<smem>>, %arg2: memref<8xi32, #tpu.memory_space<smem>>) -> (i32, i32) {
    %c0_i32 = arith.constant 0 : i32
    %c0_i32_0 = arith.constant 0 : i32
    return %arg0, %c0_i32 : i32, i32
  }
  func.func @transform_2(%arg0: i32, %arg1: memref<8xi32, #tpu.memory_space<smem>>, %arg2: memref<8xi32, #tpu.memory_space<smem>>) -> (i32, i32, i32) {
    %c0_i32 = arith.constant 0 : i32
    %c0_i32_0 = arith.constant 0 : i32
    %c0_i32_1 = arith.constant 0 : i32
    return %arg0, %c0_i32, %c0_i32_0 : i32, i32, i32
  }
}

</mosaic_0001>

<llo_original>
// kernel: tpu_custom_call.1
$region0: #{tpu_custom_call.1}
  #allocation0 [shape = 'u32[]', space=smem, size = 0x4, offset = 0x4, fixed_abs, tag = 'smem constant byte address 0x4 - core index']
  #allocation1 [shape = 'u32[144,128]{1,0:T(1,128)}', space=vmem, size = 0x12000, scoped, tag = 'internal scratch']
  #allocation2 [shape = 'f32[16,8,128]{2,1,0:T(8,128)}', space=vmem, size = 0x10000, scoped, tag = 'scratch operand']
  #allocation3 [shape = 's32[1]{0}', space=sflag, size = 0x4, scoped, tag = 'scoped memory for tpu_custom_call.1']
  #allocation4 [shape = 'u8[512]{0}', space=smem, size = 0x200, scoped, tag = 'prefetched SMEM operand 0']
  #allocation5 [shape = 'u8[512]{0}', space=smem, size = 0x200, scoped, tag = 'prefetched SMEM operand 1']
  %s0 = inlined_call_operand.hbm [shape: s32[8], index: 0, kind: input, shape index: {}]
  %s1 = inlined_call_operand.vmem [shape: s32[8], index: 1, kind: input, shape index: {}]
  %s2 = inlined_call_operand.hbm [shape: f32[16,8,32], index: 2, kind: input, shape index: {}]
  %s3 = inlined_call_operand.vmem [shape: s32[8,8], index: 3, kind: input, shape index: {}]
  %s4 = inlined_call_operand.hbm [shape: f32[1,8,128], index: 4, kind: output, shape index: {}]
  %s5 = sld [smem:[#allocation0]]
  $region29: #{tpu_custom_call.1} parent=0
    _
  %s7 = ssub.s32 1, %s5
  %s8 = scalar_select 0, %s7, %s5
  %10 = dma.hbm_to_smem %s0, 16, [#allocation4], [#allocation3]
  %s11 = sshll.u32 %s1, 4
  %s12 = int_to_ptr.vmem [resolvable:$true] %s11
  %14 = dma.vmem_to_smem %s12, 16, [#allocation5], [#allocation3]
  %15 = dma.done [#allocation3], 32
  %16 = sfence
  $region1: #{tpu_custom_call.1} parent=0
    #allocation6 [shape = 'u8[65536]{0}', space=vmem, size = 0x10000, scoped, tag = 'input window, operand 2, single buffered']
    #allocation7 [shape = 's32[1]{0}', space=sflag, size = 0x4, scoped, tag = 'scoped memory for tpu_custom_call.1']
    #allocation8 [shape = 's32[1]{0}', space=sflag, size = 0x4, scoped, tag = 'scoped memory for tpu_custom_call.1']
    #allocation9 [shape = 'u8[4096]{0}', space=vmem, size = 0x1000, scoped, tag = 'output window, operand 0, single buffered']
    %17 = vsyncpa [#allocation7], 0
    %18 = vsyncpa [#allocation8], 0
    // Predicated region
    $region2: #{tpu_custom_call.1} parent=1 // pred_check
      _
    $region3: #{tpu_custom_call.1} parent=1 // pred_check_branch
      %20 = sbr.rel (0) target = $region5
    $region4: #{tpu_custom_call.1} parent=1 // pred_region
      %s22 = ssub.s32 2048, 2048
      %23 = vsyncadd [#allocation7], %s22
      %s24 = sshll.u32 [#allocation6], 4
      %s25 = int_to_ptr.vmem [resolvable:$true] %s24
      %30 = dma.hbm_to_vmem [thread:$0]  %s2, 2048, %s25, [#allocation7], 128, 128, 8
    $region5: #{tpu_custom_call.1} parent=1 // pred_fallthru
      _
    // Predicated region
    $region6: #{tpu_custom_call.1} parent=1 // pred_check
      _
    $region7: #{tpu_custom_call.1} parent=1 // pred_check_branch
      %32 = sbr.rel (0) target = $region9
    $region8: #{tpu_custom_call.1} parent=1 // pred_region
      _
    $region9: #{tpu_custom_call.1} parent=1 // pred_fallthru
      _
    // Predicated region
    $region10: #{tpu_custom_call.1} parent=1 // pred_check
      _
    $region11: #{tpu_custom_call.1} parent=1 // pred_check_branch
      %34 = sbr.rel (0) target = $region13
    $region12: #{tpu_custom_call.1} parent=1 // pred_region
      %35 = dma.done [#allocation7], 2048
    $region13: #{tpu_custom_call.1} parent=1 // pred_fallthru
      _
    %s36 = smul.u32 0, 8
    %v37 = vlaneseq
    %v38 = vshrl.u32 %v37, 7
    %vm39 = vcmp.eq.s32.totalorder %v38, 0
    %s40 = sld [smem:[#allocation4 + %s36]]
    %v41 = vstv %s40
    %v42 = vsel %vm39, %v41, 0
    %s43 = sld [smem:[#allocation5 + %s36]]
    %v44 = vstv %s43
    %v45 = vsel %vm39, %v44, 0
    %s46 = sadd.s32 %s36, 1
    %vm47 = vcmp.eq.s32.totalorder %v38, 1
    %s48 = sld [smem:[#allocation4 + %s46]]
    %v49 = vstv %s48
    %v50 = vsel %vm47, %v49, %v42
    %s51 = sld [smem:[#allocation5 + %s46]]
    %v52 = vstv %s51
    %v53 = vsel %vm47, %v52, %v45
    %s54 = sadd.s32 %s36, 2
    %vm55 = vcmp.eq.s32.totalorder %v38, 2
    %s56 = sld [smem:[#allocation4 + %s54]]
    %v57 = vstv %s56
    %v58 = vsel %vm55, %v57, %v50
    %s59 = sld [smem:[#allocation5 + %s54]]
    %v60 = vstv %s59
    %v61 = vsel %vm55, %v60, %v53
    %s62 = sadd.s32 %s36, 3
    %vm63 = vcmp.eq.s32.totalorder %v38, 3
    %s64 = sld [smem:[#allocation4 + %s62]]
    %v65 = vstv %s64
    %v66 = vsel %vm63, %v65, %v58
    %s67 = sld [smem:[#allocation5 + %s62]]
    %v68 = vstv %s67
    %v69 = vsel %vm63, %v68, %v61
    %s70 = sadd.s32 %s36, 4
    %vm71 = vcmp.eq.s32.totalorder %v38, 4
    %s72 = sld [smem:[#allocation4 + %s70]]
    %v73 = vstv %s72
    %v74 = vsel %vm71, %v73, %v66
    %s75 = sld [smem:[#allocation5 + %s70]]
    %v76 = vstv %s75
    %v77 = vsel %vm71, %v76, %v69
    %s78 = sadd.s32 %s36, 5
    %vm79 = vcmp.eq.s32.totalorder %v38, 5
    %s80 = sld [smem:[#allocation4 + %s78]]
    %v81 = vstv %s80
    %v82 = vsel %vm79, %v81, %v74
    %s83 = sld [smem:[#allocation5 + %s78]]
    %v84 = vstv %s83
    %v85 = vsel %vm79, %v84, %v77
    %s86 = sadd.s32 %s36, 6
    %vm87 = vcmp.eq.s32.totalorder %v38, 6
    %s88 = sld [smem:[#allocation4 + %s86]]
    %v89 = vstv %s88
    %v90 = vsel %vm87, %v89, %v82
    %s91 = sld [smem:[#allocation5 + %s86]]
    %v92 = vstv %s91
    %v93 = vsel %vm87, %v92, %v85
    %s94 = sadd.s32 %s36, 7
    %vm95 = vcmp.eq.s32.totalorder %v38, 7
    %s96 = sld [smem:[#allocation4 + %s94]]
    %v97 = vstv %s96
    %v98 = vsel %vm95, %v97, %v90
    %s99 = sld [smem:[#allocation5 + %s94]]
    %v100 = vstv %s99
    %v101 = vsel %vm95, %v100, %v93
    %p102 = scmp.gt.s32.totalorder %s40, %s48
    %s103 = scalar_select %p102, %s40, %s48
    %p104 = scmp.gt.s32.totalorder %s103, %s56
    %s105 = scalar_select %p104, %s103, %s56
    %p106 = scmp.gt.s32.totalorder %s105, %s64
    %s107 = scalar_select %p106, %s105, %s64
    %p108 = scmp.gt.s32.totalorder %s107, %s72
    %s109 = scalar_select %p108, %s107, %s72
    %p110 = scmp.gt.s32.totalorder %s109, %s80
    %s111 = scalar_select %p110, %s109, %s80
    %p112 = scmp.gt.s32.totalorder %s111, %s88
    %s113 = scalar_select %p112, %s111, %s88
    %p114 = scmp.gt.s32.totalorder %s113, %s96
    %s115 = scalar_select %p114, %s113, %s96
    %p116 = scmp.lt.s32.totalorder %s115, 16
    %s117 = scalar_select %p116, %s115, 16
    %v118 = vlaneseq
    %v119 = vand.u32 %v118, 127
    %vm120 = vcmp.lt.s32.totalorder %v119, 0
    %v121 = vsub.s32 0, %v119
    %v122 = vsel %vm120, %v121, %v119
    %v123 = vshrl.u32 %v122, 1
    %v124 = vand.u32 %v122, 1
    %v125 = vsub.s32 0, %v124
    %v126 = vsel %vm120, %v125, %v124
    %vm127 = vcmp.ne.s32.totalorder %v126, 0
    %vm128 = vcmp.lt.s32.totalorder %v126, 0
    %vm129 = vmand %vm128, %vm127
    %v130 = vadd.s32 %v126, 2
    %v131 = vsel %vm129, %v130, %v126
    %vm132 = vcmp.eq.s32.totalorder %v131, 1
    %v133 = vmul.u32 %v38, 2
    %v134 = vadd.s32 %v133, 1
    %vm135 = vcmp.eq.s32.totalorder %v119, %v134
    %v136 = vsel %vm135, 1.0, 0.0
    %v137 = vld [vmem:[%s3] sm:$0xff]
    %v138 = vcvt.s32.f32 %v137
    %vm139 = vcmask 64512
    %v141 = vsel %vm139, %v138, 0
    %143 = vmatprep.subr.mxu0 0.0
    %144 = vmatpush1.msra.mxu0 %v136
    %145 = vmatprep.subr.mxu0 0.0
    %146 = vmatpush1.msra.mxu0 0.0
    %147 = vmatprep.subr.mxu0 0.0
    %148 = vmatpush1.msra.mxu0 0.0
    %149 = vmatprep.subr.mxu0 0.0
    %150 = vmatpush1.msra.mxu0 0.0
    %151 = vmatprep.subr.mxu0 0.0
    %152 = vmatpush1.msra.mxu0 0.0
    %153 = vmatprep.subr.mxu0 0.0
    %154 = vmatpush1.msra.mxu0 0.0
    %155 = vmatprep.subr.mxu0 0.0
    %156 = vmatpush1.msra.mxu0 0.0
    %157 = vmatprep.subr.mxu0 0.0
    %158 = vmatpush1.msra.mxu0 0.0
    %159 = vmatprep.subr.mxu0 0.0
    %160 = vmatpush1.msra.mxu0 0.0
    %161 = vmatprep.subr.mxu0 0.0
    %162 = vmatpush1.msra.mxu0 0.0
    %163 = vmatprep.subr.mxu0 0.0
    %164 = vmatpush1.msra.mxu0 0.0
    %165 = vmatprep.subr.mxu0 0.0
    %166 = vmatpush1.msra.mxu0 0.0
    %167 = vmatprep.subr.mxu0 0.0
    %168 = vmatpush1.msra.mxu0 0.0
    %169 = vmatprep.subr.mxu0 0.0
    %170 = vmatpush1.msra.mxu0 0.0
    %171 = vmatprep.subr.mxu0 0.0
    %172 = vmatpush1.msra.mxu0 0.0
    %173 = vmatprep.subr.mxu0 0.0
    %174 = vmatpush1.msra.mxu0 0.0
    %175 = vmatprep.subr.mxu0 0.0
    %176 = vmatpush1.msra.mxu0 0.0
    %177 = vmatprep.subr.mxu0 0.0
    %178 = vmatpush1.msra.mxu0 0.0
    %179 = vmatprep.subr.mxu0 0.0
    %180 = vmatpush1.msra.mxu0 0.0
    %181 = vmatprep.subr.mxu0 0.0
    %182 = vmatpush1.msra.mxu0 0.0
    %183 = vmatprep.subr.mxu0 0.0
    %184 = vmatpush1.msra.mxu0 0.0
    %185 = vmatprep.subr.mxu0 0.0
    %186 = vmatpush1.msra.mxu0 0.0
    %187 = vmatprep.subr.mxu0 0.0
    %188 = vmatpush1.msra.mxu0 0.0
    %189 = vmatprep.subr.mxu0 0.0
    %190 = vmatpush1.msra.mxu0 0.0
    %191 = vmatprep.subr.mxu0 0.0
    %192 = vmatpush1.msra.mxu0 0.0
    %193 = vmatprep.subr.mxu0 0.0
    %194 = vmatpush1.msra.mxu0 0.0
    %195 = vmatprep.subr.mxu0 0.0
    %196 = vmatpush1.msra.mxu0 0.0
    %197 = vmatprep.subr.mxu0 0.0
    %198 = vmatpush1.msra.mxu0 0.0
    %199 = vmatprep.subr.mxu0 0.0
    %200 = vmatpush1.msra.mxu0 0.0
    %201 = vmatprep.subr.mxu0 0.0
    %202 = vmatpush1.msra.mxu0 0.0
    %203 = vmatprep.subr.mxu0 0.0
    %204 = vmatpush1.msra.mxu0 0.0
    %205 = vmatprep.subr.mxu0 0.0
    %206 = vmatpush1.msra.mxu0 0.0
    %207 = vmatprep.mubr.f32.mxu0 0.0
    %208 = vmatmul.mubr.f32.gmra.mrb[0].mxu0 %v141
    %v209 = vpop.f32.mrb[0].mxu0
    %v210 = vadd.f32 0.0, %v209
    %v211 = vpop.f32.mrb[0].mxu0
    %212 = vdwg.mxu0
    %v213 = vsel %vm132, %v210, 0.0
    %v214 = vcvt.f32.s32.to.zero.pseudo %v213
    %vm215 = vcmp.ge.s32.totalorder %v119, 3
    %vm216 = vmand %vm132, %vm215
    %217 = vrot.lane.b32.xlu0 %v213, 2
    %v218 = vpop.permute.xlu0 %217
    %vm219 = vcmp.ne.f32.partialorder %v213, %v218
    %vm220 = vmand %vm216, %vm219
    %v221 = vld [vmem:[#allocation6] sm:$0xff]
    %v222 = vld [vmem:[#allocation6 + $0x8] sm:$0xff]
    %v223 = vld [vmem:[#allocation6 + $0x10] sm:$0xff]
    %v224 = vld [vmem:[#allocation6 + $0x18] sm:$0xff]
    %v225 = vld [vmem:[#allocation6 + $0x20] sm:$0xff]
    %v226 = vld [vmem:[#allocation6 + $0x28] sm:$0xff]
    %v227 = vld [vmem:[#allocation6 + $0x30] sm:$0xff]
    %v228 = vld [vmem:[#allocation6 + $0x38] sm:$0xff]
    %v229 = vld [vmem:[#allocation6 + $0x40] sm:$0xff]
    %v230 = vld [vmem:[#allocation6 + $0x48] sm:$0xff]
    %v231 = vld [vmem:[#allocation6 + $0x50] sm:$0xff]
    %v232 = vld [vmem:[#allocation6 + $0x58] sm:$0xff]
    %v233 = vld [vmem:[#allocation6 + $0x60] sm:$0xff]
    %v234 = vld [vmem:[#allocation6 + $0x68] sm:$0xff]
    %v235 = vld [vmem:[#allocation6 + $0x70] sm:$0xff]
    %v236 = vld [vmem:[#allocation6 + $0x78] sm:$0xff]
    %v237 = vadd.s32 %v38, 8
    %v238 = vadd.s32 %v38, 16
    %v239 = vadd.s32 %v38, 24
    %v240 = vadd.s32 %v38, 32
    %v241 = vadd.s32 %v38, 40
    %v242 = vadd.s32 %v38, 48
    %v243 = vadd.s32 %v38, 56
    %v244 = vadd.s32 %v38, 64
    %v245 = vadd.s32 %v38, 72
    %v246 = vadd.s32 %v38, 80
    %v247 = vadd.s32 %v38, 88
    %v248 = vadd.s32 %v38, 96
    %v249 = vadd.s32 %v38, 104
    %v250 = vadd.s32 %v38, 112
    %v251 = vadd.s32 %v38, 120
    %vm252 = vcmp.lt.s32.totalorder %v38, 0
    %v253 = vsub.s32 0, %v38
    %v254 = vsel %vm252, %v253, %v38
    %v255 = vshrl.u32 %v254, 3
    %v256 = vand.u32 %v254, 7
    %v257 = vsub.s32 0, %v256
    %v258 = vsel %vm252, %v257, %v256
    %vm259 = vcmp.lt.s32.totalorder %v237, 0
    %v260 = vsub.s32 0, %v237
    %v261 = vsel %vm259, %v260, %v237
    %v262 = vshrl.u32 %v261, 3
    %v263 = vand.u32 %v261, 7
    %v264 = vsub.s32 0, %v263
    %v265 = vsel %vm259, %v264, %v263
    %vm266 = vcmp.lt.s32.totalorder %v238, 0
    %v267 = vsub.s32 0, %v238
    %v268 = vsel %vm266, %v267, %v238
    %v269 = vshrl.u32 %v268, 3
    %v270 = vand.u32 %v268, 7
    %v271 = vsub.s32 0, %v270
    %v272 = vsel %vm266, %v271, %v270
    %vm273 = vcmp.lt.s32.totalorder %v239, 0
    %v274 = vsub.s32 0, %v239
    %v275 = vsel %vm273, %v274, %v239
    %v276 = vshrl.u32 %v275, 3
    %v277 = vand.u32 %v275, 7
    %v278 = vsub.s32 0, %v277
    %v279 = vsel %vm273, %v278, %v277
    %vm280 = vcmp.lt.s32.totalorder %v240, 0
    %v281 = vsub.s32 0, %v240
    %v282 = vsel %vm280, %v281, %v240
    %v283 = vshrl.u32 %v282, 3
    %v284 = vand.u32 %v282, 7
    %v285 = vsub.s32 0, %v284
    %v286 = vsel %vm280, %v285, %v284
    %vm287 = vcmp.lt.s32.totalorder %v241, 0
    %v288 = vsub.s32 0, %v241
    %v289 = vsel %vm287, %v288, %v241
    %v290 = vshrl.u32 %v289, 3
    %v291 = vand.u32 %v289, 7
    %v292 = vsub.s32 0, %v291
    %v293 = vsel %vm287, %v292, %v291
    %vm294 = vcmp.lt.s32.totalorder %v242, 0
    %v295 = vsub.s32 0, %v242
    %v296 = vsel %vm294, %v295, %v242
    %v297 = vshrl.u32 %v296, 3
    %v298 = vand.u32 %v296, 7
    %v299 = vsub.s32 0, %v298
    %v300 = vsel %vm294, %v299, %v298
    %vm301 = vcmp.lt.s32.totalorder %v243, 0
    %v302 = vsub.s32 0, %v243
    %v303 = vsel %vm301, %v302, %v243
    %v304 = vshrl.u32 %v303, 3
    %v305 = vand.u32 %v303, 7
    %v306 = vsub.s32 0, %v305
    %v307 = vsel %vm301, %v306, %v305
    %vm308 = vcmp.lt.s32.totalorder %v244, 0
    %v309 = vsub.s32 0, %v244
    %v310 = vsel %vm308, %v309, %v244
    %v311 = vshrl.u32 %v310, 3
    %v312 = vand.u32 %v310, 7
    %v313 = vsub.s32 0, %v312
    %v314 = vsel %vm308, %v313, %v312
    %vm315 = vcmp.lt.s32.totalorder %v245, 0
    %v316 = vsub.s32 0, %v245
    %v317 = vsel %vm315, %v316, %v245
    %v318 = vshrl.u32 %v317, 3
    %v319 = vand.u32 %v317, 7
    %v320 = vsub.s32 0, %v319
    %v321 = vsel %vm315, %v320, %v319
    %vm322 = vcmp.lt.s32.totalorder %v246, 0
    %v323 = vsub.s32 0, %v246
    %v324 = vsel %vm322, %v323, %v246
    %v325 = vshrl.u32 %v324, 3
    %v326 = vand.u32 %v324, 7
    %v327 = vsub.s32 0, %v326
    %v328 = vsel %vm322, %v327, %v326
    %vm329 = vcmp.lt.s32.totalorder %v247, 0
    %v330 = vsub.s32 0, %v247
    %v331 = vsel %vm329, %v330, %v247
    %v332 = vshrl.u32 %v331, 3
    %v333 = vand.u32 %v331, 7
    %v334 = vsub.s32 0, %v333
    %v335 = vsel %vm329, %v334, %v333
    %vm336 = vcmp.lt.s32.totalorder %v248, 0
    %v337 = vsub.s32 0, %v248
    %v338 = vsel %vm336, %v337, %v248
    %v339 = vshrl.u32 %v338, 3
    %v340 = vand.u32 %v338, 7
    %v341 = vsub.s32 0, %v340
    %v342 = vsel %vm336, %v341, %v340
    %vm343 = vcmp.lt.s32.totalorder %v249, 0
    %v344 = vsub.s32 0, %v249
    %v345 = vsel %vm343, %v344, %v249
    %v346 = vshrl.u32 %v345, 3
    %v347 = vand.u32 %v345, 7
    %v348 = vsub.s32 0, %v347
    %v349 = vsel %vm343, %v348, %v347
    %vm350 = vcmp.lt.s32.totalorder %v250, 0
    %v351 = vsub.s32 0, %v250
    %v352 = vsel %vm350, %v351, %v250
    %v353 = vshrl.u32 %v352, 3
    %v354 = vand.u32 %v352, 7
    %v355 = vsub.s32 0, %v354
    %v356 = vsel %vm350, %v355, %v354
    %vm357 = vcmp.lt.s32.totalorder %v251, 0
    %v358 = vsub.s32 0, %v251
    %v359 = vsel %vm357, %v358, %v251
    %v360 = vshrl.u32 %v359, 3
    %v361 = vand.u32 %v359, 7
    %v362 = vsub.s32 0, %v361
    %v363 = vsel %vm357, %v362, %v361
    %vm364 = vcmp.ne.s32.totalorder %v258, 0
    %vm365 = vcmp.ne.s32.totalorder %v265, 0
    %vm366 = vcmp.ne.s32.totalorder %v272, 0
    %vm367 = vcmp.ne.s32.totalorder %v279, 0
    %vm368 = vcmp.ne.s32.totalorder %v286, 0
    %vm369 = vcmp.ne.s32.totalorder %v293, 0
    %vm370 = vcmp.ne.s32.totalorder %v300, 0
    %vm371 = vcmp.ne.s32.totalorder %v307, 0
    %vm372 = vcmp.ne.s32.totalorder %v314, 0
    %vm373 = vcmp.ne.s32.totalorder %v321, 0
    %vm374 = vcmp.ne.s32.totalorder %v328, 0
    %vm375 = vcmp.ne.s32.totalorder %v335, 0
    %vm376 = vcmp.ne.s32.totalorder %v342, 0
    %vm377 = vcmp.ne.s32.totalorder %v349, 0
    %vm378 = vcmp.ne.s32.totalorder %v356, 0
    %vm379 = vcmp.ne.s32.totalorder %v363, 0
    %vm380 = vcmp.lt.s32.totalorder %v258, 0
    %vm381 = vcmp.lt.s32.totalorder %v265, 0
    %vm382 = vcmp.lt.s32.totalorder %v272, 0
    %vm383 = vcmp.lt.s32.totalorder %v279, 0
    %vm384 = vcmp.lt.s32.totalorder %v286, 0
    %vm385 = vcmp.lt.s32.totalorder %v293, 0
    %vm386 = vcmp.lt.s32.totalorder %v300, 0
    %vm387 = vcmp.lt.s32.totalorder %v307, 0
    %vm388 = vcmp.lt.s32.totalorder %v314, 0
    %vm389 = vcmp.lt.s32.totalorder %v321, 0
    %vm390 = vcmp.lt.s32.totalorder %v328, 0
    %vm391 = vcmp.lt.s32.totalorder %v335, 0
    %vm392 = vcmp.lt.s32.totalorder %v342, 0
    %vm393 = vcmp.lt.s32.totalorder %v349, 0
    %vm394 = vcmp.lt.s32.totalorder %v356, 0
    %vm395 = vcmp.lt.s32.totalorder %v363, 0
    %vm396 = vmand %vm380, %vm364
    %vm397 = vmand %vm381, %vm365
    %vm398 = vmand %vm382, %vm366
    %vm399 = vmand %vm383, %vm367
    %vm400 = vmand %vm384, %vm368
    %vm401 = vmand %vm385, %vm369
    %vm402 = vmand %vm386, %vm370
    %vm403 = vmand %vm387, %vm371
    %vm404 = vmand %vm388, %vm372
    %vm405 = vmand %vm389, %vm373
    %vm406 = vmand %vm390, %vm374
    %vm407 = vmand %vm391, %vm375
    %vm408 = vmand %vm392, %vm376
    %vm409 = vmand %vm393, %vm377
    %vm410 = vmand %vm394, %vm378
    %vm411 = vmand %vm395, %vm379
    %v412 = vadd.s32 %v258, 8
    %v413 = vadd.s32 %v265, 8
    %v414 = vadd.s32 %v272, 8
    %v415 = vadd.s32 %v279, 8
    %v416 = vadd.s32 %v286, 8
    %v417 = vadd.s32 %v293, 8
    %v418 = vadd.s32 %v300, 8
    %v419 = vadd.s32 %v307, 8
    %v420 = vadd.s32 %v314, 8
    %v421 = vadd.s32 %v321, 8
    %v422 = vadd.s32 %v328, 8
    %v423 = vadd.s32 %v335, 8
    %v424 = vadd.s32 %v342, 8
    %v425 = vadd.s32 %v349, 8
    %v426 = vadd.s32 %v356, 8
    %v427 = vadd.s32 %v363, 8
    %v428 = vsel %vm396, %v412, %v258
    %v429 = vsel %vm397, %v413, %v265
    %v430 = vsel %vm398, %v414, %v272
    %v431 = vsel %vm399, %v415, %v279
    %v432 = vsel %vm400, %v416, %v286
    %v433 = vsel %vm401, %v417, %v293
    %v434 = vsel %vm402, %v418, %v300
    %v435 = vsel %vm403, %v419, %v307
    %v436 = vsel %vm404, %v420, %v314
    %v437 = vsel %vm405, %v421, %v321
    %v438 = vsel %vm406, %v422, %v328
    %v439 = vsel %vm407, %v423, %v335
    %v440 = vsel %vm408, %v424, %v342
    %v441 = vsel %vm409, %v425, %v349
    %v442 = vsel %vm410, %v426, %v356
    %v443 = vsel %vm411, %v427, %v363
    %s444 = smul.u32 %s43, 2
    %s445 = sadd.s32 %s444, 1
    %v446 = vlaneseq
    %v447 = vshrl.u32 %v446, 7
    %v448 = vsub.s32 0, %v447
    %v449 = vrot.slane %v214, %v448
    %vm450 = vcmp.eq.s32.totalorder %v38, %v449
    %vm451 = vcmp.eq.s32.totalorder %v237, %v449
    %vm452 = vcmp.eq.s32.totalorder %v238, %v449
    %vm453 = vcmp.eq.s32.totalorder %v239, %v449
    %v454 = vsel %vm450, 1.0, 0.0
    %v455 = vsel %vm451, 1.0, 0.0
    %v456 = vsel %vm452, 1.0, 0.0
    %v457 = vsel %vm453, 1.0, 0.0
    %vm458 = vcmask 261120
    %v460 = vsel %vm458, %v221, 0
    %v463 = vsel %vm458, %v222, 0
    %v466 = vsel %vm458, %v223, 0
    %v469 = vsel %vm458, %v224, 0
    %v472 = vsel %vm458, %v225, 0
    %v475 = vsel %vm458, %v226, 0
    %v478 = vsel %vm458, %v227, 0
    %v481 = vsel %vm458, %v228, 0
    %v484 = vsel %vm458, %v229, 0
    %v487 = vsel %vm458, %v230, 0
    %v490 = vsel %vm458, %v231, 0
    %v493 = vsel %vm458, %v232, 0
    %v496 = vsel %vm458, %v233, 0
    %v499 = vsel %vm458, %v234, 0
    %v502 = vsel %vm458, %v235, 0
    %v505 = vsel %vm458, %v236, 0
    %507 = vmatprep.subr.mxu0 0.0
    %508 = vmatpush1.msra.mxu0 %v454
    %509 = vmatprep.subr.mxu0 0.0
    %510 = vmatpush1.msra.mxu0 %v455
    %511 = vmatprep.subr.mxu0 0.0
    %512 = vmatpush1.msra.mxu0 %v456
    %513 = vmatprep.subr.mxu0 0.0
    %514 = vmatpush1.msra.mxu0 %v457
    %515 = vmatprep.subr.mxu0 0.0
    %516 = vmatpush1.msra.mxu0 0.0
    %517 = vmatprep.subr.mxu0 0.0
    %518 = vmatpush1.msra.mxu0 0.0
    %519 = vmatprep.subr.mxu0 0.0
    %520 = vmatpush1.msra.mxu0 0.0
    %521 = vmatprep.subr.mxu0 0.0
    %522 = vmatpush1.msra.mxu0 0.0
    %523 = vmatprep.subr.mxu0 0.0
    %524 = vmatpush1.msra.mxu0 0.0
    %525 = vmatprep.subr.mxu0 0.0
    %526 = vmatpush1.msra.mxu0 0.0
    %527 = vmatprep.subr.mxu0 0.0
    %528 = vmatpush1.msra.mxu0 0.0
    %529 = vmatprep.subr.mxu0 0.0
    %530 = vmatpush1.msra.mxu0 0.0
    %531 = vmatprep.subr.mxu0 0.0
    %532 = vmatpush1.msra.mxu0 0.0
    %533 = vmatprep.subr.mxu0 0.0
    %534 = vmatpush1.msra.mxu0 0.0
    %535 = vmatprep.subr.mxu0 0.0
    %536 = vmatpush1.msra.mxu0 0.0
    %537 = vmatprep.subr.mxu0 0.0
    %538 = vmatpush1.msra.mxu0 0.0
    %539 = vmatprep.subr.mxu0 0.0
    %540 = vmatpush1.msra.mxu0 0.0
    %541 = vmatprep.subr.mxu0 0.0
    %542 = vmatpush1.msra.mxu0 0.0
    %543 = vmatprep.subr.mxu0 0.0
    %544 = vmatpush1.msra.mxu0 0.0
    %545 = vmatprep.subr.mxu0 0.0
    %546 = vmatpush1.msra.mxu0 0.0
    %547 = vmatprep.subr.mxu0 0.0
    %548 = vmatpush1.msra.mxu0 0.0
    %549 = vmatprep.subr.mxu0 0.0
    %550 = vmatpush1.msra.mxu0 0.0
    %551 = vmatprep.subr.mxu0 0.0
    %552 = vmatpush1.msra.mxu0 0.0
    %553 = vmatprep.subr.mxu0 0.0
    %554 = vmatpush1.msra.mxu0 0.0
    %555 = vmatprep.subr.mxu0 0.0
    %556 = vmatpush1.msra.mxu0 0.0
    %557 = vmatprep.subr.mxu0 0.0
    %558 = vmatpush1.msra.mxu0 0.0
    %559 = vmatprep.subr.mxu0 0.0
    %560 = vmatpush1.msra.mxu0 0.0
    %561 = vmatprep.subr.mxu0 0.0
    %562 = vmatpush1.msra.mxu0 0.0
    %563 = vmatprep.subr.mxu0 0.0
    %564 = vmatpush1.msra.mxu0 0.0
    %565 = vmatprep.subr.mxu0 0.0
    %566 = vmatpush1.msra.mxu0 0.0
    %567 = vmatprep.subr.mxu0 0.0
    %568 = vmatpush1.msra.mxu0 0.0
    %569 = vmatprep.subr.mxu0 0.0
    %570 = vmatpush1.msra.mxu0 0.0
    %571 = vmatprep.mubr.f32.mxu0 0.0
    %572 = vmatmul.mubr.f32.gmra.mrb[0].mxu0 %v460
    %v573 = vpop.f32.mrb[0].mxu0
    %v574 = vadd.f32 0.0, %v573
    %v575 = vpop.f32.mrb[0].mxu0
    %576 = vmatprep.mubr.f32.mxu0 0.0
    %577 = vmatmul.mubr.f32.gmra.mrb[0].mxu0 %v463
    %v578 = vpop.f32.mrb[0].mxu0
    %v579 = vadd.f32 0.0, %v578
    %v580 = vpop.f32.mrb[0].mxu0
    %581 = vmatprep.mubr.f32.mxu0 0.0
    %582 = vmatmul.mubr.f32.gmra.mrb[0].mxu0 %v466
    %v583 = vpop.f32.mrb[0].mxu0
    %v584 = vadd.f32 0.0, %v583
    %v585 = vpop.f32.mrb[0].mxu0
    %586 = vmatprep.mubr.f32.mxu0 0.0
    %587 = vmatmul.mubr.f32.gmra.mrb[0].mxu0 %v469
    %v588 = vpop.f32.mrb[0].mxu0
    %v589 = vadd.f32 0.0, %v588
    %v590 = vpop.f32.mrb[0].mxu0
    %591 = vmatprep.mubr.f32.mxu0 0.0
    %592 = vmatmul.mubr.f32.gmra.mrb[0].mxu0 %v472
    %v593 = vpop.f32.mrb[0].mxu0
    %v594 = vadd.f32 0.0, %v593
    %v595 = vpop.f32.mrb[0].mxu0
    %596 = vmatprep.mubr.f32.mxu0 0.0
    %597 = vmatmul.mubr.f32.gmra.mrb[0].mxu0 %v475
    %v598 = vpop.f32.mrb[0].mxu0
    %v599 = vadd.f32 0.0, %v598
    %v600 = vpop.f32.mrb[0].mxu0
    %601 = vmatprep.mubr.f32.mxu0 0.0
    %602 = vmatmul.mubr.f32.gmra.mrb[0].mxu0 %v478
    %v603 = vpop.f32.mrb[0].mxu0
    %v604 = vadd.f32 0.0, %v603
    %v605 = vpop.f32.mrb[0].mxu0
    %606 = vmatprep.mubr.f32.mxu0 0.0
    %607 = vmatmul.mubr.f32.gmra.mrb[0].mxu0 %v481
    %v608 = vpop.f32.mrb[0].mxu0
    %v609 = vadd.f32 0.0, %v608
    %v610 = vpop.f32.mrb[0].mxu0
    %611 = vmatprep.mubr.f32.mxu0 0.0
    %612 = vmatmul.mubr.f32.gmra.mrb[0].mxu0 %v484
    %v613 = vpop.f32.mrb[0].mxu0
    %v614 = vadd.f32 0.0, %v613
    %v615 = vpop.f32.mrb[0].mxu0
    %616 = vmatprep.mubr.f32.mxu0 0.0
    %617 = vmatmul.mubr.f32.gmra.mrb[0].mxu0 %v487
    %v618 = vpop.f32.mrb[0].mxu0
    %v619 = vadd.f32 0.0, %v618
    %v620 = vpop.f32.mrb[0].mxu0
    %621 = vmatprep.mubr.f32.mxu0 0.0
    %622 = vmatmul.mubr.f32.gmra.mrb[0].mxu0 %v490
    %v623 = vpop.f32.mrb[0].mxu0
    %v624 = vadd.f32 0.0, %v623
    %v625 = vpop.f32.mrb[0].mxu0
    %626 = vmatprep.mubr.f32.mxu0 0.0
    %627 = vmatmul.mubr.f32.gmra.mrb[0].mxu0 %v493
    %v628 = vpop.f32.mrb[0].mxu0
    %v629 = vadd.f32 0.0, %v628
    %v630 = vpop.f32.mrb[0].mxu0
    %631 = vmatprep.mubr.f32.mxu0 0.0
    %632 = vmatmul.mubr.f32.gmra.mrb[0].mxu0 %v496
    %v633 = vpop.f32.mrb[0].mxu0
    %v634 = vadd.f32 0.0, %v633
    %v635 = vpop.f32.mrb[0].mxu0
    %636 = vmatprep.mubr.f32.mxu0 0.0
    %637 = vmatmul.mubr.f32.gmra.mrb[0].mxu0 %v499
    %v638 = vpop.f32.mrb[0].mxu0
    %v639 = vadd.f32 0.0, %v638
    %v640 = vpop.f32.mrb[0].mxu0
    %641 = vmatprep.mubr.f32.mxu0 0.0
    %642 = vmatmul.mubr.f32.gmra.mrb[0].mxu0 %v502
    %v643 = vpop.f32.mrb[0].mxu0
    %v644 = vadd.f32 0.0, %v643
    %v645 = vpop.f32.mrb[0].mxu0
    %646 = vmatprep.mubr.f32.mxu0 0.0
    %647 = vmatmul.mubr.f32.gmra.mrb[0].mxu0 %v505
    %v648 = vpop.f32.mrb[0].mxu0
    %v649 = vadd.f32 0.0, %v648
    %v650 = vpop.f32.mrb[0].mxu0
    %651 = vdwg.mxu0
    %vm652 = vcmp.eq.s32.totalorder %v428, 0
    %vm653 = vcmp.eq.s32.totalorder %v429, 0
    %vm654 = vcmp.eq.s32.totalorder %v430, 0
    %vm655 = vcmp.eq.s32.totalorder %v431, 0
    %vm656 = vcmp.eq.s32.totalorder %v432, 0
    %vm657 = vcmp.eq.s32.totalorder %v433, 0
    %vm658 = vcmp.eq.s32.totalorder %v434, 0
    %vm659 = vcmp.eq.s32.totalorder %v435, 0
    %vm660 = vcmp.eq.s32.totalorder %v436, 0
    %vm661 = vcmp.eq.s32.totalorder %v437, 0
    %vm662 = vcmp.eq.s32.totalorder %v438, 0
    %vm663 = vcmp.eq.s32.totalorder %v439, 0
    %vm664 = vcmp.eq.s32.totalorder %v440, 0
    %vm665 = vcmp.eq.s32.totalorder %v441, 0
    %vm666 = vcmp.eq.s32.totalorder %v442, 0
    %vm667 = vcmp.eq.s32.totalorder %v443, 0
    %v668 = vstv %s445
    %vm669 = vcmp.lt.s32.totalorder %v119, %v668
    %v670 = vsel %vm652, 1, 0
    %v671 = vsel %vm653, 1, 0
    %v672 = vsel %vm654, 1, 0
    %v673 = vsel %vm655, 1, 0
    %v674 = vsel %vm656, 1, 0
    %v675 = vsel %vm657, 1, 0
    %v676 = vsel %vm658, 1, 0
    %v677 = vsel %vm659, 1, 0
    %v678 = vsel %vm660, 1, 0
    %v679 = vsel %vm661, 1, 0
    %v680 = vsel %vm662, 1, 0
    %v681 = vsel %vm663, 1, 0
    %v682 = vsel %vm664, 1, 0
    %v683 = vsel %vm665, 1, 0
    %v684 = vsel %vm666, 1, 0
    %v685 = vsel %vm667, 1, 0
    %vm686 = vcmp.eq.s32.totalorder %v670, 1
    %vm687 = vcmp.eq.s32.totalorder %v671, 1
    %vm688 = vcmp.eq.s32.totalorder %v672, 1
    %vm689 = vcmp.eq.s32.totalorder %v673, 1
    %vm690 = vcmp.eq.s32.totalorder %v674, 1
    %vm691 = vcmp.eq.s32.totalorder %v675, 1
    %vm692 = vcmp.eq.s32.totalorder %v676, 1
    %vm693 = vcmp.eq.s32.totalorder %v677, 1
    %vm694 = vcmp.eq.s32.totalorder %v678, 1
    %vm695 = vcmp.eq.s32.totalorder %v679, 1
    %vm696 = vcmp.eq.s32.totalorder %v680, 1
    %vm697 = vcmp.eq.s32.totalorder %v681, 1
    %vm698 = vcmp.eq.s32.totalorder %v682, 1
    %vm699 = vcmp.eq.s32.totalorder %v683, 1
    %vm700 = vcmp.eq.s32.totalorder %v684, 1
    %vm701 = vcmp.eq.s32.totalorder %v685, 1
    %v702 = vsel %vm669, 1, 0
    %vm703 = vcmp.eq.s32.totalorder %v702, 1
    %vm704 = vmand %vm686, %vm703
    %vm705 = vmand %vm687, %vm703
    %vm706 = vmand %vm688, %vm703
    %vm707 = vmand %vm689, %vm703
    %vm708 = vmand %vm690, %vm703
    %vm709 = vmand %vm691, %vm703
    %vm710 = vmand %vm692, %vm703
    %vm711 = vmand %vm693, %vm703
    %vm712 = vmand %vm694, %vm703
    %vm713 = vmand %vm695, %vm703
    %vm714 = vmand %vm696, %vm703
    %vm715 = vmand %vm697, %vm703
    %vm716 = vmand %vm698, %vm703
    %vm717 = vmand %vm699, %vm703
    %vm718 = vmand %vm700, %vm703
    %vm719 = vmand %vm701, %vm703
    %v720 = vsel %vm704, %v574, -1e+30
    %v721 = vsel %vm705, %v579, -1e+30
    %v722 = vsel %vm706, %v584, -1e+30
    %v723 = vsel %vm707, %v589, -1e+30
    %v724 = vsel %vm708, %v594, -1e+30
    %v725 = vsel %vm709, %v599, -1e+30
    %v726 = vsel %vm710, %v604, -1e+30
    %v727 = vsel %vm711, %v609, -1e+30
    %v728 = vsel %vm712, %v614, -1e+30
    %v729 = vsel %vm713, %v619, -1e+30
    %v730 = vsel %vm714, %v624, -1e+30
    %v731 = vsel %vm715, %v629, -1e+30
    %v732 = vsel %vm716, %v634, -1e+30
    %v733 = vsel %vm717, %v639, -1e+30
    %v734 = vsel %vm718, %v644, -1e+30
    %v735 = vsel %vm719, %v649, -1e+30
    %s736 = smul.u32 %s51, 2
    %s737 = sadd.s32 %s736, 1
    %v738 = vlaneseq
    %v739 = vshrl.u32 %v738, 7
    %v740 = vsub.s32 1, %v739
    %v741 = vrot.slane %v214, %v740
    %vm742 = vcmp.eq.s32.totalorder %v38, %v741
    %vm743 = vcmp.eq.s32.totalorder %v237, %v741
    %vm744 = vcmp.eq.s32.totalorder %v238, %v741
    %vm745 = vcmp.eq.s32.totalorder %v239, %v741
    %v746 = vsel %vm742, 1.0, 0.0
    %v747 = vsel %vm743, 1.0, 0.0
    %v748 = vsel %vm744, 1.0, 0.0
    %v749 = vsel %vm745, 1.0, 0.0
    %750 = vmatprep.subr.mxu0 0.0
    %751 = vmatpush1.msra.mxu0 %v746
    %752 = vmatprep.subr.mxu0 0.0
    %753 = vmatpush1.msra.mxu0 %v747
    %754 = vmatprep.subr.mxu0 0.0
    %755 = vmatpush1.msra.mxu0 %v748
    %756 = vmatprep.subr.mxu0 0.0
    %757 = vmatpush1.msra.mxu0 %v749
    %758 = vmatprep.subr.mxu0 0.0
    %759 = vmatpush1.msra.mxu0 0.0
    %760 = vmatprep.subr.mxu0 0.0
    %761 = vmatpush1.msra.mxu0 0.0
    %762 = vmatprep.subr.mxu0 0.0
    %763 = vmatpush1.msra.mxu0 0.0
    %764 = vmatprep.subr.mxu0 0.0
    %765 = vmatpush1.msra.mxu0 0.0
    %766 = vmatprep.subr.mxu0 0.0
    %767 = vmatpush1.msra.mxu0 0.0
    %768 = vmatprep.subr.mxu0 0.0
    %769 = vmatpush1.msra.mxu0 0.0
    %770 = vmatprep.subr.mxu0 0.0
    %771 = vmatpush1.msra.mxu0 0.0
    %772 = vmatprep.subr.mxu0 0.0
    %773 = vmatpush1.msra.mxu0 0.0
    %774 = vmatprep.subr.mxu0 0.0
    %775 = vmatpush1.msra.mxu0 0.0
    %776 = vmatprep.subr.mxu0 0.0
    %777 = vmatpush1.msra.mxu0 0.0
    %778 = vmatprep.subr.mxu0 0.0
    %779 = vmatpush1.msra.mxu0 0.0
    %780 = vmatprep.subr.mxu0 0.0
    %781 = vmatpush1.msra.mxu0 0.0
    %782 = vmatprep.subr.mxu0 0.0
    %783 = vmatpush1.msra.mxu0 0.0
    %784 = vmatprep.subr.mxu0 0.0
    %785 = vmatpush1.msra.mxu0 0.0
    %786 = vmatprep.subr.mxu0 0.0
    %787 = vmatpush1.msra.mxu0 0.0
    %788 = vmatprep.subr.mxu0 0.0
    %789 = vmatpush1.msra.mxu0 0.0
    %790 = vmatprep.subr.mxu0 0.0
    %791 = vmatpush1.msra.mxu0 0.0
    %792 = vmatprep.subr.mxu0 0.0
    %793 = vmatpush1.msra.mxu0 0.0
    %794 = vmatprep.subr.mxu0 0.0
    %795 = vmatpush1.msra.mxu0 0.0
    %796 = vmatprep.subr.mxu0 0.0
    %797 = vmatpush1.msra.mxu0 0.0
    %798 = vmatprep.subr.mxu0 0.0
    %799 = vmatpush1.msra.mxu0 0.0
    %800 = vmatprep.subr.mxu0 0.0
    %801 = vmatpush1.msra.mxu0 0.0
    %802 = vmatprep.subr.mxu0 0.0
    %803 = vmatpush1.msra.mxu0 0.0
    %804 = vmatprep.subr.mxu0 0.0
    %805 = vmatpush1.msra.mxu0 0.0
    %806 = vmatprep.subr.mxu0 0.0
    %807 = vmatpush1.msra.mxu0 0.0
    %808 = vmatprep.subr.mxu0 0.0
    %809 = vmatpush1.msra.mxu0 0.0
    %810 = vmatprep.subr.mxu0 0.0
    %811 = vmatpush1.msra.mxu0 0.0
    %812 = vmatprep.subr.mxu0 0.0
    %813 = vmatpush1.msra.mxu0 0.0
    %814 = vmatprep.mubr.f32.mxu0 0.0
    %815 = vmatmul.mubr.f32.gmra.mrb[0].mxu0 %v460
    %v816 = vpop.f32.mrb[0].mxu0
    %v817 = vadd.f32 0.0, %v816
    %v818 = vpop.f32.mrb[0].mxu0
    %819 = vmatprep.mubr.f32.mxu0 0.0
    %820 = vmatmul.mubr.f32.gmra.mrb[0].mxu0 %v463
    %v821 = vpop.f32.mrb[0].mxu0
    %v822 = vadd.f32 0.0, %v821
    %v823 = vpop.f32.mrb[0].mxu0
    %824 = vmatprep.mubr.f32.mxu0 0.0
    %825 = vmatmul.mubr.f32.gmra.mrb[0].mxu0 %v466
    %v826 = vpop.f32.mrb[0].mxu0
    %v827 = vadd.f32 0.0, %v826
    %v828 = vpop.f32.mrb[0].mxu0
    %829 = vmatprep.mubr.f32.mxu0 0.0
    %830 = vmatmul.mubr.f32.gmra.mrb[0].mxu0 %v469
    %v831 = vpop.f32.mrb[0].mxu0
    %v832 = vadd.f32 0.0, %v831
    %v833 = vpop.f32.mrb[0].mxu0
    %834 = vmatprep.mubr.f32.mxu0 0.0
    %835 = vmatmul.mubr.f32.gmra.mrb[0].mxu0 %v472
    %v836 = vpop.f32.mrb[0].mxu0
    %v837 = vadd.f32 0.0, %v836
    %v838 = vpop.f32.mrb[0].mxu0
    %839 = vmatprep.mubr.f32.mxu0 0.0
    %840 = vmatmul.mubr.f32.gmra.mrb[0].mxu0 %v475
    %v841 = vpop.f32.mrb[0].mxu0
    %v842 = vadd.f32 0.0, %v841
    %v843 = vpop.f32.mrb[0].mxu0
    %844 = vmatprep.mubr.f32.mxu0 0.0
    %845 = vmatmul.mubr.f32.gmra.mrb[0].mxu0 %v478
    %v846 = vpop.f32.mrb[0].mxu0
    %v847 = vadd.f32 0.0, %v846
    %v848 = vpop.f32.mrb[0].mxu0
    %849 = vmatprep.mubr.f32.mxu0 0.0
    %850 = vmatmul.mubr.f32.gmra.mrb[0].mxu0 %v481
    %v851 = vpop.f32.mrb[0].mxu0
    %v852 = vadd.f32 0.0, %v851
    %v853 = vpop.f32.mrb[0].mxu0
    %854 = vmatprep.mubr.f32.mxu0 0.0
    %855 = vmatmul.mubr.f32.gmra.mrb[0].mxu0 %v484
    %v856 = vpop.f32.mrb[0].mxu0
    %v857 = vadd.f32 0.0, %v856
    %v858 = vpop.f32.mrb[0].mxu0
    %859 = vmatprep.mubr.f32.mxu0 0.0
    %860 = vmatmul.mubr.f32.gmra.mrb[0].mxu0 %v487
    %v861 = vpop.f32.mrb[0].mxu0
    %v862 = vadd.f32 0.0, %v861
    %v863 = vpop.f32.mrb[0].mxu0
    %864 = vmatprep.mubr.f32.mxu0 0.0
    %865 = vmatmul.mubr.f32.gmra.mrb[0].mxu0 %v490
    %v866 = vpop.f32.mrb[0].mxu0
    %v867 = vadd.f32 0.0, %v866
    %v868 = vpop.f32.mrb[0].mxu0
    %869 = vmatprep.mubr.f32.mxu0 0.0
    %870 = vmatmul.mubr.f32.gmra.mrb[0].mxu0 %v493
    %v871 = vpop.f32.mrb[0].mxu0
    %v872 = vadd.f32 0.0, %v871
    %v873 = vpop.f32.mrb[0].mxu0
    %874 = vmatprep.mubr.f32.mxu0 0.0
    %875 = vmatmul.mubr.f32.gmra.mrb[0].mxu0 %v496
    %v876 = vpop.f32.mrb[0].mxu0
    %v877 = vadd.f32 0.0, %v876
    %v878 = vpop.f32.mrb[0].mxu0
    %879 = vmatprep.mubr.f32.mxu0 0.0
    %880 = vmatmul.mubr.f32.gmra.mrb[0].mxu0 %v499
    %v881 = vpop.f32.mrb[0].mxu0
    %v882 = vadd.f32 0.0, %v881
    %v883 = vpop.f32.mrb[0].mxu0
    %884 = vmatprep.mubr.f32.mxu0 0.0
    %885 = vmatmul.mubr.f32.gmra.mrb[0].mxu0 %v502
    %v886 = vpop.f32.mrb[0].mxu0
    %v887 = vadd.f32 0.0, %v886
    %v888 = vpop.f32.mrb[0].mxu0
    %889 = vmatprep.mubr.f32.mxu0 0.0
    %890 = vmatmul.mubr.f32.gmra.mrb[0].mxu0 %v505
    %v891 = vpop.f32.mrb[0].mxu0
    %v892 = vadd.f32 0.0, %v891
    %v893 = vpop.f32.mrb[0].mxu0
    %894 = vdwg.mxu0
    %vm895 = vcmp.eq.s32.totalorder %v428, 1
    %vm896 = vcmp.eq.s32.totalorder %v429, 1
    %vm897 = vcmp.eq.s32.totalorder %v430, 1
    %vm898 = vcmp.eq.s32.totalorder %v431, 1
    %vm899 = vcmp.eq.s32.totalorder %v432, 1
    %vm900 = vcmp.eq.s32.totalorder %v433, 1
    %vm901 = vcmp.eq.s32.totalorder %v434, 1
    %vm902 = vcmp.eq.s32.totalorder %v435, 1
    %vm903 = vcmp.eq.s32.totalorder %v436, 1
    %vm904 = vcmp.eq.s32.totalorder %v437, 1
    %vm905 = vcmp.eq.s32.totalorder %v438, 1
    %vm906 = vcmp.eq.s32.totalorder %v439, 1
    %vm907 = vcmp.eq.s32.totalorder %v440, 1
    %vm908 = vcmp.eq.s32.totalorder %v441, 1
    %vm909 = vcmp.eq.s32.totalorder %v442, 1
    %vm910 = vcmp.eq.s32.totalorder %v443, 1
    %v911 = vstv %s737
    %vm912 = vcmp.lt.s32.totalorder %v119, %v911
    %v913 = vsel %vm895, 1, 0
    %v914 = vsel %vm896, 1, 0
    %v915 = vsel %vm897, 1, 0
    %v916 = vsel %vm898, 1, 0
    %v917 = vsel %vm899, 1, 0
    %v918 = vsel %vm900, 1, 0
    %v919 = vsel %vm901, 1, 0
    %v920 = vsel %vm902, 1, 0
    %v921 = vsel %vm903, 1, 0
    %v922 = vsel %vm904, 1, 0
    %v923 = vsel %vm905, 1, 0
    %v924 = vsel %vm906, 1, 0
    %v925 = vsel %vm907, 1, 0
    %v926 = vsel %vm908, 1, 0
    %v927 = vsel %vm909, 1, 0
    %v928 = vsel %vm910, 1, 0
    %vm929 = vcmp.eq.s32.totalorder %v913, 1
    %vm930 = vcmp.eq.s32.totalorder %v914, 1
    %vm931 = vcmp.eq.s32.totalorder %v915, 1
    %vm932 = vcmp.eq.s32.totalorder %v916, 1
    %vm933 = vcmp.eq.s32.totalorder %v917, 1
    %vm934 = vcmp.eq.s32.totalorder %v918, 1
    %vm935 = vcmp.eq.s32.totalorder %v919, 1
    %vm936 = vcmp.eq.s32.totalorder %v920, 1
    %vm937 = vcmp.eq.s32.totalorder %v921, 1
    %vm938 = vcmp.eq.s32.totalorder %v922, 1
    %vm939 = vcmp.eq.s32.totalorder %v923, 1
    %vm940 = vcmp.eq.s32.totalorder %v924, 1
    %vm941 = vcmp.eq.s32.totalorder %v925, 1
    %vm942 = vcmp.eq.s32.totalorder %v926, 1
    %vm943 = vcmp.eq.s32.totalorder %v927, 1
    %vm944 = vcmp.eq.s32.totalorder %v928, 1
    %v945 = vsel %vm912, 1, 0
    %vm946 = vcmp.eq.s32.totalorder %v945, 1
    %vm947 = vmand %vm929, %vm946
    %vm948 = vmand %vm930, %vm946
    %vm949 = vmand %vm931, %vm946
    %vm950 = vmand %vm932, %vm946
    %vm951 = vmand %vm933, %vm946
    %vm952 = vmand %vm934, %vm946
    %vm953 = vmand %vm935, %vm946
    %vm954 = vmand %vm936, %vm946
    %vm955 = vmand %vm937, %vm946
    %vm956 = vmand %vm938, %vm946
    %vm957 = vmand %vm939, %vm946
    %vm958 = vmand %vm940, %vm946
    %vm959 = vmand %vm941, %vm946
    %vm960 = vmand %vm942, %vm946
    %vm961 = vmand %vm943, %vm946
    %vm962 = vmand %vm944, %vm946
    %v963 = vsel %vm947, %v817, %v720
    %v964 = vsel %vm948, %v822, %v721
    %v965 = vsel %vm949, %v827, %v722
    %v966 = vsel %vm950, %v832, %v723
    %v967 = vsel %vm951, %v837, %v724
    %v968 = vsel %vm952, %v842, %v725
    %v969 = vsel %vm953, %v847, %v726
    %v970 = vsel %vm954, %v852, %v727
    %v971 = vsel %vm955, %v857, %v728
    %v972 = vsel %vm956, %v862, %v729
    %v973 = vsel %vm957, %v867, %v730
    %v974 = vsel %vm958, %v872, %v731
    %v975 = vsel %vm959, %v877, %v732
    %v976 = vsel %vm960, %v882, %v733
    %v977 = vsel %vm961, %v887, %v734
    %v978 = vsel %vm962, %v892, %v735
    %s979 = smul.u32 %s59, 2
    %s980 = sadd.s32 %s979, 1
    %v981 = vlaneseq
    %v982 = vshrl.u32 %v981, 7
    %v983 = vsub.s32 2, %v982
    %v984 = vrot.slane %v214, %v983
    %vm985 = vcmp.eq.s32.totalorder %v38, %v984
    %vm986 = vcmp.eq.s32.totalorder %v237, %v984
    %vm987 = vcmp.eq.s32.totalorder %v238, %v984
    %vm988 = vcmp.eq.s32.totalorder %v239, %v984
    %v989 = vsel %vm985, 1.0, 0.0
    %v990 = vsel %vm986, 1.0, 0.0
    %v991 = vsel %vm987, 1.0, 0.0
    %v992 = vsel %vm988, 1.0, 0.0
    %993 = vmatprep.subr.mxu0 0.0
    %994 = vmatpush1.msra.mxu0 %v989
    %995 = vmatprep.subr.mxu0 0.0
    %996 = vmatpush1.msra.mxu0 %v990
    %997 = vmatprep.subr.mxu0 0.0
    %998 = vmatpush1.msra.mxu0 %v991
    %999 = vmatprep.subr.mxu0 0.0
    %1000 = vmatpush1.msra.mxu0 %v992
    %1001 = vmatprep.subr.mxu0 0.0
    %1002 = vmatpush1.msra.mxu0 0.0
    %1003 = vmatprep.subr.mxu0 0.0
    %1004 = vmatpush1.msra.mxu0 0.0
    %1005 = vmatprep.subr.mxu0 0.0
    %1006 = vmatpush1.msra.mxu0 0.0
    %1007 = vmatprep.subr.mxu0 0.0
    %1008 = vmatpush1.msra.mxu0 0.0
    %1009 = vmatprep.subr.mxu0 0.0
    %1010 = vmatpush1.msra.mxu0 0.0
    %1011 = vmatprep.subr.mxu0 0.0
    %1012 = vmatpush1.msra.mxu0 0.0
    %1013 = vmatprep.subr.mxu0 0.0
    %1014 = vmatpush1.msra.mxu0 0.0
    %1015 = vmatprep.subr.mxu0 0.0
    %1016 = vmatpush1.msra.mxu0 0.0
    %1017 = vmatprep.subr.mxu0 0.0
    %1018 = vmatpush1.msra.mxu0 0.0
    %1019 = vmatprep.subr.mxu0 0.0
    %1020 = vmatpush1.msra.mxu0 0.0
    %1021 = vmatprep.subr.mxu0 0.0
    %1022 = vmatpush1.msra.mxu0 0.0
    %1023 = vmatprep.subr.mxu0 0.0
    %1024 = vmatpush1.msra.mxu0 0.0
    %1025 = vmatprep.subr.mxu0 0.0
    %1026 = vmatpush1.msra.mxu0 0.0
    %1027 = vmatprep.subr.mxu0 0.0
    %1028 = vmatpush1.msra.mxu0 0.0
    %1029 = vmatprep.subr.mxu0 0.0
    %1030 = vmatpush1.msra.mxu0 0.0
    %1031 = vmatprep.subr.mxu0 0.0
    %1032 = vmatpush1.msra.mxu0 0.0
    %1033 = vmatprep.subr.mxu0 0.0
    %1034 = vmatpush1.msra.mxu0 0.0
    %1035 = vmatprep.subr.mxu0 0.0
    %1036 = vmatpush1.msra.mxu0 0.0
    %1037 = vmatprep.subr.mxu0 0.0
    %1038 = vmatpush1.msra.mxu0 0.0
    %1039 = vmatprep.subr.mxu0 0.0
    %1040 = vmatpush1.msra.mxu0 0.0
    %1041 = vmatprep.subr.mxu0 0.0
    %1042 = vmatpush1.msra.mxu0 0.0
    %1043 = vmatprep.subr.mxu0 0.0
    %1044 = vmatpush1.msra.mxu0 0.0
    %1045 = vmatprep.subr.mxu0 0.0
    %1046 = vmatpush1.msra.mxu0 0.0
    %1047 = vmatprep.subr.mxu0 0.0
    %1048 = vmatpush1.msra.mxu0 0.0
    %1049 = vmatprep.subr.mxu0 0.0
    %1050 = vmatpush1.msra.mxu0 0.0
    %1051 = vmatprep.subr.mxu0 0.0
    %1052 = vmatpush1.msra.mxu0 0.0
    %1053 = vmatprep.subr.mxu0 0.0
    %1054 = vmatpush1.msra.mxu0 0.0
    %1055 = vmatprep.subr.mxu0 0.0
    %1056 = vmatpush1.msra.mxu0 0.0
    %1057 = vmatprep.mubr.f32.mxu0 0.0
    %1058 = vmatmul.mubr.f32.gmra.mrb[0].mxu0 %v460
    %v1059 = vpop.f32.mrb[0].mxu0
    %v1060 = vadd.f32 0.0, %v1059
    %v1061 = vpop.f32.mrb[0].mxu0
    %1062 = vmatprep.mubr.f32.mxu0 0.0
    %1063 = vmatmul.mubr.f32.gmra.mrb[0].mxu0 %v463
    %v1064 = vpop.f32.mrb[0].mxu0
    %v1065 = vadd.f32 0.0, %v1064
    %v1066 = vpop.f32.mrb[0].mxu0
    %1067 = vmatprep.mubr.f32.mxu0 0.0
    %1068 = vmatmul.mubr.f32.gmra.mrb[0].mxu0 %v466
    %v1069 = vpop.f32.mrb[0].mxu0
    %v1070 = vadd.f32 0.0, %v1069
    %v1071 = vpop.f32.mrb[0].mxu0
    %1072 = vmatprep.mubr.f32.mxu0 0.0
    %1073 = vmatmul.mubr.f32.gmra.mrb[0].mxu0 %v469
    %v1074 = vpop.f32.mrb[0].mxu0
    %v1075 = vadd.f32 0.0, %v1074
    %v1076 = vpop.f32.mrb[0].mxu0
    %1077 = vmatprep.mubr.f32.mxu0 0.0
    %1078 = vmatmul.mubr.f32.gmra.mrb[0].mxu0 %v472
    %v1079 = vpop.f32.mrb[0].mxu0
    %v1080 = vadd.f32 0.0, %v1079
    %v1081 = vpop.f32.mrb[0].mxu0
    %1082 = vmatprep.mubr.f32.mxu0 0.0
    %1083 = vmatmul.mubr.f32.gmra.mrb[0].mxu0 %v475
    %v1084 = vpop.f32.mrb[0].mxu0
    %v1085 = vadd.f32 0.0, %v1084
    %v1086 = vpop.f32.mrb[0].mxu0
    %1087 = vmatprep.mubr.f32.mxu0 0.0
    %1088 = vmatmul.mubr.f32.gmra.mrb[0].mxu0 %v478
    %v1089 = vpop.f32.mrb[0].mxu0
    %v1090 = vadd.f32 0.0, %v1089
    %v1091 = vpop.f32.mrb[0].mxu0
    %1092 = vmatprep.mubr.f32.mxu0 0.0
    %1093 = vmatmul.mubr.f32.gmra.mrb[0].mxu0 %v481
    %v1094 = vpop.f32.mrb[0].mxu0
    %v1095 = vadd.f32 0.0, %v1094
    %v1096 = vpop.f32.mrb[0].mxu0
    %1097 = vmatprep.mubr.f32.mxu0 0.0
    %1098 = vmatmul.mubr.f32.gmra.mrb[0].mxu0 %v484
    %v1099 = vpop.f32.mrb[0].mxu0
    %v1100 = vadd.f32 0.0, %v1099
    %v1101 = vpop.f32.mrb[0].mxu0
    %1102 = vmatprep.mubr.f32.mxu0 0.0
    %1103 = vmatmul.mubr.f32.gmra.mrb[0].mxu0 %v487
    %v1104 = vpop.f32.mrb[0].mxu0
    %v1105 = vadd.f32 0.0, %v1104
    %v1106 = vpop.f32.mrb[0].mxu0
    %1107 = vmatprep.mubr.f32.mxu0 0.0
    %1108 = vmatmul.mubr.f32.gmra.mrb[0].mxu0 %v490
    %v1109 = vpop.f32.mrb[0].mxu0
    %v1110 = vadd.f32 0.0, %v1109
    %v1111 = vpop.f32.mrb[0].mxu0
    %1112 = vmatprep.mubr.f32.mxu0 0.0
    %1113 = vmatmul.mubr.f32.gmra.mrb[0].mxu0 %v493
    %v1114 = vpop.f32.mrb[0].mxu0
    %v1115 = vadd.f32 0.0, %v1114
    %v1116 = vpop.f32.mrb[0].mxu0
    %1117 = vmatprep.mubr.f32.mxu0 0.0
    %1118 = vmatmul.mubr.f32.gmra.mrb[0].mxu0 %v496
    %v1119 = vpop.f32.mrb[0].mxu0
    %v1120 = vadd.f32 0.0, %v1119
    %v1121 = vpop.f32.mrb[0].mxu0
    %1122 = vmatprep.mubr.f32.mxu0 0.0
    %1123 = vmatmul.mubr.f32.gmra.mrb[0].mxu0 %v499
    %v1124 = vpop.f32.mrb[0].mxu0
    %v1125 = vadd.f32 0.0, %v1124
    %v1126 = vpop.f32.mrb[0].mxu0
    %1127 = vmatprep.mubr.f32.mxu0 0.0
    %1128 = vmatmul.mubr.f32.gmra.mrb[0].mxu0 %v502
    %v1129 = vpop.f32.mrb[0].mxu0
    %v1130 = vadd.f32 0.0, %v1129
    %v1131 = vpop.f32.mrb[0].mxu0
    %1132 = vmatprep.mubr.f32.mxu0 0.0
    %1133 = vmatmul.mubr.f32.gmra.mrb[0].mxu0 %v505
    %v1134 = vpop.f32.mrb[0].mxu0
    %v1135 = vadd.f32 0.0, %v1134
    %v1136 = vpop.f32.mrb[0].mxu0
    %1137 = vdwg.mxu0
    %vm1138 = vcmp.eq.s32.totalorder %v428, 2
    %vm1139 = vcmp.eq.s32.totalorder %v429, 2
    %vm1140 = vcmp.eq.s32.totalorder %v430, 2
    %vm1141 = vcmp.eq.s32.totalorder %v431, 2
    %vm1142 = vcmp.eq.s32.totalorder %v432, 2
    %vm1143 = vcmp.eq.s32.totalorder %v433, 2
    %vm1144 = vcmp.eq.s32.totalorder %v434, 2
    %vm1145 = vcmp.eq.s32.totalorder %v435, 2
    %vm1146 = vcmp.eq.s32.totalorder %v436, 2
    %vm1147 = vcmp.eq.s32.totalorder %v437, 2
    %vm1148 = vcmp.eq.s32.totalorder %v438, 2
    %vm1149 = vcmp.eq.s32.totalorder %v439, 2
    %vm1150 = vcmp.eq.s32.totalorder %v440, 2
    %vm1151 = vcmp.eq.s32.totalorder %v441, 2
    %vm1152 = vcmp.eq.s32.totalorder %v442, 2
    %vm1153 = vcmp.eq.s32.totalorder %v443, 2
    %v1154 = vstv %s980
    %vm1155 = vcmp.lt.s32.totalorder %v119, %v1154
    %v1156 = vsel %vm1138, 1, 0
    %v1157 = vsel %vm1139, 1, 0
    %v1158 = vsel %vm1140, 1, 0
    %v1159 = vsel %vm1141, 1, 0
    %v1160 = vsel %vm1142, 1, 0
    %v1161 = vsel %vm1143, 1, 0
    %v1162 = vsel %vm1144, 1, 0
    %v1163 = vsel %vm1145, 1, 0
    %v1164 = vsel %vm1146, 1, 0
    %v1165 = vsel %vm1147, 1, 0
    %v1166 = vsel %vm1148, 1, 0
    %v1167 = vsel %vm1149, 1, 0
    %v1168 = vsel %vm1150, 1, 0
    %v1169 = vsel %vm1151, 1, 0
    %v1170 = vsel %vm1152, 1, 0
    %v1171 = vsel %vm1153, 1, 0
    %vm1172 = vcmp.eq.s32.totalorder %v1156, 1
    %vm1173 = vcmp.eq.s32.totalorder %v1157, 1
    %vm1174 = vcmp.eq.s32.totalorder %v1158, 1
    %vm1175 = vcmp.eq.s32.totalorder %v1159, 1
    %vm1176 = vcmp.eq.s32.totalorder %v1160, 1
    %vm1177 = vcmp.eq.s32.totalorder %v1161, 1
    %vm1178 = vcmp.eq.s32.totalorder %v1162, 1
    %vm1179 = vcmp.eq.s32.totalorder %v1163, 1
    %vm1180 = vcmp.eq.s32.totalorder %v1164, 1
    %vm1181 = vcmp.eq.s32.totalorder %v1165, 1
    %vm1182 = vcmp.eq.s32.totalorder %v1166, 1
    %vm1183 = vcmp.eq.s32.totalorder %v1167, 1
    %vm1184 = vcmp.eq.s32.totalorder %v1168, 1
    %vm1185 = vcmp.eq.s32.totalorder %v1169, 1
    %vm1186 = vcmp.eq.s32.totalorder %v1170, 1
    %vm1187 = vcmp.eq.s32.totalorder %v1171, 1
    %v1188 = vsel %vm1155, 1, 0
    %vm1189 = vcmp.eq.s32.totalorder %v1188, 1
    %vm1190 = vmand %vm1172, %vm1189
    %vm1191 = vmand %vm1173, %vm1189
    %vm1192 = vmand %vm1174, %vm1189
    %vm1193 = vmand %vm1175, %vm1189
    %vm1194 = vmand %vm1176, %vm1189
    %vm1195 = vmand %vm1177, %vm1189
    %vm1196 = vmand %vm1178, %vm1189
    %vm1197 = vmand %vm1179, %vm1189
    %vm1198 = vmand %vm1180, %vm1189
    %vm1199 = vmand %vm1181, %vm1189
    %vm1200 = vmand %vm1182, %vm1189
    %vm1201 = vmand %vm1183, %vm1189
    %vm1202 = vmand %vm1184, %vm1189
    %vm1203 = vmand %vm1185, %vm1189
    %vm1204 = vmand %vm1186, %vm1189
    %vm1205 = vmand %vm1187, %vm1189
    %v1206 = vsel %vm1190, %v1060, %v963
    %v1207 = vsel %vm1191, %v1065, %v964
    %v1208 = vsel %vm1192, %v1070, %v965
    %v1209 = vsel %vm1193, %v1075, %v966
    %v1210 = vsel %vm1194, %v1080, %v967
    %v1211 = vsel %vm1195, %v1085, %v968
    %v1212 = vsel %vm1196, %v1090, %v969
    %v1213 = vsel %vm1197, %v1095, %v970
    %v1214 = vsel %vm1198, %v1100, %v971
    %v1215 = vsel %vm1199, %v1105, %v972
    %v1216 = vsel %vm1200, %v1110, %v973
    %v1217 = vsel %vm1201, %v1115, %v974
    %v1218 = vsel %vm1202, %v1120, %v975
    %v1219 = vsel %vm1203, %v1125, %v976
    %v1220 = vsel %vm1204, %v1130, %v977
    %v1221 = vsel %vm1205, %v1135, %v978
    %s1222 = smul.u32 %s67, 2
    %s1223 = sadd.s32 %s1222, 1
    %v1224 = vlaneseq
    %v1225 = vshrl.u32 %v1224, 7
    %v1226 = vsub.s32 3, %v1225
    %v1227 = vrot.slane %v214, %v1226
    %vm1228 = vcmp.eq.s32.totalorder %v38, %v1227
    %vm1229 = vcmp.eq.s32.totalorder %v237, %v1227
    %vm1230 = vcmp.eq.s32.totalorder %v238, %v1227
    %vm1231 = vcmp.eq.s32.totalorder %v239, %v1227
    %v1232 = vsel %vm1228, 1.0, 0.0
    %v1233 = vsel %vm1229, 1.0, 0.0
    %v1234 = vsel %vm1230, 1.0, 0.0
    %v1235 = vsel %vm1231, 1.0, 0.0
    %1236 = vmatprep.subr.mxu0 0.0
    %1237 = vmatpush1.msra.mxu0 %v1232
    %1238 = vmatprep.subr.mxu0 0.0
    %1239 = vmatpush1.msra.mxu0 %v1233
    %1240 = vmatprep.subr.mxu0 0.0
    %1241 = vmatpush1.msra.mxu0 %v1234
    %1242 = vmatprep.subr.mxu0 0.0
    %1243 = vmatpush1.msra.mxu0 %v1235
    %1244 = vmatprep.subr.mxu0 0.0
    %1245 = vmatpush1.msra.mxu0 0.0
    %1246 = vmatprep.subr.mxu0 0.0
    %1247 = vmatpush1.msra.mxu0 0.0
    %1248 = vmatprep.subr.mxu0 0.0
    %1249 = vmatpush1.msra.mxu0 0.0
    %1250 = vmatprep.subr.mxu0 0.0
    %1251 = vmatpush1.msra.mxu0 0.0
    %1252 = vmatprep.subr.mxu0 0.0
    %1253 = vmatpush1.msra.mxu0 0.0
    %1254 = vmatprep.subr.mxu0 0.0
    %1255 = vmatpush1.msra.mxu0 0.0
    %1256 = vmatprep.subr.mxu0 0.0
    %1257 = vmatpush1.msra.mxu0 0.0
    %1258 = vmatprep.subr.mxu0 0.0
    %1259 = vmatpush1.msra.mxu0 0.0
    %1260 = vmatprep.subr.mxu0 0.0
    %1261 = vmatpush1.msra.mxu0 0.0
    %1262 = vmatprep.subr.mxu0 0.0
    %1263 = vmatpush1.msra.mxu0 0.0
    %1264 = vmatprep.subr.mxu0 0.0
    %1265 = vmatpush1.msra.mxu0 0.0
    %1266 = vmatprep.subr.mxu0 0.0
    %1267 = vmatpush1.msra.mxu0 0.0
    %1268 = vmatprep.subr.mxu0 0.0
    %1269 = vmatpush1.msra.mxu0 0.0
    %1270 = vmatprep.subr.mxu0 0.0
    %1271 = vmatpush1.msra.mxu0 0.0
    %1272 = vmatprep.subr.mxu0 0.0
    %1273 = vmatpush1.msra.mxu0 0.0
    %1274 = vmatprep.subr.mxu0 0.0
    %1275 = vmatpush1.msra.mxu0 0.0
    %1276 = vmatprep.subr.mxu0 0.0
    %1277 = vmatpush1.msra.mxu0 0.0
    %1278 = vmatprep.subr.mxu0 0.0
    %1279 = vmatpush1.msra.mxu0 0.0
    %1280 = vmatprep.subr.mxu0 0.0
    %1281 = vmatpush1.msra.mxu0 0.0
    %1282 = vmatprep.subr.mxu0 0.0
    %1283 = vmatpush1.msra.mxu0 0.0
    %1284 = vmatprep.subr.mxu0 0.0
    %1285 = vmatpush1.msra.mxu0 0.0
    %1286 = vmatprep.subr.mxu0 0.0
    %1287 = vmatpush1.msra.mxu0 0.0
    %1288 = vmatprep.subr.mxu0 0.0
    %1289 = vmatpush1.msra.mxu0 0.0
    %1290 = vmatprep.subr.mxu0 0.0
    %1291 = vmatpush1.msra.mxu0 0.0
    %1292 = vmatprep.subr.mxu0 0.0
    %1293 = vmatpush1.msra.mxu0 0.0
    %1294 = vmatprep.subr.mxu0 0.0
    %1295 = vmatpush1.msra.mxu0 0.0
    %1296 = vmatprep.subr.mxu0 0.0
    %1297 = vmatpush1.msra.mxu0 0.0
    %1298 = vmatprep.subr.mxu0 0.0
    %1299 = vmatpush1.msra.mxu0 0.0
    %1300 = vmatprep.mubr.f32.mxu0 0.0
    %1301 = vmatmul.mubr.f32.gmra.mrb[0].mxu0 %v460
    %v1302 = vpop.f32.mrb[0].mxu0
    %v1303 = vadd.f32 0.0, %v1302
    %v1304 = vpop.f32.mrb[0].mxu0
    %1305 = vmatprep.mubr.f32.mxu0 0.0
    %1306 = vmatmul.mubr.f32.gmra.mrb[0].mxu0 %v463
    %v1307 = vpop.f32.mrb[0].mxu0
    %v1308 = vadd.f32 0.0, %v1307
    %v1309 = vpop.f32.mrb[0].mxu0
    %1310 = vmatprep.mubr.f32.mxu0 0.0
    %1311 = vmatmul.mubr.f32.gmra.mrb[0].mxu0 %v466
    %v1312 = vpop.f32.mrb[0].mxu0
    %v1313 = vadd.f32 0.0, %v1312
    %v1314 = vpop.f32.mrb[0].mxu0
    %1315 = vmatprep.mubr.f32.mxu0 0.0
    %1316 = vmatmul.mubr.f32.gmra.mrb[0].mxu0 %v469
    %v1317 = vpop.f32.mrb[0].mxu0
    %v1318 = vadd.f32 0.0, %v1317
    %v1319 = vpop.f32.mrb[0].mxu0
    %1320 = vmatprep.mubr.f32.mxu0 0.0
    %1321 = vmatmul.mubr.f32.gmra.mrb[0].mxu0 %v472
    %v1322 = vpop.f32.mrb[0].mxu0
    %v1323 = vadd.f32 0.0, %v1322
    %v1324 = vpop.f32.mrb[0].mxu0
    %1325 = vmatprep.mubr.f32.mxu0 0.0
    %1326 = vmatmul.mubr.f32.gmra.mrb[0].mxu0 %v475
    %v1327 = vpop.f32.mrb[0].mxu0
    %v1328 = vadd.f32 0.0, %v1327
    %v1329 = vpop.f32.mrb[0].mxu0
    %1330 = vmatprep.mubr.f32.mxu0 0.0
    %1331 = vmatmul.mubr.f32.gmra.mrb[0].mxu0 %v478
    %v1332 = vpop.f32.mrb[0].mxu0
    %v1333 = vadd.f32 0.0, %v1332
    %v1334 = vpop.f32.mrb[0].mxu0
    %1335 = vmatprep.mubr.f32.mxu0 0.0
    %1336 = vmatmul.mubr.f32.gmra.mrb[0].mxu0 %v481
    %v1337 = vpop.f32.mrb[0].mxu0
    %v1338 = vadd.f32 0.0, %v1337
    %v1339 = vpop.f32.mrb[0].mxu0
    %1340 = vmatprep.mubr.f32.mxu0 0.0
    %1341 = vmatmul.mubr.f32.gmra.mrb[0].mxu0 %v484
    %v1342 = vpop.f32.mrb[0].mxu0
    %v1343 = vadd.f32 0.0, %v1342
    %v1344 = vpop.f32.mrb[0].mxu0
    %1345 = vmatprep.mubr.f32.mxu0 0.0
    %1346 = vmatmul.mubr.f32.gmra.mrb[0].mxu0 %v487
    %v1347 = vpop.f32.mrb[0].mxu0
    %v1348 = vadd.f32 0.0, %v1347
    %v1349 = vpop.f32.mrb[0].mxu0
    %1350 = vmatprep.mubr.f32.mxu0 0.0
    %1351 = vmatmul.mubr.f32.gmra.mrb[0].mxu0 %v490
    %v1352 = vpop.f32.mrb[0].mxu0
    %v1353 = vadd.f32 0.0, %v1352
    %v1354 = vpop.f32.mrb[0].mxu0
    %1355 = vmatprep.mubr.f32.mxu0 0.0
    %1356 = vmatmul.mubr.f32.gmra.mrb[0].mxu0 %v493
    %v1357 = vpop.f32.mrb[0].mxu0
    %v1358 = vadd.f32 0.0, %v1357
    %v1359 = vpop.f32.mrb[0].mxu0
    %1360 = vmatprep.mubr.f32.mxu0 0.0
    %1361 = vmatmul.mubr.f32.gmra.mrb[0].mxu0 %v496
    %v1362 = vpop.f32.mrb[0].mxu0
    %v1363 = vadd.f32 0.0, %v1362
    %v1364 = vpop.f32.mrb[0].mxu0
    %1365 = vmatprep.mubr.f32.mxu0 0.0
    %1366 = vmatmul.mubr.f32.gmra.mrb[0].mxu0 %v499
    %v1367 = vpop.f32.mrb[0].mxu0
    %v1368 = vadd.f32 0.0, %v1367
    %v1369 = vpop.f32.mrb[0].mxu0
    %1370 = vmatprep.mubr.f32.mxu0 0.0
    %1371 = vmatmul.mubr.f32.gmra.mrb[0].mxu0 %v502
    %v1372 = vpop.f32.mrb[0].mxu0
    %v1373 = vadd.f32 0.0, %v1372
    %v1374 = vpop.f32.mrb[0].mxu0
    %1375 = vmatprep.mubr.f32.mxu0 0.0
    %1376 = vmatmul.mubr.f32.gmra.mrb[0].mxu0 %v505
    %v1377 = vpop.f32.mrb[0].mxu0
    %v1378 = vadd.f32 0.0, %v1377
    %v1379 = vpop.f32.mrb[0].mxu0
    %1380 = vdwg.mxu0
    %vm1381 = vcmp.eq.s32.totalorder %v428, 3
    %vm1382 = vcmp.eq.s32.totalorder %v429, 3
    %vm1383 = vcmp.eq.s32.totalorder %v430, 3
    %vm1384 = vcmp.eq.s32.totalorder %v431, 3
    %vm1385 = vcmp.eq.s32.totalorder %v432, 3
    %vm1386 = vcmp.eq.s32.totalorder %v433, 3
    %vm1387 = vcmp.eq.s32.totalorder %v434, 3
    %vm1388 = vcmp.eq.s32.totalorder %v435, 3
    %vm1389 = vcmp.eq.s32.totalorder %v436, 3
    %vm1390 = vcmp.eq.s32.totalorder %v437, 3
    %vm1391 = vcmp.eq.s32.totalorder %v438, 3
    %vm1392 = vcmp.eq.s32.totalorder %v439, 3
    %vm1393 = vcmp.eq.s32.totalorder %v440, 3
    %vm1394 = vcmp.eq.s32.totalorder %v441, 3
    %vm1395 = vcmp.eq.s32.totalorder %v442, 3
    %vm1396 = vcmp.eq.s32.totalorder %v443, 3
    %v1397 = vstv %s1223
    %vm1398 = vcmp.lt.s32.totalorder %v119, %v1397
    %v1399 = vsel %vm1381, 1, 0
    %v1400 = vsel %vm1382, 1, 0
    %v1401 = vsel %vm1383, 1, 0
    %v1402 = vsel %vm1384, 1, 0
    %v1403 = vsel %vm1385, 1, 0
    %v1404 = vsel %vm1386, 1, 0
    %v1405 = vsel %vm1387, 1, 0
    %v1406 = vsel %vm1388, 1, 0
    %v1407 = vsel %vm1389, 1, 0
    %v1408 = vsel %vm1390, 1, 0
    %v1409 = vsel %vm1391, 1, 0
    %v1410 = vsel %vm1392, 1, 0
    %v1411 = vsel %vm1393, 1, 0
    %v1412 = vsel %vm1394, 1, 0
    %v1413 = vsel %vm1395, 1, 0
    %v1414 = vsel %vm1396, 1, 0
    %vm1415 = vcmp.eq.s32.totalorder %v1399, 1
    %vm1416 = vcmp.eq.s32.totalorder %v1400, 1
    %vm1417 = vcmp.eq.s32.totalorder %v1401, 1
    %vm1418 = vcmp.eq.s32.totalorder %v1402, 1
    %vm1419 = vcmp.eq.s32.totalorder %v1403, 1
    %vm1420 = vcmp.eq.s32.totalorder %v1404, 1
    %vm1421 = vcmp.eq.s32.totalorder %v1405, 1
    %vm1422 = vcmp.eq.s32.totalorder %v1406, 1
    %vm1423 = vcmp.eq.s32.totalorder %v1407, 1
    %vm1424 = vcmp.eq.s32.totalorder %v1408, 1
    %vm1425 = vcmp.eq.s32.totalorder %v1409, 1
    %vm1426 = vcmp.eq.s32.totalorder %v1410, 1
    %vm1427 = vcmp.eq.s32.totalorder %v1411, 1
    %vm1428 = vcmp.eq.s32.totalorder %v1412, 1
    %vm1429 = vcmp.eq.s32.totalorder %v1413, 1
    %vm1430 = vcmp.eq.s32.totalorder %v1414, 1
    %v1431 = vsel %vm1398, 1, 0
    %vm1432 = vcmp.eq.s32.totalorder %v1431, 1
    %vm1433 = vmand %vm1415, %vm1432
    %vm1434 = vmand %vm1416, %vm1432
    %vm1435 = vmand %vm1417, %vm1432
    %vm1436 = vmand %vm1418, %vm1432
    %vm1437 = vmand %vm1419, %vm1432
    %vm1438 = vmand %vm1420, %vm1432
    %vm1439 = vmand %vm1421, %vm1432
    %vm1440 = vmand %vm1422, %vm1432
    %vm1441 = vmand %vm1423, %vm1432
    %vm1442 = vmand %vm1424, %vm1432
    %vm1443 = vmand %vm1425, %vm1432
    %vm1444 = vmand %vm1426, %vm1432
    %vm1445 = vmand %vm1427, %vm1432
    %vm1446 = vmand %vm1428, %vm1432
    %vm1447 = vmand %vm1429, %vm1432
    %vm1448 = vmand %vm1430, %vm1432
    %v1449 = vsel %vm1433, %v1303, %v1206
    %v1450 = vsel %vm1434, %v1308, %v1207
    %v1451 = vsel %vm1435, %v1313, %v1208
    %v1452 = vsel %vm1436, %v1318, %v1209
    %v1453 = vsel %vm1437, %v1323, %v1210
    %v1454 = vsel %vm1438, %v1328, %v1211
    %v1455 = vsel %vm1439, %v1333, %v1212
    %v1456 = vsel %vm1440, %v1338, %v1213
    %v1457 = vsel %vm1441, %v1343, %v1214
    %v1458 = vsel %vm1442, %v1348, %v1215
    %v1459 = vsel %vm1443, %v1353, %v1216
    %v1460 = vsel %vm1444, %v1358, %v1217
    %v1461 = vsel %vm1445, %v1363, %v1218
    %v1462 = vsel %vm1446, %v1368, %v1219
    %v1463 = vsel %vm1447, %v1373, %v1220
    %v1464 = vsel %vm1448, %v1378, %v1221
    %s1465 = smul.u32 %s75, 2
    %s1466 = sadd.s32 %s1465, 1
    %v1467 = vlaneseq
    %v1468 = vshrl.u32 %v1467, 7
    %v1469 = vsub.s32 4, %v1468
    %v1470 = vrot.slane %v214, %v1469
    %vm1471 = vcmp.eq.s32.totalorder %v38, %v1470
    %vm1472 = vcmp.eq.s32.totalorder %v237, %v1470
    %vm1473 = vcmp.eq.s32.totalorder %v238, %v1470
    %vm1474 = vcmp.eq.s32.totalorder %v239, %v1470
    %v1475 = vsel %vm1471, 1.0, 0.0
    %v1476 = vsel %vm1472, 1.0, 0.0
    %v1477 = vsel %vm1473, 1.0, 0.0
    %v1478 = vsel %vm1474, 1.0, 0.0
    %1479 = vmatprep.subr.mxu0 0.0
    %1480 = vmatpush1.msra.mxu0 %v1475
    %1481 = vmatprep.subr.mxu0 0.0
    %1482 = vmatpush1.msra.mxu0 %v1476
    %1483 = vmatprep.subr.mxu0 0.0
    %1484 = vmatpush1.msra.mxu0 %v1477
    %1485 = vmatprep.subr.mxu0 0.0
    %1486 = vmatpush1.msra.mxu0 %v1478
    %1487 = vmatprep.subr.mxu0 0.0
    %1488 = vmatpush1.msra.mxu0 0.0
    %1489 = vmatprep.subr.mxu0 0.0
    %1490 = vmatpush1.msra.mxu0 0.0
    %1491 = vmatprep.subr.mxu0 0.0
    %1492 = vmatpush1.msra.mxu0 0.0
    %1493 = vmatprep.subr.mxu0 0.0
    %1494 = vmatpush1.msra.mxu0 0.0
    %1495 = vmatprep.subr.mxu0 0.0
    %1496 = vmatpush1.msra.mxu0 0.0
    %1497 = vmatprep.subr.mxu0 0.0
    %1498 = vmatpush1.msra.mxu0 0.0
    %1499 = vmatprep.subr.mxu0 0.0
    %1500 = vmatpush1.msra.mxu0 0.0
    %1501 = vmatprep.subr.mxu0 0.0
    %1502 = vmatpush1.msra.mxu0 0.0
    %1503 = vmatprep.subr.mxu0 0.0
    %1504 = vmatpush1.msra.mxu0 0.0
    %1505 = vmatprep.subr.mxu0 0.0
    %1506 = vmatpush1.msra.mxu0 0.0
    %1507 = vmatprep.subr.mxu0 0.0
    %1508 = vmatpush1.msra.mxu0 0.0
    %1509 = vmatprep.subr.mxu0 0.0
    %1510 = vmatpush1.msra.mxu0 0.0
    %1511 = vmatprep.subr.mxu0 0.0
    %1512 = vmatpush1.msra.mxu0 0.0
    %1513 = vmatprep.subr.mxu0 0.0
    %1514 = vmatpush1.msra.mxu0 0.0
    %1515 = vmatprep.subr.mxu0 0.0
    %1516 = vmatpush1.msra.mxu0 0.0
    %1517 = vmatprep.subr.mxu0 0.0
    %1518 = vmatpush1.msra.mxu0 0.0
    %1519 = vmatprep.subr.mxu0 0.0
    %1520 = vmatpush1.msra.mxu0 0.0
    %1521 = vmatprep.subr.mxu0 0.0
    %1522 = vmatpush1.msra.mxu0 0.0
    %1523 = vmatprep.subr.mxu0 0.0
    %1524 = vmatpush1.msra.mxu0 0.0
    %1525 = vmatprep.subr.mxu0 0.0
    %1526 = vmatpush1.msra.mxu0 0.0
    %1527 = vmatprep.subr.mxu0 0.0
    %1528 = vmatpush1.msra.mxu0 0.0
    %1529 = vmatprep.subr.mxu0 0.0
    %1530 = vmatpush1.msra.mxu0 0.0
    %1531 = vmatprep.subr.mxu0 0.0
    %1532 = vmatpush1.msra.mxu0 0.0
    %1533 = vmatprep.subr.mxu0 0.0
    %1534 = vmatpush1.msra.mxu0 0.0
    %1535 = vmatprep.subr.mxu0 0.0
    %1536 = vmatpush1.msra.mxu0 0.0
    %1537 = vmatprep.subr.mxu0 0.0
    %1538 = vmatpush1.msra.mxu0 0.0
    %1539 = vmatprep.subr.mxu0 0.0
    %1540 = vmatpush1.msra.mxu0 0.0
    %1541 = vmatprep.subr.mxu0 0.0
    %1542 = vmatpush1.msra.mxu0 0.0
    %1543 = vmatprep.mubr.f32.mxu0 0.0
    %1544 = vmatmul.mubr.f32.gmra.mrb[0].mxu0 %v460
    %v1545 = vpop.f32.mrb[0].mxu0
    %v1546 = vadd.f32 0.0, %v1545
    %v1547 = vpop.f32.mrb[0].mxu0
    %1548 = vmatprep.mubr.f32.mxu0 0.0
    %1549 = vmatmul.mubr.f32.gmra.mrb[0].mxu0 %v463
    %v1550 = vpop.f32.mrb[0].mxu0
    %v1551 = vadd.f32 0.0, %v1550
    %v1552 = vpop.f32.mrb[0].mxu0
    %1553 = vmatprep.mubr.f32.mxu0 0.0
    %1554 = vmatmul.mubr.f32.gmra.mrb[0].mxu0 %v466
    %v1555 = vpop.f32.mrb[0].mxu0
    %v1556 = vadd.f32 0.0, %v1555
    %v1557 = vpop.f32.mrb[0].mxu0
    %1558 = vmatprep.mubr.f32.mxu0 0.0
    %1559 = vmatmul.mubr.f32.gmra.mrb[0].mxu0 %v469
    %v1560 = vpop.f32.mrb[0].mxu0
    %v1561 = vadd.f32 0.0, %v1560
    %v1562 = vpop.f32.mrb[0].mxu0
    %1563 = vmatprep.mubr.f32.mxu0 0.0
    %1564 = vmatmul.mubr.f32.gmra.mrb[0].mxu0 %v472
    %v1565 = vpop.f32.mrb[0].mxu0
    %v1566 = vadd.f32 0.0, %v1565
    %v1567 = vpop.f32.mrb[0].mxu0
    %1568 = vmatprep.mubr.f32.mxu0 0.0
    %1569 = vmatmul.mubr.f32.gmra.mrb[0].mxu0 %v475
    %v1570 = vpop.f32.mrb[0].mxu0
    %v1571 = vadd.f32 0.0, %v1570
    %v1572 = vpop.f32.mrb[0].mxu0
    %1573 = vmatprep.mubr.f32.mxu0 0.0
    %1574 = vmatmul.mubr.f32.gmra.mrb[0].mxu0 %v478
    %v1575 = vpop.f32.mrb[0].mxu0
    %v1576 = vadd.f32 0.0, %v1575
    %v1577 = vpop.f32.mrb[0].mxu0
    %1578 = vmatprep.mubr.f32.mxu0 0.0
    %1579 = vmatmul.mubr.f32.gmra.mrb[0].mxu0 %v481
    %v1580 = vpop.f32.mrb[0].mxu0
    %v1581 = vadd.f32 0.0, %v1580
    %v1582 = vpop.f32.mrb[0].mxu0
    %1583 = vmatprep.mubr.f32.mxu0 0.0
    %1584 = vmatmul.mubr.f32.gmra.mrb[0].mxu0 %v484
    %v1585 = vpop.f32.mrb[0].mxu0
    %v1586 = vadd.f32 0.0, %v1585
    %v1587 = vpop.f32.mrb[0].mxu0
    %1588 = vmatprep.mubr.f32.mxu0 0.0
    %1589 = vmatmul.mubr.f32.gmra.mrb[0].mxu0 %v487
    %v1590 = vpop.f32.mrb[0].mxu0
    %v1591 = vadd.f32 0.0, %v1590
    %v1592 = vpop.f32.mrb[0].mxu0
    %1593 = vmatprep.mubr.f32.mxu0 0.0
    %1594 = vmatmul.mubr.f32.gmra.mrb[0].mxu0 %v490
    %v1595 = vpop.f32.mrb[0].mxu0
    %v1596 = vadd.f32 0.0, %v1595
    %v1597 = vpop.f32.mrb[0].mxu0
    %1598 = vmatprep.mubr.f32.mxu0 0.0
    %1599 = vmatmul.mubr.f32.gmra.mrb[0].mxu0 %v493
    %v1600 = vpop.f32.mrb[0].mxu0
    %v1601 = vadd.f32 0.0, %v1600
    %v1602 = vpop.f32.mrb[0].mxu0
    %1603 = vmatprep.mubr.f32.mxu0 0.0
    %1604 = vmatmul.mubr.f32.gmra.mrb[0].mxu0 %v496
    %v1605 = vpop.f32.mrb[0].mxu0
    %v1606 = vadd.f32 0.0, %v1605
    %v1607 = vpop.f32.mrb[0].mxu0
    %1608 = vmatprep.mubr.f32.mxu0 0.0
    %1609 = vmatmul.mubr.f32.gmra.mrb[0].mxu0 %v499
    %v1610 = vpop.f32.mrb[0].mxu0
    %v1611 = vadd.f32 0.0, %v1610
    %v1612 = vpop.f32.mrb[0].mxu0
    %1613 = vmatprep.mubr.f32.mxu0 0.0
    %1614 = vmatmul.mubr.f32.gmra.mrb[0].mxu0 %v502
    %v1615 = vpop.f32.mrb[0].mxu0
    %v1616 = vadd.f32 0.0, %v1615
    %v1617 = vpop.f32.mrb[0].mxu0
    %1618 = vmatprep.mubr.f32.mxu0 0.0
    %1619 = vmatmul.mubr.f32.gmra.mrb[0].mxu0 %v505
    %v1620 = vpop.f32.mrb[0].mxu0
    %v1621 = vadd.f32 0.0, %v1620
    %v1622 = vpop.f32.mrb[0].mxu0
    %1623 = vdwg.mxu0
    %vm1624 = vcmp.eq.s32.totalorder %v428, 4
    %vm1625 = vcmp.eq.s32.totalorder %v429, 4
    %vm1626 = vcmp.eq.s32.totalorder %v430, 4
    %vm1627 = vcmp.eq.s32.totalorder %v431, 4
    %vm1628 = vcmp.eq.s32.totalorder %v432, 4
    %vm1629 = vcmp.eq.s32.totalorder %v433, 4
    %vm1630 = vcmp.eq.s32.totalorder %v434, 4
    %vm1631 = vcmp.eq.s32.totalorder %v435, 4
    %vm1632 = vcmp.eq.s32.totalorder %v436, 4
    %vm1633 = vcmp.eq.s32.totalorder %v437, 4
    %vm1634 = vcmp.eq.s32.totalorder %v438, 4
    %vm1635 = vcmp.eq.s32.totalorder %v439, 4
    %vm1636 = vcmp.eq.s32.totalorder %v440, 4
    %vm1637 = vcmp.eq.s32.totalorder %v441, 4
    %vm1638 = vcmp.eq.s32.totalorder %v442, 4
    %vm1639 = vcmp.eq.s32.totalorder %v443, 4
    %v1640 = vstv %s1466
    %vm1641 = vcmp.lt.s32.totalorder %v119, %v1640
    %v1642 = vsel %vm1624, 1, 0
    %v1643 = vsel %vm1625, 1, 0
    %v1644 = vsel %vm1626, 1, 0
    %v1645 = vsel %vm1627, 1, 0
    %v1646 = vsel %vm1628, 1, 0
    %v1647 = vsel %vm1629, 1, 0
    %v1648 = vsel %vm1630, 1, 0
    %v1649 = vsel %vm1631, 1, 0
    %v1650 = vsel %vm1632, 1, 0
    %v1651 = vsel %vm1633, 1, 0
    %v1652 = vsel %vm1634, 1, 0
    %v1653 = vsel %vm1635, 1, 0
    %v1654 = vsel %vm1636, 1, 0
    %v1655 = vsel %vm1637, 1, 0
    %v1656 = vsel %vm1638, 1, 0
    %v1657 = vsel %vm1639, 1, 0
    %vm1658 = vcmp.eq.s32.totalorder %v1642, 1
    %vm1659 = vcmp.eq.s32.totalorder %v1643, 1
    %vm1660 = vcmp.eq.s32.totalorder %v1644, 1
    %vm1661 = vcmp.eq.s32.totalorder %v1645, 1
    %vm1662 = vcmp.eq.s32.totalorder %v1646, 1
    %vm1663 = vcmp.eq.s32.totalorder %v1647, 1
    %vm1664 = vcmp.eq.s32.totalorder %v1648, 1
    %vm1665 = vcmp.eq.s32.totalorder %v1649, 1
    %vm1666 = vcmp.eq.s32.totalorder %v1650, 1
    %vm1667 = vcmp.eq.s32.totalorder %v1651, 1
    %vm1668 = vcmp.eq.s32.totalorder %v1652, 1
    %vm1669 = vcmp.eq.s32.totalorder %v1653, 1
    %vm1670 = vcmp.eq.s32.totalorder %v1654, 1
    %vm1671 = vcmp.eq.s32.totalorder %v1655, 1
    %vm1672 = vcmp.eq.s32.totalorder %v1656, 1
    %vm1673 = vcmp.eq.s32.totalorder %v1657, 1
    %v1674 = vsel %vm1641, 1, 0
    %vm1675 = vcmp.eq.s32.totalorder %v1674, 1
    %vm1676 = vmand %vm1658, %vm1675
    %vm1677 = vmand %vm1659, %vm1675
    %vm1678 = vmand %vm1660, %vm1675
    %vm1679 = vmand %vm1661, %vm1675
    %vm1680 = vmand %vm1662, %vm1675
    %vm1681 = vmand %vm1663, %vm1675
    %vm1682 = vmand %vm1664, %vm1675
    %vm1683 = vmand %vm1665, %vm1675
    %vm1684 = vmand %vm1666, %vm1675
    %vm1685 = vmand %vm1667, %vm1675
    %vm1686 = vmand %vm1668, %vm1675
    %vm1687 = vmand %vm1669, %vm1675
    %vm1688 = vmand %vm1670, %vm1675
    %vm1689 = vmand %vm1671, %vm1675
    %vm1690 = vmand %vm1672, %vm1675
    %vm1691 = vmand %vm1673, %vm1675
    %v1692 = vsel %vm1676, %v1546, %v1449
    %v1693 = vsel %vm1677, %v1551, %v1450
    %v1694 = vsel %vm1678, %v1556, %v1451
    %v1695 = vsel %vm1679, %v1561, %v1452
    %v1696 = vsel %vm1680, %v1566, %v1453
    %v1697 = vsel %vm1681, %v1571, %v1454
    %v1698 = vsel %vm1682, %v1576, %v1455
    %v1699 = vsel %vm1683, %v1581, %v1456
    %v1700 = vsel %vm1684, %v1586, %v1457
    %v1701 = vsel %vm1685, %v1591, %v1458
    %v1702 = vsel %vm1686, %v1596, %v1459
    %v1703 = vsel %vm1687, %v1601, %v1460
    %v1704 = vsel %vm1688, %v1606, %v1461
    %v1705 = vsel %vm1689, %v1611, %v1462
    %v1706 = vsel %vm1690, %v1616, %v1463
    %v1707 = vsel %vm1691, %v1621, %v1464
    %s1708 = smul.u32 %s83, 2
    %s1709 = sadd.s32 %s1708, 1
    %v1710 = vlaneseq
    %v1711 = vshrl.u32 %v1710, 7
    %v1712 = vsub.s32 5, %v1711
    %v1713 = vrot.slane %v214, %v1712
    %vm1714 = vcmp.eq.s32.totalorder %v38, %v1713
    %vm1715 = vcmp.eq.s32.totalorder %v237, %v1713
    %vm1716 = vcmp.eq.s32.totalorder %v238, %v1713
    %vm1717 = vcmp.eq.s32.totalorder %v239, %v1713
    %v1718 = vsel %vm1714, 1.0, 0.0
    %v1719 = vsel %vm1715, 1.0, 0.0
    %v1720 = vsel %vm1716, 1.0, 0.0
    %v1721 = vsel %vm1717, 1.0, 0.0
    %1722 = vmatprep.subr.mxu0 0.0
    %1723 = vmatpush1.msra.mxu0 %v1718
    %1724 = vmatprep.subr.mxu0 0.0
    %1725 = vmatpush1.msra.mxu0 %v1719
    %1726 = vmatprep.subr.mxu0 0.0
    %1727 = vmatpush1.msra.mxu0 %v1720
    %1728 = vmatprep.subr.mxu0 0.0
    %1729 = vmatpush1.msra.mxu0 %v1721
    %1730 = vmatprep.subr.mxu0 0.0
    %1731 = vmatpush1.msra.mxu0 0.0
    %1732 = vmatprep.subr.mxu0 0.0
    %1733 = vmatpush1.msra.mxu0 0.0
    %1734 = vmatprep.subr.mxu0 0.0
    %1735 = vmatpush1.msra.mxu0 0.0
    %1736 = vmatprep.subr.mxu0 0.0
    %1737 = vmatpush1.msra.mxu0 0.0
    %1738 = vmatprep.subr.mxu0 0.0
    %1739 = vmatpush1.msra.mxu0 0.0
    %1740 = vmatprep.subr.mxu0 0.0
    %1741 = vmatpush1.msra.mxu0 0.0
    %1742 = vmatprep.subr.mxu0 0.0
    %1743 = vmatpush1.msra.mxu0 0.0
    %1744 = vmatprep.subr.mxu0 0.0
    %1745 = vmatpush1.msra.mxu0 0.0
    %1746 = vmatprep.subr.mxu0 0.0
    %1747 = vmatpush1.msra.mxu0 0.0
    %1748 = vmatprep.subr.mxu0 0.0
    %1749 = vmatpush1.msra.mxu0 0.0
    %1750 = vmatprep.subr.mxu0 0.0
    %1751 = vmatpush1.msra.mxu0 0.0
    %1752 = vmatprep.subr.mxu0 0.0
    %1753 = vmatpush1.msra.mxu0 0.0
    %1754 = vmatprep.subr.mxu0 0.0
    %1755 = vmatpush1.msra.mxu0 0.0
    %1756 = vmatprep.subr.mxu0 0.0
    %1757 = vmatpush1.msra.mxu0 0.0
    %1758 = vmatprep.subr.mxu0 0.0
    %1759 = vmatpush1.msra.mxu0 0.0
    %1760 = vmatprep.subr.mxu0 0.0
    %1761 = vmatpush1.msra.mxu0 0.0
    %1762 = vmatprep.subr.mxu0 0.0
    %1763 = vmatpush1.msra.mxu0 0.0
    %1764 = vmatprep.subr.mxu0 0.0
    %1765 = vmatpush1.msra.mxu0 0.0
    %1766 = vmatprep.subr.mxu0 0.0
    %1767 = vmatpush1.msra.mxu0 0.0
    %1768 = vmatprep.subr.mxu0 0.0
    %1769 = vmatpush1.msra.mxu0 0.0
    %1770 = vmatprep.subr.mxu0 0.0
    %1771 = vmatpush1.msra.mxu0 0.0
    %1772 = vmatprep.subr.mxu0 0.0
    %1773 = vmatpush1.msra.mxu0 0.0
    %1774 = vmatprep.subr.mxu0 0.0
    %1775 = vmatpush1.msra.mxu0 0.0
    %1776 = vmatprep.subr.mxu0 0.0
    %1777 = vmatpush1.msra.mxu0 0.0
    %1778 = vmatprep.subr.mxu0 0.0
    %1779 = vmatpush1.msra.mxu0 0.0
    %1780 = vmatprep.subr.mxu0 0.0
    %1781 = vmatpush1.msra.mxu0 0.0
    %1782 = vmatprep.subr.mxu0 0.0
    %1783 = vmatpush1.msra.mxu0 0.0
    %1784 = vmatprep.subr.mxu0 0.0
    %1785 = vmatpush1.msra.mxu0 0.0
    %1786 = vmatprep.mubr.f32.mxu0 0.0
    %1787 = vmatmul.mubr.f32.gmra.mrb[0].mxu0 %v460
    %v1788 = vpop.f32.mrb[0].mxu0
    %v1789 = vadd.f32 0.0, %v1788
    %v1790 = vpop.f32.mrb[0].mxu0
    %1791 = vmatprep.mubr.f32.mxu0 0.0
    %1792 = vmatmul.mubr.f32.gmra.mrb[0].mxu0 %v463
    %v1793 = vpop.f32.mrb[0].mxu0
    %v1794 = vadd.f32 0.0, %v1793
    %v1795 = vpop.f32.mrb[0].mxu0
    %1796 = vmatprep.mubr.f32.mxu0 0.0
    %1797 = vmatmul.mubr.f32.gmra.mrb[0].mxu0 %v466
    %v1798 = vpop.f32.mrb[0].mxu0
    %v1799 = vadd.f32 0.0, %v1798
    %v1800 = vpop.f32.mrb[0].mxu0
    %1801 = vmatprep.mubr.f32.mxu0 0.0
    %1802 = vmatmul.mubr.f32.gmra.mrb[0].mxu0 %v469
    %v1803 = vpop.f32.mrb[0].mxu0
    %v1804 = vadd.f32 0.0, %v1803
    %v1805 = vpop.f32.mrb[0].mxu0
    %1806 = vmatprep.mubr.f32.mxu0 0.0
    %1807 = vmatmul.mubr.f32.gmra.mrb[0].mxu0 %v472
    %v1808 = vpop.f32.mrb[0].mxu0
    %v1809 = vadd.f32 0.0, %v1808
    %v1810 = vpop.f32.mrb[0].mxu0
    %1811 = vmatprep.mubr.f32.mxu0 0.0
    %1812 = vmatmul.mubr.f32.gmra.mrb[0].mxu0 %v475
    %v1813 = vpop.f32.mrb[0].mxu0
    %v1814 = vadd.f32 0.0, %v1813
    %v1815 = vpop.f32.mrb[0].mxu0
    %1816 = vmatprep.mubr.f32.mxu0 0.0
    %1817 = vmatmul.mubr.f32.gmra.mrb[0].mxu0 %v478
    %v1818 = vpop.f32.mrb[0].mxu0
    %v1819 = vadd.f32 0.0, %v1818
    %v1820 = vpop.f32.mrb[0].mxu0
    %1821 = vmatprep.mubr.f32.mxu0 0.0
    %1822 = vmatmul.mubr.f32.gmra.mrb[0].mxu0 %v481
    %v1823 = vpop.f32.mrb[0].mxu0
    %v1824 = vadd.f32 0.0, %v1823
    %v1825 = vpop.f32.mrb[0].mxu0
    %1826 = vmatprep.mubr.f32.mxu0 0.0
    %1827 = vmatmul.mubr.f32.gmra.mrb[0].mxu0 %v484
    %v1828 = vpop.f32.mrb[0].mxu0
    %v1829 = vadd.f32 0.0, %v1828
    %v1830 = vpop.f32.mrb[0].mxu0
    %1831 = vmatprep.mubr.f32.mxu0 0.0
    %1832 = vmatmul.mubr.f32.gmra.mrb[0].mxu0 %v487
    %v1833 = vpop.f32.mrb[0].mxu0
    %v1834 = vadd.f32 0.0, %v1833
    %v1835 = vpop.f32.mrb[0].mxu0
    %1836 = vmatprep.mubr.f32.mxu0 0.0
    %1837 = vmatmul.mubr.f32.gmra.mrb[0].mxu0 %v490
    %v1838 = vpop.f32.mrb[0].mxu0
    %v1839 = vadd.f32 0.0, %v1838
    %v1840 = vpop.f32.mrb[0].mxu0
    %1841 = vmatprep.mubr.f32.mxu0 0.0
    %1842 = vmatmul.mubr.f32.gmra.mrb[0].mxu0 %v493
    %v1843 = vpop.f32.mrb[0].mxu0
    %v1844 = vadd.f32 0.0, %v1843
    %v1845 = vpop.f32.mrb[0].mxu0
    %1846 = vmatprep.mubr.f32.mxu0 0.0
    %1847 = vmatmul.mubr.f32.gmra.mrb[0].mxu0 %v496
    %v1848 = vpop.f32.mrb[0].mxu0
    %v1849 = vadd.f32 0.0, %v1848
    %v1850 = vpop.f32.mrb[0].mxu0
    %1851 = vmatprep.mubr.f32.mxu0 0.0
    %1852 = vmatmul.mubr.f32.gmra.mrb[0].mxu0 %v499
    %v1853 = vpop.f32.mrb[0].mxu0
    %v1854 = vadd.f32 0.0, %v1853
    %v1855 = vpop.f32.mrb[0].mxu0
    %1856 = vmatprep.mubr.f32.mxu0 0.0
    %1857 = vmatmul.mubr.f32.gmra.mrb[0].mxu0 %v502
    %v1858 = vpop.f32.mrb[0].mxu0
    %v1859 = vadd.f32 0.0, %v1858
    %v1860 = vpop.f32.mrb[0].mxu0
    %1861 = vmatprep.mubr.f32.mxu0 0.0
    %1862 = vmatmul.mubr.f32.gmra.mrb[0].mxu0 %v505
    %v1863 = vpop.f32.mrb[0].mxu0
    %v1864 = vadd.f32 0.0, %v1863
    %v1865 = vpop.f32.mrb[0].mxu0
    %1866 = vdwg.mxu0
    %vm1867 = vcmp.eq.s32.totalorder %v428, 5
    %vm1868 = vcmp.eq.s32.totalorder %v429, 5
    %vm1869 = vcmp.eq.s32.totalorder %v430, 5
    %vm1870 = vcmp.eq.s32.totalorder %v431, 5
    %vm1871 = vcmp.eq.s32.totalorder %v432, 5
    %vm1872 = vcmp.eq.s32.totalorder %v433, 5
    %vm1873 = vcmp.eq.s32.totalorder %v434, 5
    %vm1874 = vcmp.eq.s32.totalorder %v435, 5
    %vm1875 = vcmp.eq.s32.totalorder %v436, 5
    %vm1876 = vcmp.eq.s32.totalorder %v437, 5
    %vm1877 = vcmp.eq.s32.totalorder %v438, 5
    %vm1878 = vcmp.eq.s32.totalorder %v439, 5
    %vm1879 = vcmp.eq.s32.totalorder %v440, 5
    %vm1880 = vcmp.eq.s32.totalorder %v441, 5
    %vm1881 = vcmp.eq.s32.totalorder %v442, 5
    %vm1882 = vcmp.eq.s32.totalorder %v443, 5
    %v1883 = vstv %s1709
    %vm1884 = vcmp.lt.s32.totalorder %v119, %v1883
    %v1885 = vsel %vm1867, 1, 0
    %v1886 = vsel %vm1868, 1, 0
    %v1887 = vsel %vm1869, 1, 0
    %v1888 = vsel %vm1870, 1, 0
    %v1889 = vsel %vm1871, 1, 0
    %v1890 = vsel %vm1872, 1, 0
    %v1891 = vsel %vm1873, 1, 0
    %v1892 = vsel %vm1874, 1, 0
    %v1893 = vsel %vm1875, 1, 0
    %v1894 = vsel %vm1876, 1, 0
    %v1895 = vsel %vm1877, 1, 0
    %v1896 = vsel %vm1878, 1, 0
    %v1897 = vsel %vm1879, 1, 0
    %v1898 = vsel %vm1880, 1, 0
    %v1899 = vsel %vm1881, 1, 0
    %v1900 = vsel %vm1882, 1, 0
    %vm1901 = vcmp.eq.s32.totalorder %v1885, 1
    %vm1902 = vcmp.eq.s32.totalorder %v1886, 1
    %vm1903 = vcmp.eq.s32.totalorder %v1887, 1
    %vm1904 = vcmp.eq.s32.totalorder %v1888, 1
    %vm1905 = vcmp.eq.s32.totalorder %v1889, 1
    %vm1906 = vcmp.eq.s32.totalorder %v1890, 1
    %vm1907 = vcmp.eq.s32.totalorder %v1891, 1
    %vm1908 = vcmp.eq.s32.totalorder %v1892, 1
    %vm1909 = vcmp.eq.s32.totalorder %v1893, 1
    %vm1910 = vcmp.eq.s32.totalorder %v1894, 1
    %vm1911 = vcmp.eq.s32.totalorder %v1895, 1
    %vm1912 = vcmp.eq.s32.totalorder %v1896, 1
    %vm1913 = vcmp.eq.s32.totalorder %v1897, 1
    %vm1914 = vcmp.eq.s32.totalorder %v1898, 1
    %vm1915 = vcmp.eq.s32.totalorder %v1899, 1
    %vm1916 = vcmp.eq.s32.totalorder %v1900, 1
    %v1917 = vsel %vm1884, 1, 0
    %vm1918 = vcmp.eq.s32.totalorder %v1917, 1
    %vm1919 = vmand %vm1901, %vm1918
    %vm1920 = vmand %vm1902, %vm1918
    %vm1921 = vmand %vm1903, %vm1918
    %vm1922 = vmand %vm1904, %vm1918
    %vm1923 = vmand %vm1905, %vm1918
    %vm1924 = vmand %vm1906, %vm1918
    %vm1925 = vmand %vm1907, %vm1918
    %vm1926 = vmand %vm1908, %vm1918
    %vm1927 = vmand %vm1909, %vm1918
    %vm1928 = vmand %vm1910, %vm1918
    %vm1929 = vmand %vm1911, %vm1918
    %vm1930 = vmand %vm1912, %vm1918
    %vm1931 = vmand %vm1913, %vm1918
    %vm1932 = vmand %vm1914, %vm1918
    %vm1933 = vmand %vm1915, %vm1918
    %vm1934 = vmand %vm1916, %vm1918
    %v1935 = vsel %vm1919, %v1789, %v1692
    %v1936 = vsel %vm1920, %v1794, %v1693
    %v1937 = vsel %vm1921, %v1799, %v1694
    %v1938 = vsel %vm1922, %v1804, %v1695
    %v1939 = vsel %vm1923, %v1809, %v1696
    %v1940 = vsel %vm1924, %v1814, %v1697
    %v1941 = vsel %vm1925, %v1819, %v1698
    %v1942 = vsel %vm1926, %v1824, %v1699
    %v1943 = vsel %vm1927, %v1829, %v1700
    %v1944 = vsel %vm1928, %v1834, %v1701
    %v1945 = vsel %vm1929, %v1839, %v1702
    %v1946 = vsel %vm1930, %v1844, %v1703
    %v1947 = vsel %vm1931, %v1849, %v1704
    %v1948 = vsel %vm1932, %v1854, %v1705
    %v1949 = vsel %vm1933, %v1859, %v1706
    %v1950 = vsel %vm1934, %v1864, %v1707
    %s1951 = smul.u32 %s91, 2
    %s1952 = sadd.s32 %s1951, 1
    %v1953 = vlaneseq
    %v1954 = vshrl.u32 %v1953, 7
    %v1955 = vsub.s32 6, %v1954
    %v1956 = vrot.slane %v214, %v1955
    %vm1957 = vcmp.eq.s32.totalorder %v38, %v1956
    %vm1958 = vcmp.eq.s32.totalorder %v237, %v1956
    %vm1959 = vcmp.eq.s32.totalorder %v238, %v1956
    %vm1960 = vcmp.eq.s32.totalorder %v239, %v1956
    %v1961 = vsel %vm1957, 1.0, 0.0
    %v1962 = vsel %vm1958, 1.0, 0.0
    %v1963 = vsel %vm1959, 1.0, 0.0
    %v1964 = vsel %vm1960, 1.0, 0.0
    %1965 = vmatprep.subr.mxu0 0.0
    %1966 = vmatpush1.msra.mxu0 %v1961
    %1967 = vmatprep.subr.mxu0 0.0
    %1968 = vmatpush1.msra.mxu0 %v1962
    %1969 = vmatprep.subr.mxu0 0.0
    %1970 = vmatpush1.msra.mxu0 %v1963
    %1971 = vmatprep.subr.mxu0 0.0
    %1972 = vmatpush1.msra.mxu0 %v1964
    %1973 = vmatprep.subr.mxu0 0.0
    %1974 = vmatpush1.msra.mxu0 0.0
    %1975 = vmatprep.subr.mxu0 0.0
    %1976 = vmatpush1.msra.mxu0 0.0
    %1977 = vmatprep.subr.mxu0 0.0
    %1978 = vmatpush1.msra.mxu0 0.0
    %1979 = vmatprep.subr.mxu0 0.0
    %1980 = vmatpush1.msra.mxu0 0.0
    %1981 = vmatprep.subr.mxu0 0.0
    %1982 = vmatpush1.msra.mxu0 0.0
    %1983 = vmatprep.subr.mxu0 0.0
    %1984 = vmatpush1.msra.mxu0 0.0
    %1985 = vmatprep.subr.mxu0 0.0
    %1986 = vmatpush1.msra.mxu0 0.0
    %1987 = vmatprep.subr.mxu0 0.0
    %1988 = vmatpush1.msra.mxu0 0.0
    %1989 = vmatprep.subr.mxu0 0.0
    %1990 = vmatpush1.msra.mxu0 0.0
    %1991 = vmatprep.subr.mxu0 0.0
    %1992 = vmatpush1.msra.mxu0 0.0
    %1993 = vmatprep.subr.mxu0 0.0
    %1994 = vmatpush1.msra.mxu0 0.0
    %1995 = vmatprep.subr.mxu0 0.0
    %1996 = vmatpush1.msra.mxu0 0.0
    %1997 = vmatprep.subr.mxu0 0.0
    %1998 = vmatpush1.msra.mxu0 0.0
    %1999 = vmatprep.subr.mxu0 0.0
    %2000 = vmatpush1.msra.mxu0 0.0
    %2001 = vmatprep.subr.mxu0 0.0
    %2002 = vmatpush1.msra.mxu0 0.0
    %2003 = vmatprep.subr.mxu0 0.0
    %2004 = vmatpush1.msra.mxu0 0.0
    %2005 = vmatprep.subr.mxu0 0.0
    %2006 = vmatpush1.msra.mxu0 0.0
    %2007 = vmatprep.subr.mxu0 0.0
    %2008 = vmatpush1.msra.mxu0 0.0
    %2009 = vmatprep.subr.mxu0 0.0
    %2010 = vmatpush1.msra.mxu0 0.0
    %2011 = vmatprep.subr.mxu0 0.0
    %2012 = vmatpush1.msra.mxu0 0.0
    %2013 = vmatprep.subr.mxu0 0.0
    %2014 = vmatpush1.msra.mxu0 0.0
    %2015 = vmatprep.subr.mxu0 0.0
    %2016 = vmatpush1.msra.mxu0 0.0
    %2017 = vmatprep.subr.mxu0 0.0
    %2018 = vmatpush1.msra.mxu0 0.0
    %2019 = vmatprep.subr.mxu0 0.0
    %2020 = vmatpush1.msra.mxu0 0.0
    %2021 = vmatprep.subr.mxu0 0.0
    %2022 = vmatpush1.msra.mxu0 0.0
    %2023 = vmatprep.subr.mxu0 0.0
    %2024 = vmatpush1.msra.mxu0 0.0
    %2025 = vmatprep.subr.mxu0 0.0
    %2026 = vmatpush1.msra.mxu0 0.0
    %2027 = vmatprep.subr.mxu0 0.0
    %2028 = vmatpush1.msra.mxu0 0.0
    %2029 = vmatprep.mubr.f32.mxu0 0.0
    %2030 = vmatmul.mubr.f32.gmra.mrb[0].mxu0 %v460
    %v2031 = vpop.f32.mrb[0].mxu0
    %v2032 = vadd.f32 0.0, %v2031
    %v2033 = vpop.f32.mrb[0].mxu0
    %2034 = vmatprep.mubr.f32.mxu0 0.0
    %2035 = vmatmul.mubr.f32.gmra.mrb[0].mxu0 %v463
    %v2036 = vpop.f32.mrb[0].mxu0
    %v2037 = vadd.f32 0.0, %v2036
    %v2038 = vpop.f32.mrb[0].mxu0
    %2039 = vmatprep.mubr.f32.mxu0 0.0
    %2040 = vmatmul.mubr.f32.gmra.mrb[0].mxu0 %v466
    %v2041 = vpop.f32.mrb[0].mxu0
    %v2042 = vadd.f32 0.0, %v2041
    %v2043 = vpop.f32.mrb[0].mxu0
    %2044 = vmatprep.mubr.f32.mxu0 0.0
    %2045 = vmatmul.mubr.f32.gmra.mrb[0].mxu0 %v469
    %v2046 = vpop.f32.mrb[0].mxu0
    %v2047 = vadd.f32 0.0, %v2046
    %v2048 = vpop.f32.mrb[0].mxu0
    %2049 = vmatprep.mubr.f32.mxu0 0.0
    %2050 = vmatmul.mubr.f32.gmra.mrb[0].mxu0 %v472
    %v2051 = vpop.f32.mrb[0].mxu0
    %v2052 = vadd.f32 0.0, %v2051
    %v2053 = vpop.f32.mrb[0].mxu0
    %2054 = vmatprep.mubr.f32.mxu0 0.0
    %2055 = vmatmul.mubr.f32.gmra.mrb[0].mxu0 %v475
    %v2056 = vpop.f32.mrb[0].mxu0
    %v2057 = vadd.f32 0.0, %v2056
    %v2058 = vpop.f32.mrb[0].mxu0
    %2059 = vmatprep.mubr.f32.mxu0 0.0
    %2060 = vmatmul.mubr.f32.gmra.mrb[0].mxu0 %v478
    %v2061 = vpop.f32.mrb[0].mxu0
    %v2062 = vadd.f32 0.0, %v2061
    %v2063 = vpop.f32.mrb[0].mxu0
    %2064 = vmatprep.mubr.f32.mxu0 0.0
    %2065 = vmatmul.mubr.f32.gmra.mrb[0].mxu0 %v481
    %v2066 = vpop.f32.mrb[0].mxu0
    %v2067 = vadd.f32 0.0, %v2066
    %v2068 = vpop.f32.mrb[0].mxu0
    %2069 = vmatprep.mubr.f32.mxu0 0.0
    %2070 = vmatmul.mubr.f32.gmra.mrb[0].mxu0 %v484
    %v2071 = vpop.f32.mrb[0].mxu0
    %v2072 = vadd.f32 0.0, %v2071
    %v2073 = vpop.f32.mrb[0].mxu0
    %2074 = vmatprep.mubr.f32.mxu0 0.0
    %2075 = vmatmul.mubr.f32.gmra.mrb[0].mxu0 %v487
    %v2076 = vpop.f32.mrb[0].mxu0
    %v2077 = vadd.f32 0.0, %v2076
    %v2078 = vpop.f32.mrb[0].mxu0
    %2079 = vmatprep.mubr.f32.mxu0 0.0
    %2080 = vmatmul.mubr.f32.gmra.mrb[0].mxu0 %v490
    %v2081 = vpop.f32.mrb[0].mxu0
    %v2082 = vadd.f32 0.0, %v2081
    %v2083 = vpop.f32.mrb[0].mxu0
    %2084 = vmatprep.mubr.f32.mxu0 0.0
    %2085 = vmatmul.mubr.f32.gmra.mrb[0].mxu0 %v493
    %v2086 = vpop.f32.mrb[0].mxu0
    %v2087 = vadd.f32 0.0, %v2086
    %v2088 = vpop.f32.mrb[0].mxu0
    %2089 = vmatprep.mubr.f32.mxu0 0.0
    %2090 = vmatmul.mubr.f32.gmra.mrb[0].mxu0 %v496
    %v2091 = vpop.f32.mrb[0].mxu0
    %v2092 = vadd.f32 0.0, %v2091
    %v2093 = vpop.f32.mrb[0].mxu0
    %2094 = vmatprep.mubr.f32.mxu0 0.0
    %2095 = vmatmul.mubr.f32.gmra.mrb[0].mxu0 %v499
    %v2096 = vpop.f32.mrb[0].mxu0
    %v2097 = vadd.f32 0.0, %v2096
    %v2098 = vpop.f32.mrb[0].mxu0
    %2099 = vmatprep.mubr.f32.mxu0 0.0
    %2100 = vmatmul.mubr.f32.gmra.mrb[0].mxu0 %v502
    %v2101 = vpop.f32.mrb[0].mxu0
    %v2102 = vadd.f32 0.0, %v2101
    %v2103 = vpop.f32.mrb[0].mxu0
    %2104 = vmatprep.mubr.f32.mxu0 0.0
    %2105 = vmatmul.mubr.f32.gmra.mrb[0].mxu0 %v505
    %v2106 = vpop.f32.mrb[0].mxu0
    %v2107 = vadd.f32 0.0, %v2106
    %v2108 = vpop.f32.mrb[0].mxu0
    %2109 = vdwg.mxu0
    %vm2110 = vcmp.eq.s32.totalorder %v428, 6
    %vm2111 = vcmp.eq.s32.totalorder %v429, 6
    %vm2112 = vcmp.eq.s32.totalorder %v430, 6
    %vm2113 = vcmp.eq.s32.totalorder %v431, 6
    %vm2114 = vcmp.eq.s32.totalorder %v432, 6
    %vm2115 = vcmp.eq.s32.totalorder %v433, 6
    %vm2116 = vcmp.eq.s32.totalorder %v434, 6
    %vm2117 = vcmp.eq.s32.totalorder %v435, 6
    %vm2118 = vcmp.eq.s32.totalorder %v436, 6
    %vm2119 = vcmp.eq.s32.totalorder %v437, 6
    %vm2120 = vcmp.eq.s32.totalorder %v438, 6
    %vm2121 = vcmp.eq.s32.totalorder %v439, 6
    %vm2122 = vcmp.eq.s32.totalorder %v440, 6
    %vm2123 = vcmp.eq.s32.totalorder %v441, 6
    %vm2124 = vcmp.eq.s32.totalorder %v442, 6
    %vm2125 = vcmp.eq.s32.totalorder %v443, 6
    %v2126 = vstv %s1952
    %vm2127 = vcmp.lt.s32.totalorder %v119, %v2126
    %v2128 = vsel %vm2110, 1, 0
    %v2129 = vsel %vm2111, 1, 0
    %v2130 = vsel %vm2112, 1, 0
    %v2131 = vsel %vm2113, 1, 0
    %v2132 = vsel %vm2114, 1, 0
    %v2133 = vsel %vm2115, 1, 0
    %v2134 = vsel %vm2116, 1, 0
    %v2135 = vsel %vm2117, 1, 0
    %v2136 = vsel %vm2118, 1, 0
    %v2137 = vsel %vm2119, 1, 0
    %v2138 = vsel %vm2120, 1, 0
    %v2139 = vsel %vm2121, 1, 0
    %v2140 = vsel %vm2122, 1, 0
    %v2141 = vsel %vm2123, 1, 0
    %v2142 = vsel %vm2124, 1, 0
    %v2143 = vsel %vm2125, 1, 0
    %vm2144 = vcmp.eq.s32.totalorder %v2128, 1
    %vm2145 = vcmp.eq.s32.totalorder %v2129, 1
    %vm2146 = vcmp.eq.s32.totalorder %v2130, 1
    %vm2147 = vcmp.eq.s32.totalorder %v2131, 1
    %vm2148 = vcmp.eq.s32.totalorder %v2132, 1
    %vm2149 = vcmp.eq.s32.totalorder %v2133, 1
    %vm2150 = vcmp.eq.s32.totalorder %v2134, 1
    %vm2151 = vcmp.eq.s32.totalorder %v2135, 1
    %vm2152 = vcmp.eq.s32.totalorder %v2136, 1
    %vm2153 = vcmp.eq.s32.totalorder %v2137, 1
    %vm2154 = vcmp.eq.s32.totalorder %v2138, 1
    %vm2155 = vcmp.eq.s32.totalorder %v2139, 1
    %vm2156 = vcmp.eq.s32.totalorder %v2140, 1
    %vm2157 = vcmp.eq.s32.totalorder %v2141, 1
    %vm2158 = vcmp.eq.s32.totalorder %v2142, 1
    %vm2159 = vcmp.eq.s32.totalorder %v2143, 1
    %v2160 = vsel %vm2127, 1, 0
    %vm2161 = vcmp.eq.s32.totalorder %v2160, 1
    %vm2162 = vmand %vm2144, %vm2161
    %vm2163 = vmand %vm2145, %vm2161
    %vm2164 = vmand %vm2146, %vm2161
    %vm2165 = vmand %vm2147, %vm2161
    %vm2166 = vmand %vm2148, %vm2161
    %vm2167 = vmand %vm2149, %vm2161
    %vm2168 = vmand %vm2150, %vm2161
    %vm2169 = vmand %vm2151, %vm2161
    %vm2170 = vmand %vm2152, %vm2161
    %vm2171 = vmand %vm2153, %vm2161
    %vm2172 = vmand %vm2154, %vm2161
    %vm2173 = vmand %vm2155, %vm2161
    %vm2174 = vmand %vm2156, %vm2161
    %vm2175 = vmand %vm2157, %vm2161
    %vm2176 = vmand %vm2158, %vm2161
    %vm2177 = vmand %vm2159, %vm2161
    %v2178 = vsel %vm2162, %v2032, %v1935
    %v2179 = vsel %vm2163, %v2037, %v1936
    %v2180 = vsel %vm2164, %v2042, %v1937
    %v2181 = vsel %vm2165, %v2047, %v1938
    %v2182 = vsel %vm2166, %v2052, %v1939
    %v2183 = vsel %vm2167, %v2057, %v1940
    %v2184 = vsel %vm2168, %v2062, %v1941
    %v2185 = vsel %vm2169, %v2067, %v1942
    %v2186 = vsel %vm2170, %v2072, %v1943
    %v2187 = vsel %vm2171, %v2077, %v1944
    %v2188 = vsel %vm2172, %v2082, %v1945
    %v2189 = vsel %vm2173, %v2087, %v1946
    %v2190 = vsel %vm2174, %v2092, %v1947
    %v2191 = vsel %vm2175, %v2097, %v1948
    %v2192 = vsel %vm2176, %v2102, %v1949
    %v2193 = vsel %vm2177, %v2107, %v1950
    %s2194 = smul.u32 %s99, 2
    %s2195 = sadd.s32 %s2194, 1
    %v2196 = vlaneseq
    %v2197 = vshrl.u32 %v2196, 7
    %v2198 = vsub.s32 7, %v2197
    %v2199 = vrot.slane %v214, %v2198
    %vm2200 = vcmp.eq.s32.totalorder %v38, %v2199
    %vm2201 = vcmp.eq.s32.totalorder %v237, %v2199
    %vm2202 = vcmp.eq.s32.totalorder %v238, %v2199
    %vm2203 = vcmp.eq.s32.totalorder %v239, %v2199
    %v2204 = vsel %vm2200, 1.0, 0.0
    %v2205 = vsel %vm2201, 1.0, 0.0
    %v2206 = vsel %vm2202, 1.0, 0.0
    %v2207 = vsel %vm2203, 1.0, 0.0
    %2208 = vmatprep.subr.mxu0 0.0
    %2209 = vmatpush1.msra.mxu0 %v2204
    %2210 = vmatprep.subr.mxu0 0.0
    %2211 = vmatpush1.msra.mxu0 %v2205
    %2212 = vmatprep.subr.mxu0 0.0
    %2213 = vmatpush1.msra.mxu0 %v2206
    %2214 = vmatprep.subr.mxu0 0.0
    %2215 = vmatpush1.msra.mxu0 %v2207
    %2216 = vmatprep.subr.mxu0 0.0
    %2217 = vmatpush1.msra.mxu0 0.0
    %2218 = vmatprep.subr.mxu0 0.0
    %2219 = vmatpush1.msra.mxu0 0.0
    %2220 = vmatprep.subr.mxu0 0.0
    %2221 = vmatpush1.msra.mxu0 0.0
    %2222 = vmatprep.subr.mxu0 0.0
    %2223 = vmatpush1.msra.mxu0 0.0
    %2224 = vmatprep.subr.mxu0 0.0
    %2225 = vmatpush1.msra.mxu0 0.0
    %2226 = vmatprep.subr.mxu0 0.0
    %2227 = vmatpush1.msra.mxu0 0.0
    %2228 = vmatprep.subr.mxu0 0.0
    %2229 = vmatpush1.msra.mxu0 0.0
    %2230 = vmatprep.subr.mxu0 0.0
    %2231 = vmatpush1.msra.mxu0 0.0
    %2232 = vmatprep.subr.mxu0 0.0
    %2233 = vmatpush1.msra.mxu0 0.0
    %2234 = vmatprep.subr.mxu0 0.0
    %2235 = vmatpush1.msra.mxu0 0.0
    %2236 = vmatprep.subr.mxu0 0.0
    %2237 = vmatpush1.msra.mxu0 0.0
    %2238 = vmatprep.subr.mxu0 0.0
    %2239 = vmatpush1.msra.mxu0 0.0
    %2240 = vmatprep.subr.mxu0 0.0
    %2241 = vmatpush1.msra.mxu0 0.0
    %2242 = vmatprep.subr.mxu0 0.0
    %2243 = vmatpush1.msra.mxu0 0.0
    %2244 = vmatprep.subr.mxu0 0.0
    %2245 = vmatpush1.msra.mxu0 0.0
    %2246 = vmatprep.subr.mxu0 0.0
    %2247 = vmatpush1.msra.mxu0 0.0
    %2248 = vmatprep.subr.mxu0 0.0
    %2249 = vmatpush1.msra.mxu0 0.0
    %2250 = vmatprep.subr.mxu0 0.0
    %2251 = vmatpush1.msra.mxu0 0.0
    %2252 = vmatprep.subr.mxu0 0.0
    %2253 = vmatpush1.msra.mxu0 0.0
    %2254 = vmatprep.subr.mxu0 0.0
    %2255 = vmatpush1.msra.mxu0 0.0
    %2256 = vmatprep.subr.mxu0 0.0
    %2257 = vmatpush1.msra.mxu0 0.0
    %2258 = vmatprep.subr.mxu0 0.0
    %2259 = vmatpush1.msra.mxu0 0.0
    %2260 = vmatprep.subr.mxu0 0.0
    %2261 = vmatpush1.msra.mxu0 0.0
    %2262 = vmatprep.subr.mxu0 0.0
    %2263 = vmatpush1.msra.mxu0 0.0
    %2264 = vmatprep.subr.mxu0 0.0
    %2265 = vmatpush1.msra.mxu0 0.0
    %2266 = vmatprep.subr.mxu0 0.0
    %2267 = vmatpush1.msra.mxu0 0.0
    %2268 = vmatprep.subr.mxu0 0.0
    %2269 = vmatpush1.msra.mxu0 0.0
    %2270 = vmatprep.subr.mxu0 0.0
    %2271 = vmatpush1.msra.mxu0 0.0
    %2272 = vmatprep.mubr.f32.mxu0 0.0
    %2273 = vmatmul.mubr.f32.gmra.mrb[0].mxu0 %v460
    %v2274 = vpop.f32.mrb[0].mxu0
    %v2275 = vadd.f32 0.0, %v2274
    %v2276 = vpop.f32.mrb[0].mxu0
    %2277 = vmatprep.mubr.f32.mxu0 0.0
    %2278 = vmatmul.mubr.f32.gmra.mrb[0].mxu0 %v463
    %v2279 = vpop.f32.mrb[0].mxu0
    %v2280 = vadd.f32 0.0, %v2279
    %v2281 = vpop.f32.mrb[0].mxu0
    %2282 = vmatprep.mubr.f32.mxu0 0.0
    %2283 = vmatmul.mubr.f32.gmra.mrb[0].mxu0 %v466
    %v2284 = vpop.f32.mrb[0].mxu0
    %v2285 = vadd.f32 0.0, %v2284
    %v2286 = vpop.f32.mrb[0].mxu0
    %2287 = vmatprep.mubr.f32.mxu0 0.0
    %2288 = vmatmul.mubr.f32.gmra.mrb[0].mxu0 %v469
    %v2289 = vpop.f32.mrb[0].mxu0
    %v2290 = vadd.f32 0.0, %v2289
    %v2291 = vpop.f32.mrb[0].mxu0
    %2292 = vmatprep.mubr.f32.mxu0 0.0
    %2293 = vmatmul.mubr.f32.gmra.mrb[0].mxu0 %v472
    %v2294 = vpop.f32.mrb[0].mxu0
    %v2295 = vadd.f32 0.0, %v2294
    %v2296 = vpop.f32.mrb[0].mxu0
    %2297 = vmatprep.mubr.f32.mxu0 0.0
    %2298 = vmatmul.mubr.f32.gmra.mrb[0].mxu0 %v475
    %v2299 = vpop.f32.mrb[0].mxu0
    %v2300 = vadd.f32 0.0, %v2299
    %v2301 = vpop.f32.mrb[0].mxu0
    %2302 = vmatprep.mubr.f32.mxu0 0.0
    %2303 = vmatmul.mubr.f32.gmra.mrb[0].mxu0 %v478
    %v2304 = vpop.f32.mrb[0].mxu0
    %v2305 = vadd.f32 0.0, %v2304
    %v2306 = vpop.f32.mrb[0].mxu0
    %2307 = vmatprep.mubr.f32.mxu0 0.0
    %2308 = vmatmul.mubr.f32.gmra.mrb[0].mxu0 %v481
    %v2309 = vpop.f32.mrb[0].mxu0
    %v2310 = vadd.f32 0.0, %v2309
    %v2311 = vpop.f32.mrb[0].mxu0
    %2312 = vmatprep.mubr.f32.mxu0 0.0
    %2313 = vmatmul.mubr.f32.gmra.mrb[0].mxu0 %v484
    %v2314 = vpop.f32.mrb[0].mxu0
    %v2315 = vadd.f32 0.0, %v2314
    %v2316 = vpop.f32.mrb[0].mxu0
    %2317 = vmatprep.mubr.f32.mxu0 0.0
    %2318 = vmatmul.mubr.f32.gmra.mrb[0].mxu0 %v487
    %v2319 = vpop.f32.mrb[0].mxu0
    %v2320 = vadd.f32 0.0, %v2319
    %v2321 = vpop.f32.mrb[0].mxu0
    %2322 = vmatprep.mubr.f32.mxu0 0.0
    %2323 = vmatmul.mubr.f32.gmra.mrb[0].mxu0 %v490
    %v2324 = vpop.f32.mrb[0].mxu0
    %v2325 = vadd.f32 0.0, %v2324
    %v2326 = vpop.f32.mrb[0].mxu0
    %2327 = vmatprep.mubr.f32.mxu0 0.0
    %2328 = vmatmul.mubr.f32.gmra.mrb[0].mxu0 %v493
    %v2329 = vpop.f32.mrb[0].mxu0
    %v2330 = vadd.f32 0.0, %v2329
    %v2331 = vpop.f32.mrb[0].mxu0
    %2332 = vmatprep.mubr.f32.mxu0 0.0
    %2333 = vmatmul.mubr.f32.gmra.mrb[0].mxu0 %v496
    %v2334 = vpop.f32.mrb[0].mxu0
    %v2335 = vadd.f32 0.0, %v2334
    %v2336 = vpop.f32.mrb[0].mxu0
    %2337 = vmatprep.mubr.f32.mxu0 0.0
    %2338 = vmatmul.mubr.f32.gmra.mrb[0].mxu0 %v499
    %v2339 = vpop.f32.mrb[0].mxu0
    %v2340 = vadd.f32 0.0, %v2339
    %v2341 = vpop.f32.mrb[0].mxu0
    %2342 = vmatprep.mubr.f32.mxu0 0.0
    %2343 = vmatmul.mubr.f32.gmra.mrb[0].mxu0 %v502
    %v2344 = vpop.f32.mrb[0].mxu0
    %v2345 = vadd.f32 0.0, %v2344
    %v2346 = vpop.f32.mrb[0].mxu0
    %2347 = vmatprep.mubr.f32.mxu0 0.0
    %2348 = vmatmul.mubr.f32.gmra.mrb[0].mxu0 %v505
    %v2349 = vpop.f32.mrb[0].mxu0
    %v2350 = vadd.f32 0.0, %v2349
    %v2351 = vpop.f32.mrb[0].mxu0
    %2352 = vdwg.mxu0
    %vm2353 = vcmp.eq.s32.totalorder %v428, 7
    %vm2354 = vcmp.eq.s32.totalorder %v429, 7
    %vm2355 = vcmp.eq.s32.totalorder %v430, 7
    %vm2356 = vcmp.eq.s32.totalorder %v431, 7
    %vm2357 = vcmp.eq.s32.totalorder %v432, 7
    %vm2358 = vcmp.eq.s32.totalorder %v433, 7
    %vm2359 = vcmp.eq.s32.totalorder %v434, 7
    %vm2360 = vcmp.eq.s32.totalorder %v435, 7
    %vm2361 = vcmp.eq.s32.totalorder %v436, 7
    %vm2362 = vcmp.eq.s32.totalorder %v437, 7
    %vm2363 = vcmp.eq.s32.totalorder %v438, 7
    %vm2364 = vcmp.eq.s32.totalorder %v439, 7
    %vm2365 = vcmp.eq.s32.totalorder %v440, 7
    %vm2366 = vcmp.eq.s32.totalorder %v441, 7
    %vm2367 = vcmp.eq.s32.totalorder %v442, 7
    %vm2368 = vcmp.eq.s32.totalorder %v443, 7
    %v2369 = vstv %s2195
    %vm2370 = vcmp.lt.s32.totalorder %v119, %v2369
    %v2371 = vsel %vm2353, 1, 0
    %v2372 = vsel %vm2354, 1, 0
    %v2373 = vsel %vm2355, 1, 0
    %v2374 = vsel %vm2356, 1, 0
    %v2375 = vsel %vm2357, 1, 0
    %v2376 = vsel %vm2358, 1, 0
    %v2377 = vsel %vm2359, 1, 0
    %v2378 = vsel %vm2360, 1, 0
    %v2379 = vsel %vm2361, 1, 0
    %v2380 = vsel %vm2362, 1, 0
    %v2381 = vsel %vm2363, 1, 0
    %v2382 = vsel %vm2364, 1, 0
    %v2383 = vsel %vm2365, 1, 0
    %v2384 = vsel %vm2366, 1, 0
    %v2385 = vsel %vm2367, 1, 0
    %v2386 = vsel %vm2368, 1, 0
    %vm2387 = vcmp.eq.s32.totalorder %v2371, 1
    %vm2388 = vcmp.eq.s32.totalorder %v2372, 1
    %vm2389 = vcmp.eq.s32.totalorder %v2373, 1
    %vm2390 = vcmp.eq.s32.totalorder %v2374, 1
    %vm2391 = vcmp.eq.s32.totalorder %v2375, 1
    %vm2392 = vcmp.eq.s32.totalorder %v2376, 1
    %vm2393 = vcmp.eq.s32.totalorder %v2377, 1
    %vm2394 = vcmp.eq.s32.totalorder %v2378, 1
    %vm2395 = vcmp.eq.s32.totalorder %v2379, 1
    %vm2396 = vcmp.eq.s32.totalorder %v2380, 1
    %vm2397 = vcmp.eq.s32.totalorder %v2381, 1
    %vm2398 = vcmp.eq.s32.totalorder %v2382, 1
    %vm2399 = vcmp.eq.s32.totalorder %v2383, 1
    %vm2400 = vcmp.eq.s32.totalorder %v2384, 1
    %vm2401 = vcmp.eq.s32.totalorder %v2385, 1
    %vm2402 = vcmp.eq.s32.totalorder %v2386, 1
    %v2403 = vsel %vm2370, 1, 0
    %vm2404 = vcmp.eq.s32.totalorder %v2403, 1
    %vm2405 = vmand %vm2387, %vm2404
    %vm2406 = vmand %vm2388, %vm2404
    %vm2407 = vmand %vm2389, %vm2404
    %vm2408 = vmand %vm2390, %vm2404
    %vm2409 = vmand %vm2391, %vm2404
    %vm2410 = vmand %vm2392, %vm2404
    %vm2411 = vmand %vm2393, %vm2404
    %vm2412 = vmand %vm2394, %vm2404
    %vm2413 = vmand %vm2395, %vm2404
    %vm2414 = vmand %vm2396, %vm2404
    %vm2415 = vmand %vm2397, %vm2404
    %vm2416 = vmand %vm2398, %vm2404
    %vm2417 = vmand %vm2399, %vm2404
    %vm2418 = vmand %vm2400, %vm2404
    %vm2419 = vmand %vm2401, %vm2404
    %vm2420 = vmand %vm2402, %vm2404
    %v2421 = vsel %vm2405, %v2275, %v2178
    %v2422 = vsel %vm2406, %v2280, %v2179
    %v2423 = vsel %vm2407, %v2285, %v2180
    %v2424 = vsel %vm2408, %v2290, %v2181
    %v2425 = vsel %vm2409, %v2295, %v2182
    %v2426 = vsel %vm2410, %v2300, %v2183
    %v2427 = vsel %vm2411, %v2305, %v2184
    %v2428 = vsel %vm2412, %v2310, %v2185
    %v2429 = vsel %vm2413, %v2315, %v2186
    %v2430 = vsel %vm2414, %v2320, %v2187
    %v2431 = vsel %vm2415, %v2325, %v2188
    %v2432 = vsel %vm2416, %v2330, %v2189
    %v2433 = vsel %vm2417, %v2335, %v2190
    %v2434 = vsel %vm2418, %v2340, %v2191
    %v2435 = vsel %vm2419, %v2345, %v2192
    %v2436 = vsel %vm2420, %v2350, %v2193
    %2437 = vst [vmem:[#allocation2] sm:$0xff] %v2421
    %2438 = vst [vmem:[#allocation2 + $0x8] sm:$0xff] %v2422
    %2439 = vst [vmem:[#allocation2 + $0x10] sm:$0xff] %v2423
    %2440 = vst [vmem:[#allocation2 + $0x18] sm:$0xff] %v2424
    %2441 = vst [vmem:[#allocation2 + $0x20] sm:$0xff] %v2425
    %2442 = vst [vmem:[#allocation2 + $0x28] sm:$0xff] %v2426
    %2443 = vst [vmem:[#allocation2 + $0x30] sm:$0xff] %v2427
    %2444 = vst [vmem:[#allocation2 + $0x38] sm:$0xff] %v2428
    %2445 = vst [vmem:[#allocation2 + $0x40] sm:$0xff] %v2429
    %2446 = vst [vmem:[#allocation2 + $0x48] sm:$0xff] %v2430
    %2447 = vst [vmem:[#allocation2 + $0x50] sm:$0xff] %v2431
    %2448 = vst [vmem:[#allocation2 + $0x58] sm:$0xff] %v2432
    %2449 = vst [vmem:[#allocation2 + $0x60] sm:$0xff] %v2433
    %2450 = vst [vmem:[#allocation2 + $0x68] sm:$0xff] %v2434
    %2451 = vst [vmem:[#allocation2 + $0x70] sm:$0xff] %v2435
    %2452 = vst [vmem:[#allocation2 + $0x78] sm:$0xff] %v2436
    %vm2453 = vcmp.le.s32.totalorder %v119, 1
    %v2454 = vsel %vm2453, %v2421, -1e+30
    // While loop
    $region14: #{tpu_custom_call.1} parent=1 // loop_pre_header
      _
    $region15: #{tpu_custom_call.1} parent=1 // loop_header
      %s2456 = sphi 1, %s2458
      %p2457 = scmp.ge.s32.totalorder %s2456, %s117
      %v2461 = vphi %v2454, %v2494
    $region16: #{tpu_custom_call.1} parent=1 // loop_header_branch
      %2460 = sbr.rel (%p2457) target = $region20
    $region17: #{tpu_custom_call.1} parent=1 // loop_body
      %2462 = vrot.lane.b32.xlu0 %v2461, 1
      %v2463 = vpop.permute.xlu0 %2462
      %vm2464 = vcmp.ge.s32.totalorder %v119, 1
      %v2465 = vsel %vm2464, %v2463, -1e+30
      %2466 = vrot.lane.b32.xlu0 %v2461, 2
      %v2467 = vpop.permute.xlu0 %2466
      %v2468 = vsel %vm220, %v2467, -1e+30
      %v2469 = vmax.f32 %v2461, %v2465
      %v2470 = vmax.f32 %v2469, %v2468
      %v2471 = vsub.f32 %v2461, %v2470
      %v2472 = vmul.f32 %v2471, 1.442695
      %v2473 = vpow.pop %v2472
      %v2474 = vsub.f32 %v2465, %v2470
      %v2475 = vmul.f32 %v2474, 1.442695
      %v2476 = vpow.pop %v2475
      %v2477 = vadd.f32 %v2473, %v2476
      %v2478 = vsub.f32 %v2468, %v2470
      %v2479 = vmul.f32 %v2478, 1.442695
      %v2480 = vpow.pop %v2479
      %v2481 = vadd.f32 %v2477, %v2480
      %v2482 = vlog2.pop %v2481
      %v2483 = vmul.f32 %v2482, 0.6931472
      %v2484 = vadd.f32 %v2470, %v2483
      %s2485 = smul.u32 %s2456, 8
      %s2486 = scalar_lea.vmem [#allocation2], %s2485
      %v2487 = vld [vmem:[%s2486] sm:$0xff]
      %v2488 = vadd.f32 %v2484, %v2487
      %v2489 = vmax.f32 %v2488, -1e+30
      %v2490 = vstv %s2456
      %vm2491 = vcmp.lt.s32.totalorder %v2490, %v98
      %v2492 = vsel %vm2491, 1, 0
      %vm2493 = vcmp.eq.s32.totalorder %v2492, 1
      %v2494 = vsel %vm2493, %v2489, %v2461
    $region18: #{tpu_custom_call.1} parent=1 // loop_footer
      %s2458 = sadd.s32 %s2456, 1
    $region19: #{tpu_custom_call.1} parent=1 // loop_footer_branch
      %2455 = sbr.rel target = $region15
    $region20: #{tpu_custom_call.1} parent=1 // loop_exit
      _
    %v2495 = vmul.u32 %v101, 2
    %vm2496 = vcmp.eq.s32.totalorder %v119, %v2495
    %v2497 = vsub.s32 %v2495, 1
    %vm2498 = vcmp.eq.s32.totalorder %v119, %v2497
    %vm2499 = vmor %vm2496, %vm2498
    %v2500 = vsel %vm2499, %v2461, -1e+30
    %2501 = vmax.xlane.f32.xlu0 %v2500
    %v2502 = vpop.xlane.xlu0 %2501
    %v2503 = vsub.f32 %v2500, %v2502
    %v2504 = vmul.f32 %v2503, 1.442695
    %v2505 = vpow.pop %v2504
    %2506 = vadd.xlane.f32.xlu0 %v2505
    %v2507 = vpop.xlane.xlu0 %2506
    %v2508 = vlog2.pop %v2507
    %v2509 = vmul.f32 %v2508, 0.6931472
    %v2510 = vadd.f32 %v2502, %v2509
    %vm2511 = vcmp.le.f32.partialorder %v2510, -5e+29
    %v2512 = vsub.f32 0.0, %v2510
    %v2513 = vsel %vm2511, 0.0, %v2512
    %2514 = vst [vmem:[#allocation9] sm:$0xff] %v2513
    // Predicated region
    $region21: #{tpu_custom_call.1} parent=1 // pred_check
      _
    $region22: #{tpu_custom_call.1} parent=1 // pred_check_branch
      %2516 = sbr.rel (0) target = $region24
    $region23: #{tpu_custom_call.1} parent=1 // pred_region
      %s2518 = ssub.s32 128, 128
      %2519 = vsyncadd [#allocation8], %s2518
      %s2521 = sshll.u32 [#allocation9], 4
      %s2522 = int_to_ptr.vmem [resolvable:$true] %s2521
      %2524 = dma.vmem_to_hbm [thread:$0]  %s2522, 128, %s4, [#allocation8]
    $region24: #{tpu_custom_call.1} parent=1 // pred_fallthru
      _
    // Predicated region
    $region25: #{tpu_custom_call.1} parent=1 // pred_check
      _
    $region26: #{tpu_custom_call.1} parent=1 // pred_check_branch
      %2526 = sbr.rel (0) target = $region28
    $region27: #{tpu_custom_call.1} parent=1 // pred_region
      %2527 = dma.done [#allocation8], 128
    $region28: #{tpu_custom_call.1} parent=1 // pred_fallthru
      _
    %2528 = vsyncpa [#allocation7], 1
    %2529 = vsyncpa [#allocation8], 1

</llo_original>
